<compile_context>
chip_gen: v7x
topology: tpu7x:2x2x1
jax: 0.10.0
libtpu: 0.0.40
codegen_flags: <defaults>
</compile_context>

<pallas_src>
import math

import jax
import jax.numpy as jnp
from jax.experimental import pallas as pl
from jax.experimental.pallas import tpu as pltpu

_STATS_LANES = 128  # lane-padded width of the (mu|logvar, z) output block


# ----------------------------- Pallas kernel -----------------------------

def cvae_kernel(root_x_ref, enc_x_ref, dec_emb_ref, eps_ref,
                wih_rg_ref, bih_rg_ref, wih_eg_ref, bih_eg_ref,
                whh_enc_ref, bhh_enc_f_ref, bhh_enc_b_ref,
                wfce_ref, bfce_ref, wfc1_ref, bfc1_ref,
                wih_dg_w_ref, wih_dg_c_ref, bih_dg_ref, whh_dg_ref, bhh_dg_ref,
                wfc2_h2_ref, wfc2_c_ref, bfc2_ref,
                stats_ref, dec_out_ref, hfb_ref):
    f32 = jnp.float32
    He = root_x_ref.shape[1]          # encoder hidden size
    Hd = dec_emb_ref.shape[1]         # decoder hidden size
    Z = eps_ref.shape[1]              # latent size
    V = dec_out_ref.shape[1]          # vocab size
    Lroot = root_x_ref.shape[0]
    Lresp = dec_emb_ref.shape[0]
    Lc = enc_x_ref.shape[0] - Lresp

    def dot(a, b):
        # Explicit precision decision: default MXU f32 path.  The kernel is
        # serial-latency bound; Precision.HIGHEST only adds serialized MXU passes
        # on the recurrent critical path and the 5e-3 tolerance already holds.
        return jnp.dot(a, b, preferred_element_type=f32)

    # ---------------- encoder input projections (two batched matmuls) ----------------
    gi_root = dot(root_x_ref[...], wih_rg_ref[...]) + bih_rg_ref[...]     # [Lroot, 6He]
    gi_enc = dot(enc_x_ref[...], wih_eg_ref[...]) + bih_eg_ref[...]       # [Lresp+Lc, 6He]
    gi_root_f = gi_root[:, 0:3 * He]
    gi_resp_f = gi_enc[0:Lresp, 0:3 * He]
    gi_ctx_f = gi_enc[Lresp:Lresp + Lc, 0:3 * He]

    def gru_rows(gi, gh, h, H):
        # PyTorch GRU cell on a stack of rows; gate layout [r | u | n] along lanes.
        ru = jax.nn.sigmoid(gi[:, 0:2 * H] + gh[:, 0:2 * H])
        n = jnp.tanh(gi[:, 2 * H:3 * H] + ru[:, 0:H] * gh[:, 2 * H:3 * H])
        u = ru[:, H:2 * H]
        return (1.0 - u) * n + u * h

    # -------- fused forward scans: root / resp / ctx share one recurrence loop --------
    # Hidden states sublane-stacked [3, He]; recurrence RHS lane-stacked
    # [whh_root | whh_enc] so ONE matmul per step serves all three sequences.
    # Row 0 picks columns 0:3He (root GRU), rows 1-2 pick columns 3He:6He (Enc.gru).
    bhh_f = bhh_enc_f_ref[...]                                            # [3, 3He]
    whh_enc = whh_enc_ref[...]                                            # [He, 6He]
    row_id_g = jax.lax.broadcasted_iota(jnp.int32, (3, 3 * He), 0)
    row_id_h = jax.lax.broadcasted_iota(jnp.int32, (3, He), 0)
    is_root_g = row_id_g == 0

    Lmax = max(Lroot, Lresp, Lc)
    h_enc = jnp.zeros((3, He), f32)
    for t in range(Lmax):
        tr, tp, tc = min(t, Lroot - 1), min(t, Lresp - 1), min(t, Lc - 1)
        gi_t = jnp.concatenate([gi_root_f[tr:tr + 1, :],
                                gi_resp_f[tp:tp + 1, :],
                                gi_ctx_f[tc:tc + 1, :]], axis=0)          # [3, 3He]
        if t == 0:
            gh_t = bhh_f                                                  # h == 0
        else:
            gh_all = dot(h_enc, whh_enc)                                  # [3, 6He]
            gh_t = jnp.where(is_root_g, gh_all[:, 0:3 * He],
                             gh_all[:, 3 * He:6 * He]) + bhh_f
        h_new = gru_rows(gi_t, gh_t, h_enc, He)
        active = (t < Lroot, t < Lresp, t < Lc)
        if all(active):
            h_enc = h_new
        else:
            keep = None
            for r, a in enumerate(active):
                if a:
                    m = row_id_h == r
                    keep = m if keep is None else (keep | m)
            h_enc = jnp.where(keep, h_new, h_enc)                         # freeze ended rows

    # ---- backward direction at the LAST time step only (h0 = 0  =>  gh == bhh_b).
    # NOTE: valid precisely because the model reads output[-1] with a zero initial
    # state; any change to that usage invalidates this shortcut.
    gi_b = jnp.concatenate([gi_root[Lroot - 1:Lroot, 3 * He:6 * He],
                            gi_enc[Lresp - 1:Lresp, 3 * He:6 * He],
                            gi_enc[Lresp + Lc - 1:Lresp + Lc, 3 * He:6 * He]],
                           axis=0)                                        # [3, 3He]
    h_bwd = gru_rows(gi_b, bhh_enc_b_ref[...], jnp.zeros((3, He), f32), He)

    vecs = h_enc + h_bwd                       # rows: [root_vec; resp_vec; ctx_vec]
    root_vec = vecs[0:1, :]
    resp_vec = vecs[1:2, :]
    ctx_vec = vecs[2:3, :]

    # -------------------- encoder fc -> (mu | logvar) -> z --------------------
    # Lane-concatenate the tiny activation vectors once; one matmul per fc.
    rrc = jnp.concatenate([resp_vec, root_vec, ctx_vec], axis=1)          # [1, 3He]
    muvar = dot(rrc, wfce_ref[...]) + bfce_ref[...]                       # [1, 2Z]
    mu = muvar[:, 0:Z]
    logvar = muvar[:, Z:2 * Z]
    z = mu + eps_ref[...] * jnp.exp(0.5 * logvar)                         # [1, Z]

    # Direct stores (no concat-built temporaries).  Row 0: [mu|logvar], row 1: z.
    stats_ref[...] = jnp.zeros_like(stats_ref)
    stats_ref[0:1, 0:2 * Z] = muvar
    stats_ref[1:2, 0:Z] = z

    # --------------------------------- decoder ---------------------------------
    zrc = jnp.concatenate([z, root_vec, ctx_vec], axis=1)                 # [1, Z+2He]
    h0 = dot(zrc, wfc1_ref[...]) + bfc1_ref[...]                          # [1, Hd]
    h_fb = jnp.concatenate([h0, h0], axis=1)                              # [1, 2Hd] = [h_f|h_b]

    # Input projection: word part batched over all steps, (z|root|ctx) part hoisted.
    # Gate columns are pre-laid-out as [r_f|r_b|u_f|u_b|n_f|n_b].
    gi_words = dot(dec_emb_ref[...], wih_dg_w_ref[...])                   # [Lresp, 6Hd]
    gi_const = dot(zrc, wih_dg_c_ref[...]) + bih_dg_ref[...]              # [1, 6Hd]
    fc2_const = dot(zrc, wfc2_c_ref[...]) + bfc2_ref[...]                 # [1, V]

    whh_dg = whh_dg_ref[...]                                              # [2Hd, 6Hd] block-diag
    bhh_dg = bhh_dg_ref[...]                                              # [1, 6Hd]
    for i in range(1, Lresp):                 # step i consumes teacher-forced word i
        gi_i = gi_words[i:i + 1, :] + gi_const
        gh_i = dot(h_fb, whh_dg) + bhh_dg     # ONE fused fwd+bwd recurrence matmul
        ru = jax.nn.sigmoid(gi_i[:, 0:4 * Hd] + gh_i[:, 0:4 * Hd])        # [r_f|r_b|u_f|u_b]
        r = ru[:, 0:2 * Hd]
        u = ru[:, 2 * Hd:4 * Hd]
        n = jnp.tanh(gi_i[:, 4 * Hd:6 * Hd] + r * gh_i[:, 4 * Hd:6 * Hd])
        h_fb = (1.0 - u) * n + u * h_fb
        hfb_ref[i - 1:i, :] = h_fb            # stash [h_f|h_b]; never form h_f+h_b

    # fc2 batched over all steps; [h_f|h_b] @ [W;W] == (h_f+h_b) @ W.
    logits = dot(hfb_ref[...], wfc2_h2_ref[...]) + fc2_const              # [Lresp-1, V]
    dec_out_ref[0:1, :] = jnp.zeros((1, V), f32)    # row 0 never written by the loop
    dec_out_ref[1:Lresp, :] = logits


# --------------------- one-time parameter re-layout (hoisted) ---------------------

def prepare_params(p):
    """Re-lay PyTorch-style parameters into kernel layout ONCE (not per call)."""
    f32 = jnp.float32

    def t(x):
        return jnp.asarray(x, f32).T

    def row(v):
        return jnp.asarray(v, f32)[None, :]

    He = p["rg_whh_f"].shape[1]
    Hd = p["dg_whh_f"].shape[1]

    # Encoder-side GRUs (natural [r|u|n] gate order, fwd|bwd stacked along lanes).
    wih_rg = jnp.concatenate([t(p["rg_wih_f"]), t(p["rg_wih_b"])], axis=1)
    bih_rg = jnp.concatenate([row(p["rg_bih_f"]), row(p["rg_bih_b"])], axis=1)
    wih_eg = jnp.concatenate([t(p["eg_wih_f"]), t(p["eg_wih_b"])], axis=1)
    bih_eg = jnp.concatenate([row(p["eg_bih_f"]), row(p["eg_bih_b"])], axis=1)
    # Fused forward-recurrence RHS: [whh_root | whh_enc] lane-stacked.
    whh_enc = jnp.concatenate([t(p["rg_whh_f"]), t(p["eg_whh_f"])], axis=1)
    bhh_enc_f = jnp.concatenate([row(p["rg_bhh_f"]), row(p["eg_bhh_f"]),
                                 row(p["eg_bhh_f"])], axis=0)             # [3, 3He]
    bhh_enc_b = jnp.concatenate([row(p["rg_bhh_b"]), row(p["eg_bhh_b"]),
                                 row(p["eg_bhh_b"])], axis=0)             # [3, 3He]

    wfce = t(p["e_fc_w"])
    bfce = row(p["e_fc_b"])
    wfc1 = t(p["d_fc1_w"])
    bfc1 = row(p["d_fc1_b"])

    # Decoder GRU: reorder gate columns to [r_f|r_b|u_f|u_b|n_f|n_b].
    def reorder(f, b, H):
        return jnp.concatenate([f[:, 0:H], b[:, 0:H],
                                f[:, H:2 * H], b[:, H:2 * H],
                                f[:, 2 * H:3 * H], b[:, 2 * H:3 * H]], axis=1)

    wih_dg = reorder(t(p["dg_wih_f"]), t(p["dg_wih_b"]), Hd)              # [Hd+Z+2He, 6Hd]
    wih_dg_w = wih_dg[0:Hd, :]
    wih_dg_c = wih_dg[Hd:, :]
    bih_dg = reorder(row(p["dg_bih_f"]), row(p["dg_bih_b"]), Hd)
    bhh_dg = reorder(row(p["dg_bhh_f"]), row(p["dg_bhh_b"]), Hd)
    zed = jnp.zeros((Hd, Hd), f32)
    wf, wb = t(p["dg_whh_f"]), t(p["dg_whh_b"])
    whh_dg = jnp.concatenate([                                            # block-diagonal [2Hd, 6Hd]
        jnp.concatenate([wf[:, 0:Hd], zed, wf[:, Hd:2 * Hd], zed,
                         wf[:, 2 * Hd:3 * Hd], zed], axis=1),
        jnp.concatenate([zed, wb[:, 0:Hd], zed, wb[:, Hd:2 * Hd],
                         zed, wb[:, 2 * Hd:3 * Hd]], axis=1),
    ], axis=0)

    # fc2: duplicate the hidden rows so [h_f|h_b] @ [W;W] == (h_f + h_b) @ W.
    wfc2 = t(p["d_fc2_w"])                                                # [Hd+Z+2He, V]
    wfc2_h2 = jnp.concatenate([wfc2[0:Hd, :], wfc2[0:Hd, :]], axis=0)     # [2Hd, V]
    wfc2_c = wfc2[Hd:, :]
    bfc2 = row(p["d_fc2_b"])

    weights = (wih_rg, bih_rg, wih_eg, bih_eg, whh_enc, bhh_enc_f, bhh_enc_b,
               wfce, bfce, wfc1, bfc1,
               wih_dg_w, wih_dg_c, bih_dg, whh_dg, bhh_dg,
               wfc2_h2, wfc2_c, bfc2)
    return {"root_embed": jnp.asarray(p["root_embed"], f32),
            "enc_embed": jnp.asarray(p["enc_embed"], f32),
            "dec_embed": jnp.asarray(p["dec_embed"], f32),
            "weights": weights}


# --------------------------- per-call wrapper (jitted) ---------------------------

@jax.jit
def cvae_forward(kparams, response, context, root, eps, sos_token):
    """CVAE.forward(response, context, root, truthrate=1) -> (z, mu, logvar, decoded)."""
    n = int(response.shape[0])
    weights = kparams["weights"]
    vocab = weights[-1].shape[1]                 # bfc2: [1, V]
    hd = kparams["dec_embed"].shape[1]
    z_size = int(eps.shape[1])
    assert n >= 2, "need at least 2 response tokens (one decode step)"
    assert int(context.shape[0]) >= 1 and int(root.shape[0]) >= 1, \
        "empty context/root not supported (zero-context branch not wired up)"
    assert 2 * z_size <= _STATS_LANES

    root_x = kparams["root_embed"][root]
    enc_x = jnp.concatenate([kparams["enc_embed"][response],
                             kparams["enc_embed"][context]], axis=0)
    # Teacher-forced decoder inputs: step 1 sees SOS, step i>=2 sees response[i-1].
    dec_words = jnp.concatenate([
        jnp.zeros((1,), response.dtype),         # row 0: unused placeholder
        jnp.full((1,), sos_token, response.dtype),
        response[1:n - 1],
    ])
    dec_emb = kparams["dec_embed"][dec_words]

    vmem = pl.BlockSpec(memory_space=pltpu.MemorySpace.VMEM)
    args = (root_x, enc_x, dec_emb, eps) + weights
    stats, dec_full = pl.pallas_call(
        cvae_kernel,
        out_shape=(jax.ShapeDtypeStruct((8, _STATS_LANES), jnp.float32),
                   jax.ShapeDtypeStruct((n, vocab), jnp.float32)),
        in_specs=[vmem] * len(args),
        out_specs=(vmem, vmem),
        scratch_shapes=[pltpu.VMEM((n - 1, 2 * hd), jnp.float32)],
    )(*args)

    mu = stats[0:1, :z_size]
    logvar = stats[0:1, z_size:2 * z_size]
    z = stats[1:2, :z_size]
    decoded = dec_full[1:, :vocab - 1]
    return z, mu, logvar, decoded


# ----------------------------- parameters & reference -----------------------------

def init_params(key, vocab, he, hd, z):
    keys = iter(jax.random.split(key, 40))

    def unif(shape, scale):
        return jax.random.uniform(next(keys), shape, jnp.float32, -scale, scale)

    p = {
        "root_embed": 0.1 * jax.random.normal(next(keys), (vocab, he), jnp.float32),
        "enc_embed": 0.1 * jax.random.normal(next(keys), (vocab, he), jnp.float32),
        "dec_embed": 0.1 * jax.random.normal(next(keys), (vocab, hd), jnp.float32),
    }

    def add_gru(pre, in_dim, h):       # PyTorch nn.GRU parameter layout
        s = 1.0 / math.sqrt(h)
        for d in ("f", "b"):
            p[f"{pre}_wih_{d}"] = unif((3 * h, in_dim), s)
            p[f"{pre}_whh_{d}"] = unif((3 * h, h), s)
            p[f"{pre}_bih_{d}"] = unif((3 * h,), s)
            p[f"{pre}_bhh_{d}"] = unif((3 * h,), s)

    add_gru("rg", he, he)                        # RootGRU
    add_gru("eg", he, he)                        # Encoder.gru (shared by resp/ctx)
    add_gru("dg", hd + z + 2 * he, hd)           # Decoder.gru

    def add_linear(pre, in_dim, out_dim):        # PyTorch nn.Linear layout
        s = 1.0 / math.sqrt(in_dim)
        p[f"{pre}_w"] = unif((out_dim, in_dim), s)
        p[f"{pre}_b"] = unif((out_dim,), s)

    add_linear("e_fc", 3 * he, 2 * z)            # Encoder.fc
    add_linear("d_fc1", z + 2 * he, hd)          # Decoder.fc1
    add_linear("d_fc2", hd + z + 2 * he, vocab)  # Decoder.fc2
    return p


def _mm(a, b):
    return jnp.dot(a, b, precision=jax.lax.Precision.HIGHEST)


def _gru_cell_ref(x, h, wih, whh, bih, bhh):
    H = h.shape[1]
    gi = _mm(x, wih.T) + bih
    gh = _mm(h, whh.T) + bhh
    r = jax.nn.sigmoid(gi[:, :H] + gh[:, :H])
    u = jax.nn.sigmoid(gi[:, H:2 * H] + gh[:, H:2 * H])
    n = jnp.tanh(gi[:, 2 * H:] + r * gh[:, 2 * H:])
    return (1.0 - u) * n + u * h


def _bi_gru_last(x_seq, p, pre):
    """Faithful bidirectional GRU (h0=0): output[-1][:, H:] + output[-1][:, :H]."""
    L = x_seq.shape[0]
    H = p[f"{pre}_whh_f"].shape[1]
    h = jnp.zeros((1, H), jnp.float32)
    for t in range(L):
        h = _gru_cell_ref(x_seq[t:t + 1], h, p[f"{pre}_wih_f"], p[f"{pre}_whh_f"],
                          p[f"{pre}_bih_f"], p[f"{pre}_bhh_f"])
    h_fwd_last = h
    hb = jnp.zeros((1, H), jnp.float32)
    hb_at_last = None
    for t in range(L - 1, -1, -1):
        hb = _gru_cell_ref(x_seq[t:t + 1], hb, p[f"{pre}_wih_b"], p[f"{pre}_whh_b"],
                           p[f"{pre}_bih_b"], p[f"{pre}_bhh_b"])
        if t == L - 1:
            hb_at_last = hb
    return h_fwd_last + hb_at_last


def reference_forward(p, response, context, root, eps, sos):
    V = p["d_fc2_w"].shape[0]
    Z = eps.shape[1]
    root_vec = _bi_gru_last(p["root_embed"][root], p, "rg")
    resp_vec = _bi_gru_last(p["enc_embed"][response], p, "eg")
    ctx_vec = _bi_gru_last(p["enc_embed"][context], p, "eg")
    context_full = jnp.concatenate([root_vec, ctx_vec], axis=1)
    enc_in = jnp.concatenate([resp_vec, context_full], axis=1)
    out = _mm(enc_in, p["e_fc_w"].T) + p["e_fc_b"]
    mu, logvar = out[:, :Z], out[:, Z:]
    z = mu + eps * jnp.exp(0.5 * logvar)
    encoded_r = jnp.concatenate([z, context_full], axis=1)
    h0 = _mm(encoded_r, p["d_fc1_w"].T) + p["d_fc1_b"]
    h_f, h_b = h0, h0
    n = response.shape[0]
    rows = [jnp.zeros((1, V), jnp.float32)]
    word = jnp.array([sos], dtype=response.dtype)
    for i in range(1, n):
        x_i = jnp.concatenate([p["dec_embed"][word], encoded_r], axis=1)
        h_f = _gru_cell_ref(x_i, h_f, p["dg_wih_f"], p["dg_whh_f"], p["dg_bih_f"], p["dg_bhh_f"])
        h_b = _gru_cell_ref(x_i, h_b, p["dg_wih_b"], p["dg_whh_b"], p["dg_bih_b"], p["dg_bhh_b"])
        o = jnp.concatenate([h_f + h_b, encoded_r], axis=1)
        rows.append(_mm(o, p["d_fc2_w"].T) + p["d_fc2_b"])
        word = response[i:i + 1]                 # teacher forcing (truthrate=1)
    decoded = jnp.concatenate(rows, axis=0)
    return z, mu, logvar, decoded[1:, :V - 1]


# ----------------------------------- demo -----------------------------------

if __name__ == "__main__":
    VOCAB = 128          # lane-dense vocab for the decoder logits output
    ENC_HIDDEN = 32
    DEC_HIDDEN = 32
    Z_SIZE = 16
    L_RESP, L_CTX, L_ROOT = 8, 6, 5
    SOS = VOCAB - 1      # small-vocab stand-in for SOS_token

    key = jax.random.PRNGKey(0)
    kp, kr, kc, kroot, keps = jax.random.split(key, 5)
    params = init_params(kp, VOCAB, ENC_HIDDEN, DEC_HIDDEN, Z_SIZE)
    kparams = prepare_params(params)     # one-time weight re-layout (hoisted)

    response = jax.random.randint(kr, (L_RESP,), 0, VOCAB - 1)
    context = jax.random.randint(kc, (L_CTX,), 0, VOCAB - 1)
    root = jax.random.randint(kroot, (L_ROOT,), 0, VOCAB - 1)
    eps = jax.random.normal(keps, (1, Z_SIZE), jnp.float32)   # reparameterization noise

    z, mu, logvar, decoded = cvae_forward(kparams, response, context, root, eps, SOS)
    decoded = jax.block_until_ready(decoded)

    z_r, mu_r, logvar_r, dec_r = reference_forward(params, response, context, root, eps, SOS)

    assert z.shape == (1, Z_SIZE)
    assert decoded.shape == (L_RESP - 1, VOCAB - 1)
    for got, want, name in ((z, z_r, "z"), (mu, mu_r, "mu"),
                            (logvar, logvar_r, "logvar"), (decoded, dec_r, "decoded")):
        assert jnp.allclose(got, want, atol=5e-3, rtol=5e-3), f"mismatch in {name}"

    print("KERNEL_OK")
</pallas_src>

<mosaic_0001>
module attributes {stable_mosaic.version = 11 : i64} {
  func.func @cvae_kernel(%arg0: memref<5x32xf32, #tpu.memory_space<vmem>>, %arg1: memref<14x32xf32, #tpu.memory_space<vmem>>, %arg2: memref<8x32xf32, #tpu.memory_space<vmem>>, %arg3: memref<1x16xf32, #tpu.memory_space<vmem>>, %arg4: memref<32x192xf32, #tpu.memory_space<vmem>>, %arg5: memref<1x192xf32, #tpu.memory_space<vmem>>, %arg6: memref<32x192xf32, #tpu.memory_space<vmem>>, %arg7: memref<1x192xf32, #tpu.memory_space<vmem>>, %arg8: memref<32x192xf32, #tpu.memory_space<vmem>>, %arg9: memref<3x96xf32, #tpu.memory_space<vmem>>, %arg10: memref<3x96xf32, #tpu.memory_space<vmem>>, %arg11: memref<96x32xf32, #tpu.memory_space<vmem>>, %arg12: memref<1x32xf32, #tpu.memory_space<vmem>>, %arg13: memref<80x32xf32, #tpu.memory_space<vmem>>, %arg14: memref<1x32xf32, #tpu.memory_space<vmem>>, %arg15: memref<32x192xf32, #tpu.memory_space<vmem>>, %arg16: memref<80x192xf32, #tpu.memory_space<vmem>>, %arg17: memref<1x192xf32, #tpu.memory_space<vmem>>, %arg18: memref<64x192xf32, #tpu.memory_space<vmem>>, %arg19: memref<1x192xf32, #tpu.memory_space<vmem>>, %arg20: memref<64x128xf32, #tpu.memory_space<vmem>>, %arg21: memref<80x128xf32, #tpu.memory_space<vmem>>, %arg22: memref<1x128xf32, #tpu.memory_space<vmem>>, %arg23: memref<8x128xf32, #tpu.memory_space<vmem>>, %arg24: memref<8x128xf32, #tpu.memory_space<vmem>>, %arg25: memref<7x64xf32, #tpu.memory_space<vmem>>) attributes {dimension_semantics = [], scalar_prefetch = 0 : i64, scratch_operands = 1 : i64, tpu.core_type = #tpu.core_type<tc>} {
    %c0 = arith.constant 0 : index
    %c0_0 = arith.constant 0 : index
    %0 = vector.load %arg0[%c0, %c0_0] : memref<5x32xf32, #tpu.memory_space<vmem>>, vector<5x32xf32>
    %c0_1 = arith.constant 0 : index
    %c0_2 = arith.constant 0 : index
    %1 = vector.load %arg4[%c0_1, %c0_2] : memref<32x192xf32, #tpu.memory_space<vmem>>, vector<32x192xf32>
    %cst = arith.constant dense<0.000000e+00> : vector<5x192xf32>
    %2 = tpu.matmul %0, %1, %cst {dimension_numbers = #tpu.dot_dimension_numbers<[1], [0], [0], [1], [0, 0, 1, 1], [], []>} : vector<5x32xf32>, vector<32x192xf32>, vector<5x192xf32> -> vector<5x192xf32>
    %c0_3 = arith.constant 0 : index
    %c0_4 = arith.constant 0 : index
    %3 = vector.load %arg5[%c0_3, %c0_4] : memref<1x192xf32, #tpu.memory_space<vmem>>, vector<1x192xf32>
    %4 = vector.broadcast %3 : vector<1x192xf32> to vector<5x192xf32>
    %5 = arith.addf %2, %4 : vector<5x192xf32>
    %c0_5 = arith.constant 0 : index
    %c0_6 = arith.constant 0 : index
    %6 = vector.load %arg1[%c0_5, %c0_6] : memref<14x32xf32, #tpu.memory_space<vmem>>, vector<14x32xf32>
    %c0_7 = arith.constant 0 : index
    %c0_8 = arith.constant 0 : index
    %7 = vector.load %arg6[%c0_7, %c0_8] : memref<32x192xf32, #tpu.memory_space<vmem>>, vector<32x192xf32>
    %cst_9 = arith.constant dense<0.000000e+00> : vector<14x192xf32>
    %8 = tpu.matmul %6, %7, %cst_9 {dimension_numbers = #tpu.dot_dimension_numbers<[1], [0], [0], [1], [0, 0, 1, 1], [], []>} : vector<14x32xf32>, vector<32x192xf32>, vector<14x192xf32> -> vector<14x192xf32>
    %c0_10 = arith.constant 0 : index
    %c0_11 = arith.constant 0 : index
    %9 = vector.load %arg7[%c0_10, %c0_11] : memref<1x192xf32, #tpu.memory_space<vmem>>, vector<1x192xf32>
    %10 = vector.broadcast %9 : vector<1x192xf32> to vector<14x192xf32>
    %11 = arith.addf %8, %10 : vector<14x192xf32>
    %12 = vector.extract_strided_slice %5 {offsets = [0, 0], sizes = [5, 96], strides = [1, 1]} : vector<5x192xf32> to vector<5x96xf32>
    %13 = vector.extract_strided_slice %11 {offsets = [0, 0], sizes = [8, 96], strides = [1, 1]} : vector<14x192xf32> to vector<8x96xf32>
    %14 = vector.extract_strided_slice %11 {offsets = [8, 0], sizes = [6, 96], strides = [1, 1]} : vector<14x192xf32> to vector<6x96xf32>
    %c0_12 = arith.constant 0 : index
    %c0_13 = arith.constant 0 : index
    %15 = vector.load %arg9[%c0_12, %c0_13] : memref<3x96xf32, #tpu.memory_space<vmem>>, vector<3x96xf32>
    %c0_14 = arith.constant 0 : index
    %c0_15 = arith.constant 0 : index
    %16 = vector.load %arg8[%c0_14, %c0_15] : memref<32x192xf32, #tpu.memory_space<vmem>>, vector<32x192xf32>
    %17 = tpu.iota {dimensions = array<i32: 0>} : vector<3x96xi32>
    %18 = tpu.iota {dimensions = array<i32: 0>} : vector<3x32xi32>
    %c0_i32 = arith.constant 0 : i32
    %19 = vector.broadcast %c0_i32 : i32 to vector<3x96xi32>
    %20 = arith.cmpi eq, %17, %19 : vector<3x96xi32>
    %cst_16 = arith.constant 0.000000e+00 : f32
    %21 = vector.broadcast %cst_16 : f32 to vector<3x32xf32>
    %22 = vector.extract_strided_slice %12 {offsets = [0, 0], sizes = [1, 96], strides = [1, 1]} : vector<5x96xf32> to vector<1x96xf32>
    %23 = vector.extract_strided_slice %13 {offsets = [0, 0], sizes = [1, 96], strides = [1, 1]} : vector<8x96xf32> to vector<1x96xf32>
    %24 = vector.extract_strided_slice %14 {offsets = [0, 0], sizes = [1, 96], strides = [1, 1]} : vector<6x96xf32> to vector<1x96xf32>
    %25 = tpu.concatenate %22, %23, %24 in 0 : vector<1x96xf32>, vector<1x96xf32>, vector<1x96xf32> -> vector<3x96xf32>
    %26 = vector.extract_strided_slice %25 {offsets = [0, 0], sizes = [3, 64], strides = [1, 1]} : vector<3x96xf32> to vector<3x64xf32>
    %27 = vector.extract_strided_slice %15 {offsets = [0, 0], sizes = [3, 64], strides = [1, 1]} : vector<3x96xf32> to vector<3x64xf32>
    %28 = arith.addf %26, %27 : vector<3x64xf32>
    %29 = arith.negf %28 : vector<3x64xf32>
    %30 = math.exp %29 : vector<3x64xf32>
    %cst_17 = arith.constant 1.000000e+00 : f32
    %31 = vector.broadcast %cst_17 : f32 to vector<3x64xf32>
    %32 = arith.addf %31, %30 : vector<3x64xf32>
    %33 = arith.divf %31, %32 : vector<3x64xf32>
    %34 = vector.extract_strided_slice %25 {offsets = [0, 64], sizes = [3, 32], strides = [1, 1]} : vector<3x96xf32> to vector<3x32xf32>
    %35 = vector.extract_strided_slice %33 {offsets = [0, 0], sizes = [3, 32], strides = [1, 1]} : vector<3x64xf32> to vector<3x32xf32>
    %36 = vector.extract_strided_slice %15 {offsets = [0, 64], sizes = [3, 32], strides = [1, 1]} : vector<3x96xf32> to vector<3x32xf32>
    %37 = arith.mulf %35, %36 : vector<3x32xf32>
    %38 = arith.addf %34, %37 : vector<3x32xf32>
    %39 = math.tanh %38 : vector<3x32xf32>
    %40 = vector.extract_strided_slice %33 {offsets = [0, 32], sizes = [3, 32], strides = [1, 1]} : vector<3x64xf32> to vector<3x32xf32>
    %cst_18 = arith.constant 1.000000e+00 : f32
    %41 = vector.broadcast %cst_18 : f32 to vector<3x32xf32>
    %42 = arith.subf %41, %40 : vector<3x32xf32>
    %43 = arith.mulf %42, %39 : vector<3x32xf32>
    %44 = arith.mulf %40, %21 : vector<3x32xf32>
    %45 = arith.addf %43, %44 : vector<3x32xf32>
    %46 = vector.extract_strided_slice %12 {offsets = [1, 0], sizes = [1, 96], strides = [1, 1]} : vector<5x96xf32> to vector<1x96xf32>
    %47 = vector.extract_strided_slice %13 {offsets = [1, 0], sizes = [1, 96], strides = [1, 1]} : vector<8x96xf32> to vector<1x96xf32>
    %48 = vector.extract_strided_slice %14 {offsets = [1, 0], sizes = [1, 96], strides = [1, 1]} : vector<6x96xf32> to vector<1x96xf32>
    %49 = tpu.concatenate %46, %47, %48 in 0 : vector<1x96xf32>, vector<1x96xf32>, vector<1x96xf32> -> vector<3x96xf32>
    %cst_19 = arith.constant dense<0.000000e+00> : vector<3x192xf32>
    %50 = tpu.matmul %45, %16, %cst_19 {dimension_numbers = #tpu.dot_dimension_numbers<[1], [0], [0], [1], [0, 0, 1, 1], [], []>} : vector<3x32xf32>, vector<32x192xf32>, vector<3x192xf32> -> vector<3x192xf32>
    %51 = vector.extract_strided_slice %50 {offsets = [0, 0], sizes = [3, 96], strides = [1, 1]} : vector<3x192xf32> to vector<3x96xf32>
    %52 = vector.extract_strided_slice %50 {offsets = [0, 96], sizes = [3, 96], strides = [1, 1]} : vector<3x192xf32> to vector<3x96xf32>
    %53 = arith.select %20, %51, %52 : vector<3x96xi1>, vector<3x96xf32>
    %54 = arith.addf %53, %15 : vector<3x96xf32>
    %55 = vector.extract_strided_slice %49 {offsets = [0, 0], sizes = [3, 64], strides = [1, 1]} : vector<3x96xf32> to vector<3x64xf32>
    %56 = vector.extract_strided_slice %54 {offsets = [0, 0], sizes = [3, 64], strides = [1, 1]} : vector<3x96xf32> to vector<3x64xf32>
    %57 = arith.addf %55, %56 : vector<3x64xf32>
    %58 = arith.negf %57 : vector<3x64xf32>
    %59 = math.exp %58 : vector<3x64xf32>
    %cst_20 = arith.constant 1.000000e+00 : f32
    %60 = vector.broadcast %cst_20 : f32 to vector<3x64xf32>
    %61 = arith.addf %60, %59 : vector<3x64xf32>
    %62 = arith.divf %60, %61 : vector<3x64xf32>
    %63 = vector.extract_strided_slice %49 {offsets = [0, 64], sizes = [3, 32], strides = [1, 1]} : vector<3x96xf32> to vector<3x32xf32>
    %64 = vector.extract_strided_slice %62 {offsets = [0, 0], sizes = [3, 32], strides = [1, 1]} : vector<3x64xf32> to vector<3x32xf32>
    %65 = vector.extract_strided_slice %54 {offsets = [0, 64], sizes = [3, 32], strides = [1, 1]} : vector<3x96xf32> to vector<3x32xf32>
    %66 = arith.mulf %64, %65 : vector<3x32xf32>
    %67 = arith.addf %63, %66 : vector<3x32xf32>
    %68 = math.tanh %67 : vector<3x32xf32>
    %69 = vector.extract_strided_slice %62 {offsets = [0, 32], sizes = [3, 32], strides = [1, 1]} : vector<3x64xf32> to vector<3x32xf32>
    %cst_21 = arith.constant 1.000000e+00 : f32
    %70 = vector.broadcast %cst_21 : f32 to vector<3x32xf32>
    %71 = arith.subf %70, %69 : vector<3x32xf32>
    %72 = arith.mulf %71, %68 : vector<3x32xf32>
    %73 = arith.mulf %69, %45 : vector<3x32xf32>
    %74 = arith.addf %72, %73 : vector<3x32xf32>
    %75 = vector.extract_strided_slice %12 {offsets = [2, 0], sizes = [1, 96], strides = [1, 1]} : vector<5x96xf32> to vector<1x96xf32>
    %76 = vector.extract_strided_slice %13 {offsets = [2, 0], sizes = [1, 96], strides = [1, 1]} : vector<8x96xf32> to vector<1x96xf32>
    %77 = vector.extract_strided_slice %14 {offsets = [2, 0], sizes = [1, 96], strides = [1, 1]} : vector<6x96xf32> to vector<1x96xf32>
    %78 = tpu.concatenate %75, %76, %77 in 0 : vector<1x96xf32>, vector<1x96xf32>, vector<1x96xf32> -> vector<3x96xf32>
    %cst_22 = arith.constant dense<0.000000e+00> : vector<3x192xf32>
    %79 = tpu.matmul %74, %16, %cst_22 {dimension_numbers = #tpu.dot_dimension_numbers<[1], [0], [0], [1], [0, 0, 1, 1], [], []>} : vector<3x32xf32>, vector<32x192xf32>, vector<3x192xf32> -> vector<3x192xf32>
    %80 = vector.extract_strided_slice %79 {offsets = [0, 0], sizes = [3, 96], strides = [1, 1]} : vector<3x192xf32> to vector<3x96xf32>
    %81 = vector.extract_strided_slice %79 {offsets = [0, 96], sizes = [3, 96], strides = [1, 1]} : vector<3x192xf32> to vector<3x96xf32>
    %82 = arith.select %20, %80, %81 : vector<3x96xi1>, vector<3x96xf32>
    %83 = arith.addf %82, %15 : vector<3x96xf32>
    %84 = vector.extract_strided_slice %78 {offsets = [0, 0], sizes = [3, 64], strides = [1, 1]} : vector<3x96xf32> to vector<3x64xf32>
    %85 = vector.extract_strided_slice %83 {offsets = [0, 0], sizes = [3, 64], strides = [1, 1]} : vector<3x96xf32> to vector<3x64xf32>
    %86 = arith.addf %84, %85 : vector<3x64xf32>
    %87 = arith.negf %86 : vector<3x64xf32>
    %88 = math.exp %87 : vector<3x64xf32>
    %cst_23 = arith.constant 1.000000e+00 : f32
    %89 = vector.broadcast %cst_23 : f32 to vector<3x64xf32>
    %90 = arith.addf %89, %88 : vector<3x64xf32>
    %91 = arith.divf %89, %90 : vector<3x64xf32>
    %92 = vector.extract_strided_slice %78 {offsets = [0, 64], sizes = [3, 32], strides = [1, 1]} : vector<3x96xf32> to vector<3x32xf32>
    %93 = vector.extract_strided_slice %91 {offsets = [0, 0], sizes = [3, 32], strides = [1, 1]} : vector<3x64xf32> to vector<3x32xf32>
    %94 = vector.extract_strided_slice %83 {offsets = [0, 64], sizes = [3, 32], strides = [1, 1]} : vector<3x96xf32> to vector<3x32xf32>
    %95 = arith.mulf %93, %94 : vector<3x32xf32>
    %96 = arith.addf %92, %95 : vector<3x32xf32>
    %97 = math.tanh %96 : vector<3x32xf32>
    %98 = vector.extract_strided_slice %91 {offsets = [0, 32], sizes = [3, 32], strides = [1, 1]} : vector<3x64xf32> to vector<3x32xf32>
    %cst_24 = arith.constant 1.000000e+00 : f32
    %99 = vector.broadcast %cst_24 : f32 to vector<3x32xf32>
    %100 = arith.subf %99, %98 : vector<3x32xf32>
    %101 = arith.mulf %100, %97 : vector<3x32xf32>
    %102 = arith.mulf %98, %74 : vector<3x32xf32>
    %103 = arith.addf %101, %102 : vector<3x32xf32>
    %104 = vector.extract_strided_slice %12 {offsets = [3, 0], sizes = [1, 96], strides = [1, 1]} : vector<5x96xf32> to vector<1x96xf32>
    %105 = vector.extract_strided_slice %13 {offsets = [3, 0], sizes = [1, 96], strides = [1, 1]} : vector<8x96xf32> to vector<1x96xf32>
    %106 = vector.extract_strided_slice %14 {offsets = [3, 0], sizes = [1, 96], strides = [1, 1]} : vector<6x96xf32> to vector<1x96xf32>
    %107 = tpu.concatenate %104, %105, %106 in 0 : vector<1x96xf32>, vector<1x96xf32>, vector<1x96xf32> -> vector<3x96xf32>
    %cst_25 = arith.constant dense<0.000000e+00> : vector<3x192xf32>
    %108 = tpu.matmul %103, %16, %cst_25 {dimension_numbers = #tpu.dot_dimension_numbers<[1], [0], [0], [1], [0, 0, 1, 1], [], []>} : vector<3x32xf32>, vector<32x192xf32>, vector<3x192xf32> -> vector<3x192xf32>
    %109 = vector.extract_strided_slice %108 {offsets = [0, 0], sizes = [3, 96], strides = [1, 1]} : vector<3x192xf32> to vector<3x96xf32>
    %110 = vector.extract_strided_slice %108 {offsets = [0, 96], sizes = [3, 96], strides = [1, 1]} : vector<3x192xf32> to vector<3x96xf32>
    %111 = arith.select %20, %109, %110 : vector<3x96xi1>, vector<3x96xf32>
    %112 = arith.addf %111, %15 : vector<3x96xf32>
    %113 = vector.extract_strided_slice %107 {offsets = [0, 0], sizes = [3, 64], strides = [1, 1]} : vector<3x96xf32> to vector<3x64xf32>
    %114 = vector.extract_strided_slice %112 {offsets = [0, 0], sizes = [3, 64], strides = [1, 1]} : vector<3x96xf32> to vector<3x64xf32>
    %115 = arith.addf %113, %114 : vector<3x64xf32>
    %116 = arith.negf %115 : vector<3x64xf32>
    %117 = math.exp %116 : vector<3x64xf32>
    %cst_26 = arith.constant 1.000000e+00 : f32
    %118 = vector.broadcast %cst_26 : f32 to vector<3x64xf32>
    %119 = arith.addf %118, %117 : vector<3x64xf32>
    %120 = arith.divf %118, %119 : vector<3x64xf32>
    %121 = vector.extract_strided_slice %107 {offsets = [0, 64], sizes = [3, 32], strides = [1, 1]} : vector<3x96xf32> to vector<3x32xf32>
    %122 = vector.extract_strided_slice %120 {offsets = [0, 0], sizes = [3, 32], strides = [1, 1]} : vector<3x64xf32> to vector<3x32xf32>
    %123 = vector.extract_strided_slice %112 {offsets = [0, 64], sizes = [3, 32], strides = [1, 1]} : vector<3x96xf32> to vector<3x32xf32>
    %124 = arith.mulf %122, %123 : vector<3x32xf32>
    %125 = arith.addf %121, %124 : vector<3x32xf32>
    %126 = math.tanh %125 : vector<3x32xf32>
    %127 = vector.extract_strided_slice %120 {offsets = [0, 32], sizes = [3, 32], strides = [1, 1]} : vector<3x64xf32> to vector<3x32xf32>
    %cst_27 = arith.constant 1.000000e+00 : f32
    %128 = vector.broadcast %cst_27 : f32 to vector<3x32xf32>
    %129 = arith.subf %128, %127 : vector<3x32xf32>
    %130 = arith.mulf %129, %126 : vector<3x32xf32>
    %131 = arith.mulf %127, %103 : vector<3x32xf32>
    %132 = arith.addf %130, %131 : vector<3x32xf32>
    %133 = vector.extract_strided_slice %12 {offsets = [4, 0], sizes = [1, 96], strides = [1, 1]} : vector<5x96xf32> to vector<1x96xf32>
    %134 = vector.extract_strided_slice %13 {offsets = [4, 0], sizes = [1, 96], strides = [1, 1]} : vector<8x96xf32> to vector<1x96xf32>
    %135 = vector.extract_strided_slice %14 {offsets = [4, 0], sizes = [1, 96], strides = [1, 1]} : vector<6x96xf32> to vector<1x96xf32>
    %136 = tpu.concatenate %133, %134, %135 in 0 : vector<1x96xf32>, vector<1x96xf32>, vector<1x96xf32> -> vector<3x96xf32>
    %cst_28 = arith.constant dense<0.000000e+00> : vector<3x192xf32>
    %137 = tpu.matmul %132, %16, %cst_28 {dimension_numbers = #tpu.dot_dimension_numbers<[1], [0], [0], [1], [0, 0, 1, 1], [], []>} : vector<3x32xf32>, vector<32x192xf32>, vector<3x192xf32> -> vector<3x192xf32>
    %138 = vector.extract_strided_slice %137 {offsets = [0, 0], sizes = [3, 96], strides = [1, 1]} : vector<3x192xf32> to vector<3x96xf32>
    %139 = vector.extract_strided_slice %137 {offsets = [0, 96], sizes = [3, 96], strides = [1, 1]} : vector<3x192xf32> to vector<3x96xf32>
    %140 = arith.select %20, %138, %139 : vector<3x96xi1>, vector<3x96xf32>
    %141 = arith.addf %140, %15 : vector<3x96xf32>
    %142 = vector.extract_strided_slice %136 {offsets = [0, 0], sizes = [3, 64], strides = [1, 1]} : vector<3x96xf32> to vector<3x64xf32>
    %143 = vector.extract_strided_slice %141 {offsets = [0, 0], sizes = [3, 64], strides = [1, 1]} : vector<3x96xf32> to vector<3x64xf32>
    %144 = arith.addf %142, %143 : vector<3x64xf32>
    %145 = arith.negf %144 : vector<3x64xf32>
    %146 = math.exp %145 : vector<3x64xf32>
    %cst_29 = arith.constant 1.000000e+00 : f32
    %147 = vector.broadcast %cst_29 : f32 to vector<3x64xf32>
    %148 = arith.addf %147, %146 : vector<3x64xf32>
    %149 = arith.divf %147, %148 : vector<3x64xf32>
    %150 = vector.extract_strided_slice %136 {offsets = [0, 64], sizes = [3, 32], strides = [1, 1]} : vector<3x96xf32> to vector<3x32xf32>
    %151 = vector.extract_strided_slice %149 {offsets = [0, 0], sizes = [3, 32], strides = [1, 1]} : vector<3x64xf32> to vector<3x32xf32>
    %152 = vector.extract_strided_slice %141 {offsets = [0, 64], sizes = [3, 32], strides = [1, 1]} : vector<3x96xf32> to vector<3x32xf32>
    %153 = arith.mulf %151, %152 : vector<3x32xf32>
    %154 = arith.addf %150, %153 : vector<3x32xf32>
    %155 = math.tanh %154 : vector<3x32xf32>
    %156 = vector.extract_strided_slice %149 {offsets = [0, 32], sizes = [3, 32], strides = [1, 1]} : vector<3x64xf32> to vector<3x32xf32>
    %cst_30 = arith.constant 1.000000e+00 : f32
    %157 = vector.broadcast %cst_30 : f32 to vector<3x32xf32>
    %158 = arith.subf %157, %156 : vector<3x32xf32>
    %159 = arith.mulf %158, %155 : vector<3x32xf32>
    %160 = arith.mulf %156, %132 : vector<3x32xf32>
    %161 = arith.addf %159, %160 : vector<3x32xf32>
    %162 = vector.extract_strided_slice %12 {offsets = [4, 0], sizes = [1, 96], strides = [1, 1]} : vector<5x96xf32> to vector<1x96xf32>
    %163 = vector.extract_strided_slice %13 {offsets = [5, 0], sizes = [1, 96], strides = [1, 1]} : vector<8x96xf32> to vector<1x96xf32>
    %164 = vector.extract_strided_slice %14 {offsets = [5, 0], sizes = [1, 96], strides = [1, 1]} : vector<6x96xf32> to vector<1x96xf32>
    %165 = tpu.concatenate %162, %163, %164 in 0 : vector<1x96xf32>, vector<1x96xf32>, vector<1x96xf32> -> vector<3x96xf32>
    %cst_31 = arith.constant dense<0.000000e+00> : vector<3x192xf32>
    %166 = tpu.matmul %161, %16, %cst_31 {dimension_numbers = #tpu.dot_dimension_numbers<[1], [0], [0], [1], [0, 0, 1, 1], [], []>} : vector<3x32xf32>, vector<32x192xf32>, vector<3x192xf32> -> vector<3x192xf32>
    %167 = vector.extract_strided_slice %166 {offsets = [0, 0], sizes = [3, 96], strides = [1, 1]} : vector<3x192xf32> to vector<3x96xf32>
    %168 = vector.extract_strided_slice %166 {offsets = [0, 96], sizes = [3, 96], strides = [1, 1]} : vector<3x192xf32> to vector<3x96xf32>
    %169 = arith.select %20, %167, %168 : vector<3x96xi1>, vector<3x96xf32>
    %170 = arith.addf %169, %15 : vector<3x96xf32>
    %171 = vector.extract_strided_slice %165 {offsets = [0, 0], sizes = [3, 64], strides = [1, 1]} : vector<3x96xf32> to vector<3x64xf32>
    %172 = vector.extract_strided_slice %170 {offsets = [0, 0], sizes = [3, 64], strides = [1, 1]} : vector<3x96xf32> to vector<3x64xf32>
    %173 = arith.addf %171, %172 : vector<3x64xf32>
    %174 = arith.negf %173 : vector<3x64xf32>
    %175 = math.exp %174 : vector<3x64xf32>
    %cst_32 = arith.constant 1.000000e+00 : f32
    %176 = vector.broadcast %cst_32 : f32 to vector<3x64xf32>
    %177 = arith.addf %176, %175 : vector<3x64xf32>
    %178 = arith.divf %176, %177 : vector<3x64xf32>
    %179 = vector.extract_strided_slice %165 {offsets = [0, 64], sizes = [3, 32], strides = [1, 1]} : vector<3x96xf32> to vector<3x32xf32>
    %180 = vector.extract_strided_slice %178 {offsets = [0, 0], sizes = [3, 32], strides = [1, 1]} : vector<3x64xf32> to vector<3x32xf32>
    %181 = vector.extract_strided_slice %170 {offsets = [0, 64], sizes = [3, 32], strides = [1, 1]} : vector<3x96xf32> to vector<3x32xf32>
    %182 = arith.mulf %180, %181 : vector<3x32xf32>
    %183 = arith.addf %179, %182 : vector<3x32xf32>
    %184 = math.tanh %183 : vector<3x32xf32>
    %185 = vector.extract_strided_slice %178 {offsets = [0, 32], sizes = [3, 32], strides = [1, 1]} : vector<3x64xf32> to vector<3x32xf32>
    %cst_33 = arith.constant 1.000000e+00 : f32
    %186 = vector.broadcast %cst_33 : f32 to vector<3x32xf32>
    %187 = arith.subf %186, %185 : vector<3x32xf32>
    %188 = arith.mulf %187, %184 : vector<3x32xf32>
    %189 = arith.mulf %185, %161 : vector<3x32xf32>
    %190 = arith.addf %188, %189 : vector<3x32xf32>
    %c1_i32 = arith.constant 1 : i32
    %191 = vector.broadcast %c1_i32 : i32 to vector<3x32xi32>
    %192 = arith.cmpi eq, %18, %191 : vector<3x32xi32>
    %c2_i32 = arith.constant 2 : i32
    %193 = vector.broadcast %c2_i32 : i32 to vector<3x32xi32>
    %194 = arith.cmpi eq, %18, %193 : vector<3x32xi32>
    %195 = arith.ori %192, %194 : vector<3x32xi1>
    %196 = arith.select %195, %190, %161 : vector<3x32xi1>, vector<3x32xf32>
    %197 = vector.extract_strided_slice %12 {offsets = [4, 0], sizes = [1, 96], strides = [1, 1]} : vector<5x96xf32> to vector<1x96xf32>
    %198 = vector.extract_strided_slice %13 {offsets = [6, 0], sizes = [1, 96], strides = [1, 1]} : vector<8x96xf32> to vector<1x96xf32>
    %199 = vector.extract_strided_slice %14 {offsets = [5, 0], sizes = [1, 96], strides = [1, 1]} : vector<6x96xf32> to vector<1x96xf32>
    %200 = tpu.concatenate %197, %198, %199 in 0 : vector<1x96xf32>, vector<1x96xf32>, vector<1x96xf32> -> vector<3x96xf32>
    %cst_34 = arith.constant dense<0.000000e+00> : vector<3x192xf32>
    %201 = tpu.matmul %196, %16, %cst_34 {dimension_numbers = #tpu.dot_dimension_numbers<[1], [0], [0], [1], [0, 0, 1, 1], [], []>} : vector<3x32xf32>, vector<32x192xf32>, vector<3x192xf32> -> vector<3x192xf32>
    %202 = vector.extract_strided_slice %201 {offsets = [0, 0], sizes = [3, 96], strides = [1, 1]} : vector<3x192xf32> to vector<3x96xf32>
    %203 = vector.extract_strided_slice %201 {offsets = [0, 96], sizes = [3, 96], strides = [1, 1]} : vector<3x192xf32> to vector<3x96xf32>
    %204 = arith.select %20, %202, %203 : vector<3x96xi1>, vector<3x96xf32>
    %205 = arith.addf %204, %15 : vector<3x96xf32>
    %206 = vector.extract_strided_slice %200 {offsets = [0, 0], sizes = [3, 64], strides = [1, 1]} : vector<3x96xf32> to vector<3x64xf32>
    %207 = vector.extract_strided_slice %205 {offsets = [0, 0], sizes = [3, 64], strides = [1, 1]} : vector<3x96xf32> to vector<3x64xf32>
    %208 = arith.addf %206, %207 : vector<3x64xf32>
    %209 = arith.negf %208 : vector<3x64xf32>
    %210 = math.exp %209 : vector<3x64xf32>
    %cst_35 = arith.constant 1.000000e+00 : f32
    %211 = vector.broadcast %cst_35 : f32 to vector<3x64xf32>
    %212 = arith.addf %211, %210 : vector<3x64xf32>
    %213 = arith.divf %211, %212 : vector<3x64xf32>
    %214 = vector.extract_strided_slice %200 {offsets = [0, 64], sizes = [3, 32], strides = [1, 1]} : vector<3x96xf32> to vector<3x32xf32>
    %215 = vector.extract_strided_slice %213 {offsets = [0, 0], sizes = [3, 32], strides = [1, 1]} : vector<3x64xf32> to vector<3x32xf32>
    %216 = vector.extract_strided_slice %205 {offsets = [0, 64], sizes = [3, 32], strides = [1, 1]} : vector<3x96xf32> to vector<3x32xf32>
    %217 = arith.mulf %215, %216 : vector<3x32xf32>
    %218 = arith.addf %214, %217 : vector<3x32xf32>
    %219 = math.tanh %218 : vector<3x32xf32>
    %220 = vector.extract_strided_slice %213 {offsets = [0, 32], sizes = [3, 32], strides = [1, 1]} : vector<3x64xf32> to vector<3x32xf32>
    %cst_36 = arith.constant 1.000000e+00 : f32
    %221 = vector.broadcast %cst_36 : f32 to vector<3x32xf32>
    %222 = arith.subf %221, %220 : vector<3x32xf32>
    %223 = arith.mulf %222, %219 : vector<3x32xf32>
    %224 = arith.mulf %220, %196 : vector<3x32xf32>
    %225 = arith.addf %223, %224 : vector<3x32xf32>
    %c1_i32_37 = arith.constant 1 : i32
    %226 = vector.broadcast %c1_i32_37 : i32 to vector<3x32xi32>
    %227 = arith.cmpi eq, %18, %226 : vector<3x32xi32>
    %228 = arith.select %227, %225, %196 : vector<3x32xi1>, vector<3x32xf32>
    %229 = vector.extract_strided_slice %12 {offsets = [4, 0], sizes = [1, 96], strides = [1, 1]} : vector<5x96xf32> to vector<1x96xf32>
    %230 = vector.extract_strided_slice %13 {offsets = [7, 0], sizes = [1, 96], strides = [1, 1]} : vector<8x96xf32> to vector<1x96xf32>
    %231 = vector.extract_strided_slice %14 {offsets = [5, 0], sizes = [1, 96], strides = [1, 1]} : vector<6x96xf32> to vector<1x96xf32>
    %232 = tpu.concatenate %229, %230, %231 in 0 : vector<1x96xf32>, vector<1x96xf32>, vector<1x96xf32> -> vector<3x96xf32>
    %cst_38 = arith.constant dense<0.000000e+00> : vector<3x192xf32>
    %233 = tpu.matmul %228, %16, %cst_38 {dimension_numbers = #tpu.dot_dimension_numbers<[1], [0], [0], [1], [0, 0, 1, 1], [], []>} : vector<3x32xf32>, vector<32x192xf32>, vector<3x192xf32> -> vector<3x192xf32>
    %234 = vector.extract_strided_slice %233 {offsets = [0, 0], sizes = [3, 96], strides = [1, 1]} : vector<3x192xf32> to vector<3x96xf32>
    %235 = vector.extract_strided_slice %233 {offsets = [0, 96], sizes = [3, 96], strides = [1, 1]} : vector<3x192xf32> to vector<3x96xf32>
    %236 = arith.select %20, %234, %235 : vector<3x96xi1>, vector<3x96xf32>
    %237 = arith.addf %236, %15 : vector<3x96xf32>
    %238 = vector.extract_strided_slice %232 {offsets = [0, 0], sizes = [3, 64], strides = [1, 1]} : vector<3x96xf32> to vector<3x64xf32>
    %239 = vector.extract_strided_slice %237 {offsets = [0, 0], sizes = [3, 64], strides = [1, 1]} : vector<3x96xf32> to vector<3x64xf32>
    %240 = arith.addf %238, %239 : vector<3x64xf32>
    %241 = arith.negf %240 : vector<3x64xf32>
    %242 = math.exp %241 : vector<3x64xf32>
    %cst_39 = arith.constant 1.000000e+00 : f32
    %243 = vector.broadcast %cst_39 : f32 to vector<3x64xf32>
    %244 = arith.addf %243, %242 : vector<3x64xf32>
    %245 = arith.divf %243, %244 : vector<3x64xf32>
    %246 = vector.extract_strided_slice %232 {offsets = [0, 64], sizes = [3, 32], strides = [1, 1]} : vector<3x96xf32> to vector<3x32xf32>
    %247 = vector.extract_strided_slice %245 {offsets = [0, 0], sizes = [3, 32], strides = [1, 1]} : vector<3x64xf32> to vector<3x32xf32>
    %248 = vector.extract_strided_slice %237 {offsets = [0, 64], sizes = [3, 32], strides = [1, 1]} : vector<3x96xf32> to vector<3x32xf32>
    %249 = arith.mulf %247, %248 : vector<3x32xf32>
    %250 = arith.addf %246, %249 : vector<3x32xf32>
    %251 = math.tanh %250 : vector<3x32xf32>
    %252 = vector.extract_strided_slice %245 {offsets = [0, 32], sizes = [3, 32], strides = [1, 1]} : vector<3x64xf32> to vector<3x32xf32>
    %cst_40 = arith.constant 1.000000e+00 : f32
    %253 = vector.broadcast %cst_40 : f32 to vector<3x32xf32>
    %254 = arith.subf %253, %252 : vector<3x32xf32>
    %255 = arith.mulf %254, %251 : vector<3x32xf32>
    %256 = arith.mulf %252, %228 : vector<3x32xf32>
    %257 = arith.addf %255, %256 : vector<3x32xf32>
    %c1_i32_41 = arith.constant 1 : i32
    %258 = vector.broadcast %c1_i32_41 : i32 to vector<3x32xi32>
    %259 = arith.cmpi eq, %18, %258 : vector<3x32xi32>
    %260 = arith.select %259, %257, %228 : vector<3x32xi1>, vector<3x32xf32>
    %261 = vector.extract_strided_slice %5 {offsets = [4, 96], sizes = [1, 96], strides = [1, 1]} : vector<5x192xf32> to vector<1x96xf32>
    %262 = vector.extract_strided_slice %11 {offsets = [7, 96], sizes = [1, 96], strides = [1, 1]} : vector<14x192xf32> to vector<1x96xf32>
    %263 = vector.extract_strided_slice %11 {offsets = [13, 96], sizes = [1, 96], strides = [1, 1]} : vector<14x192xf32> to vector<1x96xf32>
    %264 = tpu.concatenate %261, %262, %263 in 0 : vector<1x96xf32>, vector<1x96xf32>, vector<1x96xf32> -> vector<3x96xf32>
    %c0_42 = arith.constant 0 : index
    %c0_43 = arith.constant 0 : index
    %265 = vector.load %arg10[%c0_42, %c0_43] : memref<3x96xf32, #tpu.memory_space<vmem>>, vector<3x96xf32>
    %cst_44 = arith.constant 0.000000e+00 : f32
    %266 = vector.broadcast %cst_44 : f32 to vector<3x32xf32>
    %267 = vector.extract_strided_slice %264 {offsets = [0, 0], sizes = [3, 64], strides = [1, 1]} : vector<3x96xf32> to vector<3x64xf32>
    %268 = vector.extract_strided_slice %265 {offsets = [0, 0], sizes = [3, 64], strides = [1, 1]} : vector<3x96xf32> to vector<3x64xf32>
    %269 = arith.addf %267, %268 : vector<3x64xf32>
    %270 = arith.negf %269 : vector<3x64xf32>
    %271 = math.exp %270 : vector<3x64xf32>
    %cst_45 = arith.constant 1.000000e+00 : f32
    %272 = vector.broadcast %cst_45 : f32 to vector<3x64xf32>
    %273 = arith.addf %272, %271 : vector<3x64xf32>
    %274 = arith.divf %272, %273 : vector<3x64xf32>
    %275 = vector.extract_strided_slice %264 {offsets = [0, 64], sizes = [3, 32], strides = [1, 1]} : vector<3x96xf32> to vector<3x32xf32>
    %276 = vector.extract_strided_slice %274 {offsets = [0, 0], sizes = [3, 32], strides = [1, 1]} : vector<3x64xf32> to vector<3x32xf32>
    %277 = vector.extract_strided_slice %265 {offsets = [0, 64], sizes = [3, 32], strides = [1, 1]} : vector<3x96xf32> to vector<3x32xf32>
    %278 = arith.mulf %276, %277 : vector<3x32xf32>
    %279 = arith.addf %275, %278 : vector<3x32xf32>
    %280 = math.tanh %279 : vector<3x32xf32>
    %281 = vector.extract_strided_slice %274 {offsets = [0, 32], sizes = [3, 32], strides = [1, 1]} : vector<3x64xf32> to vector<3x32xf32>
    %cst_46 = arith.constant 1.000000e+00 : f32
    %282 = vector.broadcast %cst_46 : f32 to vector<3x32xf32>
    %283 = arith.subf %282, %281 : vector<3x32xf32>
    %284 = arith.mulf %283, %280 : vector<3x32xf32>
    %285 = arith.mulf %281, %266 : vector<3x32xf32>
    %286 = arith.addf %284, %285 : vector<3x32xf32>
    %287 = arith.addf %260, %286 : vector<3x32xf32>
    %288 = vector.extract_strided_slice %287 {offsets = [0, 0], sizes = [1, 32], strides = [1, 1]} : vector<3x32xf32> to vector<1x32xf32>
    %289 = vector.extract_strided_slice %287 {offsets = [1, 0], sizes = [1, 32], strides = [1, 1]} : vector<3x32xf32> to vector<1x32xf32>
    %290 = vector.extract_strided_slice %287 {offsets = [2, 0], sizes = [1, 32], strides = [1, 1]} : vector<3x32xf32> to vector<1x32xf32>
    %291 = tpu.concatenate %289, %288, %290 in 1 : vector<1x32xf32>, vector<1x32xf32>, vector<1x32xf32> -> vector<1x96xf32>
    %c0_47 = arith.constant 0 : index
    %c0_48 = arith.constant 0 : index
    %292 = vector.load %arg11[%c0_47, %c0_48] : memref<96x32xf32, #tpu.memory_space<vmem>>, vector<96x32xf32>
    %cst_49 = arith.constant dense<0.000000e+00> : vector<1x32xf32>
    %293 = tpu.matmul %291, %292, %cst_49 {dimension_numbers = #tpu.dot_dimension_numbers<[1], [0], [0], [1], [0, 0, 1, 1], [], []>} : vector<1x96xf32>, vector<96x32xf32>, vector<1x32xf32> -> vector<1x32xf32>
    %c0_50 = arith.constant 0 : index
    %c0_51 = arith.constant 0 : index
    %294 = vector.load %arg12[%c0_50, %c0_51] : memref<1x32xf32, #tpu.memory_space<vmem>>, vector<1x32xf32>
    %295 = arith.addf %293, %294 : vector<1x32xf32>
    %296 = vector.extract_strided_slice %295 {offsets = [0, 0], sizes = [1, 16], strides = [1, 1]} : vector<1x32xf32> to vector<1x16xf32>
    %297 = vector.extract_strided_slice %295 {offsets = [0, 16], sizes = [1, 16], strides = [1, 1]} : vector<1x32xf32> to vector<1x16xf32>
    %c0_52 = arith.constant 0 : index
    %c0_53 = arith.constant 0 : index
    %298 = vector.load %arg3[%c0_52, %c0_53] : memref<1x16xf32, #tpu.memory_space<vmem>>, vector<1x16xf32>
    %cst_54 = arith.constant 5.000000e-01 : f32
    %299 = vector.broadcast %cst_54 : f32 to vector<1x16xf32>
    %300 = arith.mulf %299, %297 : vector<1x16xf32>
    %301 = math.exp %300 : vector<1x16xf32>
    %302 = arith.mulf %298, %301 : vector<1x16xf32>
    %303 = arith.addf %296, %302 : vector<1x16xf32>
    %cst_55 = arith.constant 0.000000e+00 : f32
    %304 = vector.broadcast %cst_55 : f32 to vector<8x128xf32>
    %c0_56 = arith.constant 0 : index
    %c0_57 = arith.constant 0 : index
    %305 = vector.load %arg23[%c0_56, %c0_57] : memref<8x128xf32, #tpu.memory_space<vmem>>, vector<8x128xf32>
    tpu.vector_store %arg23[%c0_56, %c0_57], %304 {strides = array<i32>} : memref<8x128xf32, #tpu.memory_space<vmem>>, vector<8x128xf32>,
    %c0_58 = arith.constant 0 : index
    %c0_59 = arith.constant 0 : index
    %306 = vector.load %arg23[%c0_58, %c0_59] : memref<8x128xf32, #tpu.memory_space<vmem>>, vector<1x32xf32>
    tpu.vector_store %arg23[%c0_58, %c0_59], %295 {strides = array<i32>} : memref<8x128xf32, #tpu.memory_space<vmem>>, vector<1x32xf32>,
    %c1 = arith.constant 1 : index
    %c0_60 = arith.constant 0 : index
    %307 = vector.load %arg23[%c1, %c0_60] : memref<8x128xf32, #tpu.memory_space<vmem>>, vector<1x16xf32>
    tpu.vector_store %arg23[%c1, %c0_60], %303 {strides = array<i32>} : memref<8x128xf32, #tpu.memory_space<vmem>>, vector<1x16xf32>,
    %308 = tpu.concatenate %303, %288, %290 in 1 : vector<1x16xf32>, vector<1x32xf32>, vector<1x32xf32> -> vector<1x80xf32>
    %c0_61 = arith.constant 0 : index
    %c0_62 = arith.constant 0 : index
    %309 = vector.load %arg13[%c0_61, %c0_62] : memref<80x32xf32, #tpu.memory_space<vmem>>, vector<80x32xf32>
    %cst_63 = arith.constant dense<0.000000e+00> : vector<1x32xf32>
    %310 = tpu.matmul %308, %309, %cst_63 {dimension_numbers = #tpu.dot_dimension_numbers<[1], [0], [0], [1], [0, 0, 1, 1], [], []>} : vector<1x80xf32>, vector<80x32xf32>, vector<1x32xf32> -> vector<1x32xf32>
    %c0_64 = arith.constant 0 : index
    %c0_65 = arith.constant 0 : index
    %311 = vector.load %arg14[%c0_64, %c0_65] : memref<1x32xf32, #tpu.memory_space<vmem>>, vector<1x32xf32>
    %312 = arith.addf %310, %311 : vector<1x32xf32>
    %313 = tpu.concatenate %312, %312 in 1 : vector<1x32xf32>, vector<1x32xf32> -> vector<1x64xf32>
    %c0_66 = arith.constant 0 : index
    %c0_67 = arith.constant 0 : index
    %314 = vector.load %arg2[%c0_66, %c0_67] : memref<8x32xf32, #tpu.memory_space<vmem>>, vector<8x32xf32>
    %c0_68 = arith.constant 0 : index
    %c0_69 = arith.constant 0 : index
    %315 = vector.load %arg15[%c0_68, %c0_69] : memref<32x192xf32, #tpu.memory_space<vmem>>, vector<32x192xf32>
    %cst_70 = arith.constant dense<0.000000e+00> : vector<8x192xf32>
    %316 = tpu.matmul %314, %315, %cst_70 {dimension_numbers = #tpu.dot_dimension_numbers<[1], [0], [0], [1], [0, 0, 1, 1], [], []>} : vector<8x32xf32>, vector<32x192xf32>, vector<8x192xf32> -> vector<8x192xf32>
    %c0_71 = arith.constant 0 : index
    %c0_72 = arith.constant 0 : index
    %317 = vector.load %arg16[%c0_71, %c0_72] : memref<80x192xf32, #tpu.memory_space<vmem>>, vector<80x192xf32>
    %cst_73 = arith.constant dense<0.000000e+00> : vector<1x192xf32>
    %318 = tpu.matmul %308, %317, %cst_73 {dimension_numbers = #tpu.dot_dimension_numbers<[1], [0], [0], [1], [0, 0, 1, 1], [], []>} : vector<1x80xf32>, vector<80x192xf32>, vector<1x192xf32> -> vector<1x192xf32>
    %c0_74 = arith.constant 0 : index
    %c0_75 = arith.constant 0 : index
    %319 = vector.load %arg17[%c0_74, %c0_75] : memref<1x192xf32, #tpu.memory_space<vmem>>, vector<1x192xf32>
    %320 = arith.addf %318, %319 : vector<1x192xf32>
    %c0_76 = arith.constant 0 : index
    %c0_77 = arith.constant 0 : index
    %321 = vector.load %arg21[%c0_76, %c0_77] : memref<80x128xf32, #tpu.memory_space<vmem>>, vector<80x128xf32>
    %cst_78 = arith.constant dense<0.000000e+00> : vector<1x128xf32>
    %322 = tpu.matmul %308, %321, %cst_78 {dimension_numbers = #tpu.dot_dimension_numbers<[1], [0], [0], [1], [0, 0, 1, 1], [], []>} : vector<1x80xf32>, vector<80x128xf32>, vector<1x128xf32> -> vector<1x128xf32>
    %c0_79 = arith.constant 0 : index
    %c0_80 = arith.constant 0 : index
    %323 = vector.load %arg22[%c0_79, %c0_80] : memref<1x128xf32, #tpu.memory_space<vmem>>, vector<1x128xf32>
    %324 = arith.addf %322, %323 : vector<1x128xf32>
    %c0_81 = arith.constant 0 : index
    %c0_82 = arith.constant 0 : index
    %325 = vector.load %arg18[%c0_81, %c0_82] : memref<64x192xf32, #tpu.memory_space<vmem>>, vector<64x192xf32>
    %c0_83 = arith.constant 0 : index
    %c0_84 = arith.constant 0 : index
    %326 = vector.load %arg19[%c0_83, %c0_84] : memref<1x192xf32, #tpu.memory_space<vmem>>, vector<1x192xf32>
    %327 = vector.extract_strided_slice %316 {offsets = [1, 0], sizes = [1, 192], strides = [1, 1]} : vector<8x192xf32> to vector<1x192xf32>
    %328 = arith.addf %327, %320 : vector<1x192xf32>
    %cst_85 = arith.constant dense<0.000000e+00> : vector<1x192xf32>
    %329 = tpu.matmul %313, %325, %cst_85 {dimension_numbers = #tpu.dot_dimension_numbers<[1], [0], [0], [1], [0, 0, 1, 1], [], []>} : vector<1x64xf32>, vector<64x192xf32>, vector<1x192xf32> -> vector<1x192xf32>
    %330 = arith.addf %329, %326 : vector<1x192xf32>
    %331 = vector.extract_strided_slice %328 {offsets = [0, 0], sizes = [1, 128], strides = [1, 1]} : vector<1x192xf32> to vector<1x128xf32>
    %332 = vector.extract_strided_slice %330 {offsets = [0, 0], sizes = [1, 128], strides = [1, 1]} : vector<1x192xf32> to vector<1x128xf32>
    %333 = arith.addf %331, %332 : vector<1x128xf32>
    %334 = arith.negf %333 : vector<1x128xf32>
    %335 = math.exp %334 : vector<1x128xf32>
    %cst_86 = arith.constant 1.000000e+00 : f32
    %336 = vector.broadcast %cst_86 : f32 to vector<1x128xf32>
    %337 = arith.addf %336, %335 : vector<1x128xf32>
    %338 = arith.divf %336, %337 : vector<1x128xf32>
    %339 = vector.extract_strided_slice %338 {offsets = [0, 0], sizes = [1, 64], strides = [1, 1]} : vector<1x128xf32> to vector<1x64xf32>
    %340 = vector.extract_strided_slice %338 {offsets = [0, 64], sizes = [1, 64], strides = [1, 1]} : vector<1x128xf32> to vector<1x64xf32>
    %341 = vector.extract_strided_slice %328 {offsets = [0, 128], sizes = [1, 64], strides = [1, 1]} : vector<1x192xf32> to vector<1x64xf32>
    %342 = vector.extract_strided_slice %330 {offsets = [0, 128], sizes = [1, 64], strides = [1, 1]} : vector<1x192xf32> to vector<1x64xf32>
    %343 = arith.mulf %339, %342 : vector<1x64xf32>
    %344 = arith.addf %341, %343 : vector<1x64xf32>
    %345 = math.tanh %344 : vector<1x64xf32>
    %cst_87 = arith.constant 1.000000e+00 : f32
    %346 = vector.broadcast %cst_87 : f32 to vector<1x64xf32>
    %347 = arith.subf %346, %340 : vector<1x64xf32>
    %348 = arith.mulf %347, %345 : vector<1x64xf32>
    %349 = arith.mulf %340, %313 : vector<1x64xf32>
    %350 = arith.addf %348, %349 : vector<1x64xf32>
    %c0_88 = arith.constant 0 : index
    %c0_89 = arith.constant 0 : index
    %351 = vector.load %arg25[%c0_88, %c0_89] : memref<7x64xf32, #tpu.memory_space<vmem>>, vector<1x64xf32>
    tpu.vector_store %arg25[%c0_88, %c0_89], %350 {strides = array<i32>} : memref<7x64xf32, #tpu.memory_space<vmem>>, vector<1x64xf32>,
    %352 = vector.extract_strided_slice %316 {offsets = [2, 0], sizes = [1, 192], strides = [1, 1]} : vector<8x192xf32> to vector<1x192xf32>
    %353 = arith.addf %352, %320 : vector<1x192xf32>
    %cst_90 = arith.constant dense<0.000000e+00> : vector<1x192xf32>
    %354 = tpu.matmul %350, %325, %cst_90 {dimension_numbers = #tpu.dot_dimension_numbers<[1], [0], [0], [1], [0, 0, 1, 1], [], []>} : vector<1x64xf32>, vector<64x192xf32>, vector<1x192xf32> -> vector<1x192xf32>
    %355 = arith.addf %354, %326 : vector<1x192xf32>
    %356 = vector.extract_strided_slice %353 {offsets = [0, 0], sizes = [1, 128], strides = [1, 1]} : vector<1x192xf32> to vector<1x128xf32>
    %357 = vector.extract_strided_slice %355 {offsets = [0, 0], sizes = [1, 128], strides = [1, 1]} : vector<1x192xf32> to vector<1x128xf32>
    %358 = arith.addf %356, %357 : vector<1x128xf32>
    %359 = arith.negf %358 : vector<1x128xf32>
    %360 = math.exp %359 : vector<1x128xf32>
    %cst_91 = arith.constant 1.000000e+00 : f32
    %361 = vector.broadcast %cst_91 : f32 to vector<1x128xf32>
    %362 = arith.addf %361, %360 : vector<1x128xf32>
    %363 = arith.divf %361, %362 : vector<1x128xf32>
    %364 = vector.extract_strided_slice %363 {offsets = [0, 0], sizes = [1, 64], strides = [1, 1]} : vector<1x128xf32> to vector<1x64xf32>
    %365 = vector.extract_strided_slice %363 {offsets = [0, 64], sizes = [1, 64], strides = [1, 1]} : vector<1x128xf32> to vector<1x64xf32>
    %366 = vector.extract_strided_slice %353 {offsets = [0, 128], sizes = [1, 64], strides = [1, 1]} : vector<1x192xf32> to vector<1x64xf32>
    %367 = vector.extract_strided_slice %355 {offsets = [0, 128], sizes = [1, 64], strides = [1, 1]} : vector<1x192xf32> to vector<1x64xf32>
    %368 = arith.mulf %364, %367 : vector<1x64xf32>
    %369 = arith.addf %366, %368 : vector<1x64xf32>
    %370 = math.tanh %369 : vector<1x64xf32>
    %cst_92 = arith.constant 1.000000e+00 : f32
    %371 = vector.broadcast %cst_92 : f32 to vector<1x64xf32>
    %372 = arith.subf %371, %365 : vector<1x64xf32>
    %373 = arith.mulf %372, %370 : vector<1x64xf32>
    %374 = arith.mulf %365, %350 : vector<1x64xf32>
    %375 = arith.addf %373, %374 : vector<1x64xf32>
    %c1_93 = arith.constant 1 : index
    %c0_94 = arith.constant 0 : index
    %376 = vector.load %arg25[%c1_93, %c0_94] : memref<7x64xf32, #tpu.memory_space<vmem>>, vector<1x64xf32>
    tpu.vector_store %arg25[%c1_93, %c0_94], %375 {strides = array<i32>} : memref<7x64xf32, #tpu.memory_space<vmem>>, vector<1x64xf32>,
    %377 = vector.extract_strided_slice %316 {offsets = [3, 0], sizes = [1, 192], strides = [1, 1]} : vector<8x192xf32> to vector<1x192xf32>
    %378 = arith.addf %377, %320 : vector<1x192xf32>
    %cst_95 = arith.constant dense<0.000000e+00> : vector<1x192xf32>
    %379 = tpu.matmul %375, %325, %cst_95 {dimension_numbers = #tpu.dot_dimension_numbers<[1], [0], [0], [1], [0, 0, 1, 1], [], []>} : vector<1x64xf32>, vector<64x192xf32>, vector<1x192xf32> -> vector<1x192xf32>
    %380 = arith.addf %379, %326 : vector<1x192xf32>
    %381 = vector.extract_strided_slice %378 {offsets = [0, 0], sizes = [1, 128], strides = [1, 1]} : vector<1x192xf32> to vector<1x128xf32>
    %382 = vector.extract_strided_slice %380 {offsets = [0, 0], sizes = [1, 128], strides = [1, 1]} : vector<1x192xf32> to vector<1x128xf32>
    %383 = arith.addf %381, %382 : vector<1x128xf32>
    %384 = arith.negf %383 : vector<1x128xf32>
    %385 = math.exp %384 : vector<1x128xf32>
    %cst_96 = arith.constant 1.000000e+00 : f32
    %386 = vector.broadcast %cst_96 : f32 to vector<1x128xf32>
    %387 = arith.addf %386, %385 : vector<1x128xf32>
    %388 = arith.divf %386, %387 : vector<1x128xf32>
    %389 = vector.extract_strided_slice %388 {offsets = [0, 0], sizes = [1, 64], strides = [1, 1]} : vector<1x128xf32> to vector<1x64xf32>
    %390 = vector.extract_strided_slice %388 {offsets = [0, 64], sizes = [1, 64], strides = [1, 1]} : vector<1x128xf32> to vector<1x64xf32>
    %391 = vector.extract_strided_slice %378 {offsets = [0, 128], sizes = [1, 64], strides = [1, 1]} : vector<1x192xf32> to vector<1x64xf32>
    %392 = vector.extract_strided_slice %380 {offsets = [0, 128], sizes = [1, 64], strides = [1, 1]} : vector<1x192xf32> to vector<1x64xf32>
    %393 = arith.mulf %389, %392 : vector<1x64xf32>
    %394 = arith.addf %391, %393 : vector<1x64xf32>
    %395 = math.tanh %394 : vector<1x64xf32>
    %cst_97 = arith.constant 1.000000e+00 : f32
    %396 = vector.broadcast %cst_97 : f32 to vector<1x64xf32>
    %397 = arith.subf %396, %390 : vector<1x64xf32>
    %398 = arith.mulf %397, %395 : vector<1x64xf32>
    %399 = arith.mulf %390, %375 : vector<1x64xf32>
    %400 = arith.addf %398, %399 : vector<1x64xf32>
    %c2 = arith.constant 2 : index
    %c0_98 = arith.constant 0 : index
    %401 = vector.load %arg25[%c2, %c0_98] : memref<7x64xf32, #tpu.memory_space<vmem>>, vector<1x64xf32>
    tpu.vector_store %arg25[%c2, %c0_98], %400 {strides = array<i32>} : memref<7x64xf32, #tpu.memory_space<vmem>>, vector<1x64xf32>,
    %402 = vector.extract_strided_slice %316 {offsets = [4, 0], sizes = [1, 192], strides = [1, 1]} : vector<8x192xf32> to vector<1x192xf32>
    %403 = arith.addf %402, %320 : vector<1x192xf32>
    %cst_99 = arith.constant dense<0.000000e+00> : vector<1x192xf32>
    %404 = tpu.matmul %400, %325, %cst_99 {dimension_numbers = #tpu.dot_dimension_numbers<[1], [0], [0], [1], [0, 0, 1, 1], [], []>} : vector<1x64xf32>, vector<64x192xf32>, vector<1x192xf32> -> vector<1x192xf32>
    %405 = arith.addf %404, %326 : vector<1x192xf32>
    %406 = vector.extract_strided_slice %403 {offsets = [0, 0], sizes = [1, 128], strides = [1, 1]} : vector<1x192xf32> to vector<1x128xf32>
    %407 = vector.extract_strided_slice %405 {offsets = [0, 0], sizes = [1, 128], strides = [1, 1]} : vector<1x192xf32> to vector<1x128xf32>
    %408 = arith.addf %406, %407 : vector<1x128xf32>
    %409 = arith.negf %408 : vector<1x128xf32>
    %410 = math.exp %409 : vector<1x128xf32>
    %cst_100 = arith.constant 1.000000e+00 : f32
    %411 = vector.broadcast %cst_100 : f32 to vector<1x128xf32>
    %412 = arith.addf %411, %410 : vector<1x128xf32>
    %413 = arith.divf %411, %412 : vector<1x128xf32>
    %414 = vector.extract_strided_slice %413 {offsets = [0, 0], sizes = [1, 64], strides = [1, 1]} : vector<1x128xf32> to vector<1x64xf32>
    %415 = vector.extract_strided_slice %413 {offsets = [0, 64], sizes = [1, 64], strides = [1, 1]} : vector<1x128xf32> to vector<1x64xf32>
    %416 = vector.extract_strided_slice %403 {offsets = [0, 128], sizes = [1, 64], strides = [1, 1]} : vector<1x192xf32> to vector<1x64xf32>
    %417 = vector.extract_strided_slice %405 {offsets = [0, 128], sizes = [1, 64], strides = [1, 1]} : vector<1x192xf32> to vector<1x64xf32>
    %418 = arith.mulf %414, %417 : vector<1x64xf32>
    %419 = arith.addf %416, %418 : vector<1x64xf32>
    %420 = math.tanh %419 : vector<1x64xf32>
    %cst_101 = arith.constant 1.000000e+00 : f32
    %421 = vector.broadcast %cst_101 : f32 to vector<1x64xf32>
    %422 = arith.subf %421, %415 : vector<1x64xf32>
    %423 = arith.mulf %422, %420 : vector<1x64xf32>
    %424 = arith.mulf %415, %400 : vector<1x64xf32>
    %425 = arith.addf %423, %424 : vector<1x64xf32>
    %c3 = arith.constant 3 : index
    %c0_102 = arith.constant 0 : index
    %426 = vector.load %arg25[%c3, %c0_102] : memref<7x64xf32, #tpu.memory_space<vmem>>, vector<1x64xf32>
    tpu.vector_store %arg25[%c3, %c0_102], %425 {strides = array<i32>} : memref<7x64xf32, #tpu.memory_space<vmem>>, vector<1x64xf32>,
    %427 = vector.extract_strided_slice %316 {offsets = [5, 0], sizes = [1, 192], strides = [1, 1]} : vector<8x192xf32> to vector<1x192xf32>
    %428 = arith.addf %427, %320 : vector<1x192xf32>
    %cst_103 = arith.constant dense<0.000000e+00> : vector<1x192xf32>
    %429 = tpu.matmul %425, %325, %cst_103 {dimension_numbers = #tpu.dot_dimension_numbers<[1], [0], [0], [1], [0, 0, 1, 1], [], []>} : vector<1x64xf32>, vector<64x192xf32>, vector<1x192xf32> -> vector<1x192xf32>
    %430 = arith.addf %429, %326 : vector<1x192xf32>
    %431 = vector.extract_strided_slice %428 {offsets = [0, 0], sizes = [1, 128], strides = [1, 1]} : vector<1x192xf32> to vector<1x128xf32>
    %432 = vector.extract_strided_slice %430 {offsets = [0, 0], sizes = [1, 128], strides = [1, 1]} : vector<1x192xf32> to vector<1x128xf32>
    %433 = arith.addf %431, %432 : vector<1x128xf32>
    %434 = arith.negf %433 : vector<1x128xf32>
    %435 = math.exp %434 : vector<1x128xf32>
    %cst_104 = arith.constant 1.000000e+00 : f32
    %436 = vector.broadcast %cst_104 : f32 to vector<1x128xf32>
    %437 = arith.addf %436, %435 : vector<1x128xf32>
    %438 = arith.divf %436, %437 : vector<1x128xf32>
    %439 = vector.extract_strided_slice %438 {offsets = [0, 0], sizes = [1, 64], strides = [1, 1]} : vector<1x128xf32> to vector<1x64xf32>
    %440 = vector.extract_strided_slice %438 {offsets = [0, 64], sizes = [1, 64], strides = [1, 1]} : vector<1x128xf32> to vector<1x64xf32>
    %441 = vector.extract_strided_slice %428 {offsets = [0, 128], sizes = [1, 64], strides = [1, 1]} : vector<1x192xf32> to vector<1x64xf32>
    %442 = vector.extract_strided_slice %430 {offsets = [0, 128], sizes = [1, 64], strides = [1, 1]} : vector<1x192xf32> to vector<1x64xf32>
    %443 = arith.mulf %439, %442 : vector<1x64xf32>
    %444 = arith.addf %441, %443 : vector<1x64xf32>
    %445 = math.tanh %444 : vector<1x64xf32>
    %cst_105 = arith.constant 1.000000e+00 : f32
    %446 = vector.broadcast %cst_105 : f32 to vector<1x64xf32>
    %447 = arith.subf %446, %440 : vector<1x64xf32>
    %448 = arith.mulf %447, %445 : vector<1x64xf32>
    %449 = arith.mulf %440, %425 : vector<1x64xf32>
    %450 = arith.addf %448, %449 : vector<1x64xf32>
    %c4 = arith.constant 4 : index
    %c0_106 = arith.constant 0 : index
    %451 = vector.load %arg25[%c4, %c0_106] : memref<7x64xf32, #tpu.memory_space<vmem>>, vector<1x64xf32>
    tpu.vector_store %arg25[%c4, %c0_106], %450 {strides = array<i32>} : memref<7x64xf32, #tpu.memory_space<vmem>>, vector<1x64xf32>,
    %452 = vector.extract_strided_slice %316 {offsets = [6, 0], sizes = [1, 192], strides = [1, 1]} : vector<8x192xf32> to vector<1x192xf32>
    %453 = arith.addf %452, %320 : vector<1x192xf32>
    %cst_107 = arith.constant dense<0.000000e+00> : vector<1x192xf32>
    %454 = tpu.matmul %450, %325, %cst_107 {dimension_numbers = #tpu.dot_dimension_numbers<[1], [0], [0], [1], [0, 0, 1, 1], [], []>} : vector<1x64xf32>, vector<64x192xf32>, vector<1x192xf32> -> vector<1x192xf32>
    %455 = arith.addf %454, %326 : vector<1x192xf32>
    %456 = vector.extract_strided_slice %453 {offsets = [0, 0], sizes = [1, 128], strides = [1, 1]} : vector<1x192xf32> to vector<1x128xf32>
    %457 = vector.extract_strided_slice %455 {offsets = [0, 0], sizes = [1, 128], strides = [1, 1]} : vector<1x192xf32> to vector<1x128xf32>
    %458 = arith.addf %456, %457 : vector<1x128xf32>
    %459 = arith.negf %458 : vector<1x128xf32>
    %460 = math.exp %459 : vector<1x128xf32>
    %cst_108 = arith.constant 1.000000e+00 : f32
    %461 = vector.broadcast %cst_108 : f32 to vector<1x128xf32>
    %462 = arith.addf %461, %460 : vector<1x128xf32>
    %463 = arith.divf %461, %462 : vector<1x128xf32>
    %464 = vector.extract_strided_slice %463 {offsets = [0, 0], sizes = [1, 64], strides = [1, 1]} : vector<1x128xf32> to vector<1x64xf32>
    %465 = vector.extract_strided_slice %463 {offsets = [0, 64], sizes = [1, 64], strides = [1, 1]} : vector<1x128xf32> to vector<1x64xf32>
    %466 = vector.extract_strided_slice %453 {offsets = [0, 128], sizes = [1, 64], strides = [1, 1]} : vector<1x192xf32> to vector<1x64xf32>
    %467 = vector.extract_strided_slice %455 {offsets = [0, 128], sizes = [1, 64], strides = [1, 1]} : vector<1x192xf32> to vector<1x64xf32>
    %468 = arith.mulf %464, %467 : vector<1x64xf32>
    %469 = arith.addf %466, %468 : vector<1x64xf32>
    %470 = math.tanh %469 : vector<1x64xf32>
    %cst_109 = arith.constant 1.000000e+00 : f32
    %471 = vector.broadcast %cst_109 : f32 to vector<1x64xf32>
    %472 = arith.subf %471, %465 : vector<1x64xf32>
    %473 = arith.mulf %472, %470 : vector<1x64xf32>
    %474 = arith.mulf %465, %450 : vector<1x64xf32>
    %475 = arith.addf %473, %474 : vector<1x64xf32>
    %c5 = arith.constant 5 : index
    %c0_110 = arith.constant 0 : index
    %476 = vector.load %arg25[%c5, %c0_110] : memref<7x64xf32, #tpu.memory_space<vmem>>, vector<1x64xf32>
    tpu.vector_store %arg25[%c5, %c0_110], %475 {strides = array<i32>} : memref<7x64xf32, #tpu.memory_space<vmem>>, vector<1x64xf32>,
    %477 = vector.extract_strided_slice %316 {offsets = [7, 0], sizes = [1, 192], strides = [1, 1]} : vector<8x192xf32> to vector<1x192xf32>
    %478 = arith.addf %477, %320 : vector<1x192xf32>
    %cst_111 = arith.constant dense<0.000000e+00> : vector<1x192xf32>
    %479 = tpu.matmul %475, %325, %cst_111 {dimension_numbers = #tpu.dot_dimension_numbers<[1], [0], [0], [1], [0, 0, 1, 1], [], []>} : vector<1x64xf32>, vector<64x192xf32>, vector<1x192xf32> -> vector<1x192xf32>
    %480 = arith.addf %479, %326 : vector<1x192xf32>
    %481 = vector.extract_strided_slice %478 {offsets = [0, 0], sizes = [1, 128], strides = [1, 1]} : vector<1x192xf32> to vector<1x128xf32>
    %482 = vector.extract_strided_slice %480 {offsets = [0, 0], sizes = [1, 128], strides = [1, 1]} : vector<1x192xf32> to vector<1x128xf32>
    %483 = arith.addf %481, %482 : vector<1x128xf32>
    %484 = arith.negf %483 : vector<1x128xf32>
    %485 = math.exp %484 : vector<1x128xf32>
    %cst_112 = arith.constant 1.000000e+00 : f32
    %486 = vector.broadcast %cst_112 : f32 to vector<1x128xf32>
    %487 = arith.addf %486, %485 : vector<1x128xf32>
    %488 = arith.divf %486, %487 : vector<1x128xf32>
    %489 = vector.extract_strided_slice %488 {offsets = [0, 0], sizes = [1, 64], strides = [1, 1]} : vector<1x128xf32> to vector<1x64xf32>
    %490 = vector.extract_strided_slice %488 {offsets = [0, 64], sizes = [1, 64], strides = [1, 1]} : vector<1x128xf32> to vector<1x64xf32>
    %491 = vector.extract_strided_slice %478 {offsets = [0, 128], sizes = [1, 64], strides = [1, 1]} : vector<1x192xf32> to vector<1x64xf32>
    %492 = vector.extract_strided_slice %480 {offsets = [0, 128], sizes = [1, 64], strides = [1, 1]} : vector<1x192xf32> to vector<1x64xf32>
    %493 = arith.mulf %489, %492 : vector<1x64xf32>
    %494 = arith.addf %491, %493 : vector<1x64xf32>
    %495 = math.tanh %494 : vector<1x64xf32>
    %cst_113 = arith.constant 1.000000e+00 : f32
    %496 = vector.broadcast %cst_113 : f32 to vector<1x64xf32>
    %497 = arith.subf %496, %490 : vector<1x64xf32>
    %498 = arith.mulf %497, %495 : vector<1x64xf32>
    %499 = arith.mulf %490, %475 : vector<1x64xf32>
    %500 = arith.addf %498, %499 : vector<1x64xf32>
    %c6 = arith.constant 6 : index
    %c0_114 = arith.constant 0 : index
    %501 = vector.load %arg25[%c6, %c0_114] : memref<7x64xf32, #tpu.memory_space<vmem>>, vector<1x64xf32>
    tpu.vector_store %arg25[%c6, %c0_114], %500 {strides = array<i32>} : memref<7x64xf32, #tpu.memory_space<vmem>>, vector<1x64xf32>,
    %c0_115 = arith.constant 0 : index
    %c0_116 = arith.constant 0 : index
    %502 = vector.load %arg25[%c0_115, %c0_116] : memref<7x64xf32, #tpu.memory_space<vmem>>, vector<7x64xf32>
    %c0_117 = arith.constant 0 : index
    %c0_118 = arith.constant 0 : index
    %503 = vector.load %arg20[%c0_117, %c0_118] : memref<64x128xf32, #tpu.memory_space<vmem>>, vector<64x128xf32>
    %cst_119 = arith.constant dense<0.000000e+00> : vector<7x128xf32>
    %504 = tpu.matmul %502, %503, %cst_119 {dimension_numbers = #tpu.dot_dimension_numbers<[1], [0], [0], [1], [0, 0, 1, 1], [], []>} : vector<7x64xf32>, vector<64x128xf32>, vector<7x128xf32> -> vector<7x128xf32>
    %505 = vector.broadcast %324 : vector<1x128xf32> to vector<7x128xf32>
    %506 = arith.addf %504, %505 : vector<7x128xf32>
    %cst_120 = arith.constant 0.000000e+00 : f32
    %507 = vector.broadcast %cst_120 : f32 to vector<1x128xf32>
    %c0_121 = arith.constant 0 : index
    %c0_122 = arith.constant 0 : index
    %508 = vector.load %arg24[%c0_121, %c0_122] : memref<8x128xf32, #tpu.memory_space<vmem>>, vector<1x128xf32>
    tpu.vector_store %arg24[%c0_121, %c0_122], %507 {strides = array<i32>} : memref<8x128xf32, #tpu.memory_space<vmem>>, vector<1x128xf32>,
    %c1_123 = arith.constant 1 : index
    %c0_124 = arith.constant 0 : index
    %509 = vector.load %arg24[%c1_123, %c0_124] : memref<8x128xf32, #tpu.memory_space<vmem>>, vector<7x128xf32>
    tpu.vector_store %arg24[%c1_123, %c0_124], %506 {strides = array<i32>} : memref<8x128xf32, #tpu.memory_space<vmem>>, vector<7x128xf32>,
    return
  }
}

</mosaic_0001>

<llo_original>
// kernel: cvae_forward.1
$region0: #{cvae_forward.1}
  #allocation0 [shape = 'u32[]', space=smem, size = 0x4, offset = 0x4, fixed_abs, tag = 'smem constant byte address 0x4 - core index']
  #allocation1 [shape = 'u32[144,128]{1,0:T(1,128)}', space=vmem, size = 0x12000, scoped, tag = 'internal scratch']
  #allocation2 [shape = 'f32[7,64]{1,0:T(8,128)}', space=vmem, size = 0x1000, scoped, tag = 'scratch operand']
  %s0 = inlined_call_operand.vmem [shape: f32[5,32], index: 0, kind: input, shape index: {}]
  %s1 = inlined_call_operand.vmem [shape: f32[14,32], index: 1, kind: input, shape index: {}]
  %s2 = inlined_call_operand.vmem [shape: f32[8,32], index: 2, kind: input, shape index: {}]
  %s3 = inlined_call_operand.vmem [shape: f32[1,16], index: 3, kind: input, shape index: {}]
  %s4 = inlined_call_operand.vmem [shape: f32[32,192], index: 4, kind: input, shape index: {}]
  %s5 = inlined_call_operand.vmem [shape: f32[1,192], index: 5, kind: input, shape index: {}]
  %s6 = inlined_call_operand.vmem [shape: f32[32,192], index: 6, kind: input, shape index: {}]
  %s7 = inlined_call_operand.vmem [shape: f32[1,192], index: 7, kind: input, shape index: {}]
  %s8 = inlined_call_operand.vmem [shape: f32[32,192], index: 8, kind: input, shape index: {}]
  %s9 = inlined_call_operand.vmem [shape: f32[3,96], index: 9, kind: input, shape index: {}]
  %s10 = inlined_call_operand.vmem [shape: f32[3,96], index: 10, kind: input, shape index: {}]
  %s11 = inlined_call_operand.vmem [shape: f32[96,32], index: 11, kind: input, shape index: {}]
  %s12 = inlined_call_operand.vmem [shape: f32[1,32], index: 12, kind: input, shape index: {}]
  %s13 = inlined_call_operand.vmem [shape: f32[80,32], index: 13, kind: input, shape index: {}]
  %s14 = inlined_call_operand.vmem [shape: f32[1,32], index: 14, kind: input, shape index: {}]
  %s15 = inlined_call_operand.vmem [shape: f32[32,192], index: 15, kind: input, shape index: {}]
  %s16 = inlined_call_operand.vmem [shape: f32[80,192], index: 16, kind: input, shape index: {}]
  %s17 = inlined_call_operand.vmem [shape: f32[1,192], index: 17, kind: input, shape index: {}]
  %s18 = inlined_call_operand.vmem [shape: f32[64,192], index: 18, kind: input, shape index: {}]
  %s19 = inlined_call_operand.vmem [shape: f32[1,192], index: 19, kind: input, shape index: {}]
  %s20 = inlined_call_operand.vmem [shape: f32[64,128], index: 20, kind: input, shape index: {}]
  %s21 = inlined_call_operand.vmem [shape: f32[80,128], index: 21, kind: input, shape index: {}]
  %s22 = inlined_call_operand.vmem [shape: f32[1,128], index: 22, kind: input, shape index: {}]
  %s23 = inlined_call_operand.vmem [shape: f32[8,128], index: 23, kind: output, shape index: {0}]
  %s24 = inlined_call_operand.vmem [shape: f32[8,128], index: 24, kind: output, shape index: {1}]
  %25 = xla_tuple %s23, %s24
  %s26 = sld [smem:[#allocation0]]
  $region110: #{cvae_forward.1} parent=0
    _
  %s28 = ssub.s32 1, %s26
  %s29 = scalar_select 0, %s28, %s26
  // Predicated region
  $region2: #{cvae_forward.1} parent=0 // pred_check
    _
  $region3: #{cvae_forward.1} parent=0 // pred_check_branch
    %31 = sbr.rel (0) target = $region5
  $region4: #{cvae_forward.1} parent=0 // pred_region
    _
  $region5: #{cvae_forward.1} parent=0 // pred_fallthru
    _
  // Predicated region
  $region6: #{cvae_forward.1} parent=0 // pred_check
    _
  $region7: #{cvae_forward.1} parent=0 // pred_check_branch
    %33 = sbr.rel (0) target = $region9
  $region8: #{cvae_forward.1} parent=0 // pred_region
    _
  $region9: #{cvae_forward.1} parent=0 // pred_fallthru
    _
  // Predicated region
  $region10: #{cvae_forward.1} parent=0 // pred_check
    _
  $region11: #{cvae_forward.1} parent=0 // pred_check_branch
    %35 = sbr.rel (0) target = $region13
  $region12: #{cvae_forward.1} parent=0 // pred_region
    _
  $region13: #{cvae_forward.1} parent=0 // pred_fallthru
    _
  // Predicated region
  $region14: #{cvae_forward.1} parent=0 // pred_check
    _
  $region15: #{cvae_forward.1} parent=0 // pred_check_branch
    %37 = sbr.rel (0) target = $region17
  $region16: #{cvae_forward.1} parent=0 // pred_region
    _
  $region17: #{cvae_forward.1} parent=0 // pred_fallthru
    _
  // Predicated region
  $region18: #{cvae_forward.1} parent=0 // pred_check
    _
  $region19: #{cvae_forward.1} parent=0 // pred_check_branch
    %39 = sbr.rel (0) target = $region21
  $region20: #{cvae_forward.1} parent=0 // pred_region
    _
  $region21: #{cvae_forward.1} parent=0 // pred_fallthru
    _
  // Predicated region
  $region22: #{cvae_forward.1} parent=0 // pred_check
    _
  $region23: #{cvae_forward.1} parent=0 // pred_check_branch
    %41 = sbr.rel (0) target = $region25
  $region24: #{cvae_forward.1} parent=0 // pred_region
    _
  $region25: #{cvae_forward.1} parent=0 // pred_fallthru
    _
  // Predicated region
  $region26: #{cvae_forward.1} parent=0 // pred_check
    _
  $region27: #{cvae_forward.1} parent=0 // pred_check_branch
    %43 = sbr.rel (0) target = $region29
  $region28: #{cvae_forward.1} parent=0 // pred_region
    _
  $region29: #{cvae_forward.1} parent=0 // pred_fallthru
    _
  // Predicated region
  $region30: #{cvae_forward.1} parent=0 // pred_check
    _
  $region31: #{cvae_forward.1} parent=0 // pred_check_branch
    %45 = sbr.rel (0) target = $region33
  $region32: #{cvae_forward.1} parent=0 // pred_region
    _
  $region33: #{cvae_forward.1} parent=0 // pred_fallthru
    _
  // Predicated region
  $region34: #{cvae_forward.1} parent=0 // pred_check
    _
  $region35: #{cvae_forward.1} parent=0 // pred_check_branch
    %47 = sbr.rel (0) target = $region37
  $region36: #{cvae_forward.1} parent=0 // pred_region
    _
  $region37: #{cvae_forward.1} parent=0 // pred_fallthru
    _
  // Predicated region
  $region38: #{cvae_forward.1} parent=0 // pred_check
    _
  $region39: #{cvae_forward.1} parent=0 // pred_check_branch
    %49 = sbr.rel (0) target = $region41
  $region40: #{cvae_forward.1} parent=0 // pred_region
    _
  $region41: #{cvae_forward.1} parent=0 // pred_fallthru
    _
  // Predicated region
  $region42: #{cvae_forward.1} parent=0 // pred_check
    _
  $region43: #{cvae_forward.1} parent=0 // pred_check_branch
    %51 = sbr.rel (0) target = $region45
  $region44: #{cvae_forward.1} parent=0 // pred_region
    _
  $region45: #{cvae_forward.1} parent=0 // pred_fallthru
    _
  // Predicated region
  $region46: #{cvae_forward.1} parent=0 // pred_check
    _
  $region47: #{cvae_forward.1} parent=0 // pred_check_branch
    %53 = sbr.rel (0) target = $region49
  $region48: #{cvae_forward.1} parent=0 // pred_region
    _
  $region49: #{cvae_forward.1} parent=0 // pred_fallthru
    _
  // Predicated region
  $region50: #{cvae_forward.1} parent=0 // pred_check
    _
  $region51: #{cvae_forward.1} parent=0 // pred_check_branch
    %55 = sbr.rel (0) target = $region53
  $region52: #{cvae_forward.1} parent=0 // pred_region
    _
  $region53: #{cvae_forward.1} parent=0 // pred_fallthru
    _
  // Predicated region
  $region54: #{cvae_forward.1} parent=0 // pred_check
    _
  $region55: #{cvae_forward.1} parent=0 // pred_check_branch
    %57 = sbr.rel (0) target = $region57
  $region56: #{cvae_forward.1} parent=0 // pred_region
    _
  $region57: #{cvae_forward.1} parent=0 // pred_fallthru
    _
  // Predicated region
  $region58: #{cvae_forward.1} parent=0 // pred_check
    _
  $region59: #{cvae_forward.1} parent=0 // pred_check_branch
    %59 = sbr.rel (0) target = $region61
  $region60: #{cvae_forward.1} parent=0 // pred_region
    _
  $region61: #{cvae_forward.1} parent=0 // pred_fallthru
    _
  // Predicated region
  $region62: #{cvae_forward.1} parent=0 // pred_check
    _
  $region63: #{cvae_forward.1} parent=0 // pred_check_branch
    %61 = sbr.rel (0) target = $region65
  $region64: #{cvae_forward.1} parent=0 // pred_region
    _
  $region65: #{cvae_forward.1} parent=0 // pred_fallthru
    _
  // Predicated region
  $region66: #{cvae_forward.1} parent=0 // pred_check
    _
  $region67: #{cvae_forward.1} parent=0 // pred_check_branch
    %63 = sbr.rel (0) target = $region69
  $region68: #{cvae_forward.1} parent=0 // pred_region
    _
  $region69: #{cvae_forward.1} parent=0 // pred_fallthru
    _
  // Predicated region
  $region70: #{cvae_forward.1} parent=0 // pred_check
    _
  $region71: #{cvae_forward.1} parent=0 // pred_check_branch
    %65 = sbr.rel (0) target = $region73
  $region72: #{cvae_forward.1} parent=0 // pred_region
    _
  $region73: #{cvae_forward.1} parent=0 // pred_fallthru
    _
  // Predicated region
  $region74: #{cvae_forward.1} parent=0 // pred_check
    _
  $region75: #{cvae_forward.1} parent=0 // pred_check_branch
    %67 = sbr.rel (0) target = $region77
  $region76: #{cvae_forward.1} parent=0 // pred_region
    _
  $region77: #{cvae_forward.1} parent=0 // pred_fallthru
    _
  // Predicated region
  $region78: #{cvae_forward.1} parent=0 // pred_check
    _
  $region79: #{cvae_forward.1} parent=0 // pred_check_branch
    %69 = sbr.rel (0) target = $region81
  $region80: #{cvae_forward.1} parent=0 // pred_region
    _
  $region81: #{cvae_forward.1} parent=0 // pred_fallthru
    _
  // Predicated region
  $region82: #{cvae_forward.1} parent=0 // pred_check
    _
  $region83: #{cvae_forward.1} parent=0 // pred_check_branch
    %71 = sbr.rel (0) target = $region85
  $region84: #{cvae_forward.1} parent=0 // pred_region
    _
  $region85: #{cvae_forward.1} parent=0 // pred_fallthru
    _
  // Predicated region
  $region86: #{cvae_forward.1} parent=0 // pred_check
    _
  $region87: #{cvae_forward.1} parent=0 // pred_check_branch
    %73 = sbr.rel (0) target = $region89
  $region88: #{cvae_forward.1} parent=0 // pred_region
    _
  $region89: #{cvae_forward.1} parent=0 // pred_fallthru
    _
  // Predicated region
  $region90: #{cvae_forward.1} parent=0 // pred_check
    _
  $region91: #{cvae_forward.1} parent=0 // pred_check_branch
    %75 = sbr.rel (0) target = $region93
  $region92: #{cvae_forward.1} parent=0 // pred_region
    _
  $region93: #{cvae_forward.1} parent=0 // pred_fallthru
    _
  %v76 = vld [vmem:[%s0] sm:$0x1f]
  %v77 = vld [vmem:[%s4] sm:$0xff]
  %v78 = vld [vmem:[%s4 + $0x8] sm:$0xff]
  %v79 = vld [vmem:[%s4 + $0x10] sm:$0xff]
  %v80 = vld [vmem:[%s4 + $0x18] sm:$0xff]
  %v81 = vld [vmem:[%s4 + $0x20] sm:$0xff]
  %v82 = vld [vmem:[%s4 + $0x28] sm:$0xff]
  %v83 = vld [vmem:[%s4 + $0x30] sm:$0xff]
  %v84 = vld [vmem:[%s4 + $0x38] sm:$0xff]
  %v85 = vld [vmem:[%s5] sm:$0x3]
  %v87 = vlaneseq
  %v88 = vshrl.u32 %v87, 7
  %v89 = vsub.s32 0, %v88
  %v90 = vrot.slane %v85, %v89
  %v91 = vlaneseq
  %v92 = vshrl.u32 %v91, 7
  %v93 = vsub.s32 1, %v92
  %v94 = vrot.slane %v85, %v93
  %vm97 = vcmask 261120
  %v99 = vsel %vm97, %v76, 0
  %101 = vmatprep.subr.mxu0 %v78
  %102 = vmatpush1.msra.mxu0 %v77
  %103 = vmatprep.subr.mxu0 %v80
  %104 = vmatpush1.msra.mxu0 %v79
  %105 = vmatprep.subr.mxu0 %v82
  %106 = vmatpush1.msra.mxu0 %v81
  %107 = vmatprep.subr.mxu0 %v84
  %108 = vmatpush1.msra.mxu0 %v83
  %109 = vmatprep.subr.mxu0 0.0
  %110 = vmatpush1.msra.mxu0 0.0
  %111 = vmatprep.subr.mxu0 0.0
  %112 = vmatpush1.msra.mxu0 0.0
  %113 = vmatprep.subr.mxu0 0.0
  %114 = vmatpush1.msra.mxu0 0.0
  %115 = vmatprep.subr.mxu0 0.0
  %116 = vmatpush1.msra.mxu0 0.0
  %117 = vmatprep.subr.mxu0 0.0
  %118 = vmatpush1.msra.mxu0 0.0
  %119 = vmatprep.subr.mxu0 0.0
  %120 = vmatpush1.msra.mxu0 0.0
  %121 = vmatprep.subr.mxu0 0.0
  %122 = vmatpush1.msra.mxu0 0.0
  %123 = vmatprep.subr.mxu0 0.0
  %124 = vmatpush1.msra.mxu0 0.0
  %125 = vmatprep.subr.mxu0 0.0
  %126 = vmatpush1.msra.mxu0 0.0
  %127 = vmatprep.subr.mxu0 0.0
  %128 = vmatpush1.msra.mxu0 0.0
  %129 = vmatprep.subr.mxu0 0.0
  %130 = vmatpush1.msra.mxu0 0.0
  %131 = vmatprep.subr.mxu0 0.0
  %132 = vmatpush1.msra.mxu0 0.0
  %133 = vmatprep.subr.mxu0 0.0
  %134 = vmatpush1.msra.mxu0 0.0
  %135 = vmatprep.subr.mxu0 0.0
  %136 = vmatpush1.msra.mxu0 0.0
  %137 = vmatprep.subr.mxu0 0.0
  %138 = vmatpush1.msra.mxu0 0.0
  %139 = vmatprep.subr.mxu0 0.0
  %140 = vmatpush1.msra.mxu0 0.0
  %141 = vmatprep.subr.mxu0 0.0
  %142 = vmatpush1.msra.mxu0 0.0
  %143 = vmatprep.subr.mxu0 0.0
  %144 = vmatpush1.msra.mxu0 0.0
  %145 = vmatprep.subr.mxu0 0.0
  %146 = vmatpush1.msra.mxu0 0.0
  %147 = vmatprep.subr.mxu0 0.0
  %148 = vmatpush1.msra.mxu0 0.0
  %149 = vmatprep.subr.mxu0 0.0
  %150 = vmatpush1.msra.mxu0 0.0
  %151 = vmatprep.subr.mxu0 0.0
  %152 = vmatpush1.msra.mxu0 0.0
  %153 = vmatprep.subr.mxu0 0.0
  %154 = vmatpush1.msra.mxu0 0.0
  %155 = vmatprep.subr.mxu0 0.0
  %156 = vmatpush1.msra.mxu0 0.0
  %157 = vmatprep.subr.mxu0 0.0
  %158 = vmatpush1.msra.mxu0 0.0
  %159 = vmatprep.subr.mxu0 0.0
  %160 = vmatpush1.msra.mxu0 0.0
  %161 = vmatprep.subr.mxu0 0.0
  %162 = vmatpush1.msra.mxu0 0.0
  %163 = vmatprep.subr.mxu0 0.0
  %164 = vmatpush1.msra.mxu0 0.0
  %165 = vmatprep.mubr.f32.mxu0 0.0
  %166 = vmatmul.mubr.f32.gmra.mrb[0].mxu0 %v99
  %v167 = vpop.f32.mrb[0].mxu0
  %v168 = vadd.f32 %v90, %v167
  %v169 = vpop.f32.mrb[0].mxu0
  %v170 = vadd.f32 %v94, %v169
  %171 = vdwg.mxu0
  %v172 = vld [vmem:[%s1] sm:$0xff]
  %v173 = vld [vmem:[%s1 + $0x8] sm:$0x3f]
  %v174 = vld [vmem:[%s6] sm:$0xff]
  %v175 = vld [vmem:[%s6 + $0x8] sm:$0xff]
  %v176 = vld [vmem:[%s6 + $0x10] sm:$0xff]
  %v177 = vld [vmem:[%s6 + $0x18] sm:$0xff]
  %v178 = vld [vmem:[%s6 + $0x20] sm:$0xff]
  %v179 = vld [vmem:[%s6 + $0x28] sm:$0xff]
  %v180 = vld [vmem:[%s6 + $0x30] sm:$0xff]
  %v181 = vld [vmem:[%s6 + $0x38] sm:$0xff]
  %v182 = vld [vmem:[%s7] sm:$0x3]
  %v184 = vlaneseq
  %v185 = vshrl.u32 %v184, 7
  %v186 = vsub.s32 0, %v185
  %v187 = vrot.slane %v182, %v186
  %v188 = vlaneseq
  %v189 = vshrl.u32 %v188, 7
  %v190 = vsub.s32 1, %v189
  %v191 = vrot.slane %v182, %v190
  %v195 = vsel %vm97, %v172, 0
  %v198 = vsel %vm97, %v173, 0
  %200 = vmatprep.subr.mxu0 %v175
  %201 = vmatpush1.msra.mxu0 %v174
  %202 = vmatprep.subr.mxu0 %v177
  %203 = vmatpush1.msra.mxu0 %v176
  %204 = vmatprep.subr.mxu0 %v179
  %205 = vmatpush1.msra.mxu0 %v178
  %206 = vmatprep.subr.mxu0 %v181
  %207 = vmatpush1.msra.mxu0 %v180
  %208 = vmatprep.subr.mxu0 0.0
  %209 = vmatpush1.msra.mxu0 0.0
  %210 = vmatprep.subr.mxu0 0.0
  %211 = vmatpush1.msra.mxu0 0.0
  %212 = vmatprep.subr.mxu0 0.0
  %213 = vmatpush1.msra.mxu0 0.0
  %214 = vmatprep.subr.mxu0 0.0
  %215 = vmatpush1.msra.mxu0 0.0
  %216 = vmatprep.subr.mxu0 0.0
  %217 = vmatpush1.msra.mxu0 0.0
  %218 = vmatprep.subr.mxu0 0.0
  %219 = vmatpush1.msra.mxu0 0.0
  %220 = vmatprep.subr.mxu0 0.0
  %221 = vmatpush1.msra.mxu0 0.0
  %222 = vmatprep.subr.mxu0 0.0
  %223 = vmatpush1.msra.mxu0 0.0
  %224 = vmatprep.subr.mxu0 0.0
  %225 = vmatpush1.msra.mxu0 0.0
  %226 = vmatprep.subr.mxu0 0.0
  %227 = vmatpush1.msra.mxu0 0.0
  %228 = vmatprep.subr.mxu0 0.0
  %229 = vmatpush1.msra.mxu0 0.0
  %230 = vmatprep.subr.mxu0 0.0
  %231 = vmatpush1.msra.mxu0 0.0
  %232 = vmatprep.subr.mxu0 0.0
  %233 = vmatpush1.msra.mxu0 0.0
  %234 = vmatprep.subr.mxu0 0.0
  %235 = vmatpush1.msra.mxu0 0.0
  %236 = vmatprep.subr.mxu0 0.0
  %237 = vmatpush1.msra.mxu0 0.0
  %238 = vmatprep.subr.mxu0 0.0
  %239 = vmatpush1.msra.mxu0 0.0
  %240 = vmatprep.subr.mxu0 0.0
  %241 = vmatpush1.msra.mxu0 0.0
  %242 = vmatprep.subr.mxu0 0.0
  %243 = vmatpush1.msra.mxu0 0.0
  %244 = vmatprep.subr.mxu0 0.0
  %245 = vmatpush1.msra.mxu0 0.0
  %246 = vmatprep.subr.mxu0 0.0
  %247 = vmatpush1.msra.mxu0 0.0
  %248 = vmatprep.subr.mxu0 0.0
  %249 = vmatpush1.msra.mxu0 0.0
  %250 = vmatprep.subr.mxu0 0.0
  %251 = vmatpush1.msra.mxu0 0.0
  %252 = vmatprep.subr.mxu0 0.0
  %253 = vmatpush1.msra.mxu0 0.0
  %254 = vmatprep.subr.mxu0 0.0
  %255 = vmatpush1.msra.mxu0 0.0
  %256 = vmatprep.subr.mxu0 0.0
  %257 = vmatpush1.msra.mxu0 0.0
  %258 = vmatprep.subr.mxu0 0.0
  %259 = vmatpush1.msra.mxu0 0.0
  %260 = vmatprep.subr.mxu0 0.0
  %261 = vmatpush1.msra.mxu0 0.0
  %262 = vmatprep.subr.mxu0 0.0
  %263 = vmatpush1.msra.mxu0 0.0
  %264 = vmatprep.mubr.f32.mxu0 0.0
  %265 = vmatmul.mubr.f32.gmra.mrb[0].mxu0 %v195
  %v266 = vpop.f32.mrb[0].mxu0
  %v267 = vadd.f32 %v187, %v266
  %v268 = vpop.f32.mrb[0].mxu0
  %v269 = vadd.f32 %v191, %v268
  %270 = vmatprep.mubr.f32.mxu0 0.0
  %271 = vmatmul.mubr.f32.gmra.mrb[0].mxu0 %v198
  %v272 = vpop.f32.mrb[0].mxu0
  %v273 = vadd.f32 %v187, %v272
  %v274 = vpop.f32.mrb[0].mxu0
  %v275 = vadd.f32 %v191, %v274
  %276 = vdwg.mxu0
  %v277 = vld [vmem:[%s9] sm:$0x7]
  %v278 = vld [vmem:[%s8] sm:$0xff]
  %v279 = vld [vmem:[%s8 + $0x8] sm:$0xff]
  %v280 = vld [vmem:[%s8 + $0x10] sm:$0xff]
  %v281 = vld [vmem:[%s8 + $0x18] sm:$0xff]
  %v282 = vld [vmem:[%s8 + $0x20] sm:$0xff]
  %v283 = vld [vmem:[%s8 + $0x28] sm:$0xff]
  %v284 = vld [vmem:[%s8 + $0x30] sm:$0xff]
  %v285 = vld [vmem:[%s8 + $0x38] sm:$0xff]
  %v286 = vlaneseq
  %v287 = vshrl.u32 %v286, 7
  %vm288 = vcmp.eq.s32.totalorder %v287, 0
  %v290 = vrot.slane %v267, 7
  %v293 = vrot.slane %v273, 6
  %vm295 = vcmask 1040384
  %v296 = vsel %vm295, %v168, %v290
  %vm297 = vcmask 1041408
  %v298 = vsel %vm297, %v296, %v293
  %v299 = vadd.f32 %v298, %v277
  %v300 = vxor.u32 %v299, 2147483648
  %v301 = vmul.f32 %v300, 1.442695
  %v302 = vpow.pop %v301
  %v303 = vadd.f32 %v302, 1.0
  %v304 = vrcp.pop %v303
  %v305 = vmul.f32 1.0, %v304
  %307 = vrot.lane.b32.xlu0 %v277, 64
  %v308 = vpop.permute.xlu0 %307
  %v310 = vmul.f32 %v305, %v308
  %312 = vrot.lane.b32.xlu0 %v310, 64
  %v313 = vpop.permute.xlu0 %312
  %v315 = vadd.f32 %v298, %v313
  %v316 = vtanh.pop %v315
  %v317 = vsub.f32 1.0, %v305
  %319 = vrot.lane.b32.xlu0 %v316, 96
  %v320 = vpop.permute.xlu0 %319
  %v322 = vmul.f32 %v317, %v320
  %v323 = vmul.f32 %v305, 0.0
  %v324 = vadd.f32 %v322, %v323
  %v326 = vrot.slane %v168, 1
  %v328 = vrot.slane %v273, 7
  %v330 = vsel %vm295, %v326, %v267
  %v331 = vsel %vm297, %v330, %v328
  %333 = vrot.lane.b32.xlu0 %v324, 96
  %v334 = vpop.permute.xlu0 %333
  %v335 = vsel %vm97, %v334, 0
  %337 = vmatprep.subr.mxu0 %v279
  %338 = vmatpush1.msra.mxu0 %v278
  %339 = vmatprep.subr.mxu0 %v281
  %340 = vmatpush1.msra.mxu0 %v280
  %341 = vmatprep.subr.mxu0 %v283
  %342 = vmatpush1.msra.mxu0 %v282
  %343 = vmatprep.subr.mxu0 %v285
  %344 = vmatpush1.msra.mxu0 %v284
  %345 = vmatprep.subr.mxu0 0.0
  %346 = vmatpush1.msra.mxu0 0.0
  %347 = vmatprep.subr.mxu0 0.0
  %348 = vmatpush1.msra.mxu0 0.0
  %349 = vmatprep.subr.mxu0 0.0
  %350 = vmatpush1.msra.mxu0 0.0
  %351 = vmatprep.subr.mxu0 0.0
  %352 = vmatpush1.msra.mxu0 0.0
  %353 = vmatprep.subr.mxu0 0.0
  %354 = vmatpush1.msra.mxu0 0.0
  %355 = vmatprep.subr.mxu0 0.0
  %356 = vmatpush1.msra.mxu0 0.0
  %357 = vmatprep.subr.mxu0 0.0
  %358 = vmatpush1.msra.mxu0 0.0
  %359 = vmatprep.subr.mxu0 0.0
  %360 = vmatpush1.msra.mxu0 0.0
  %361 = vmatprep.subr.mxu0 0.0
  %362 = vmatpush1.msra.mxu0 0.0
  %363 = vmatprep.subr.mxu0 0.0
  %364 = vmatpush1.msra.mxu0 0.0
  %365 = vmatprep.subr.mxu0 0.0
  %366 = vmatpush1.msra.mxu0 0.0
  %367 = vmatprep.subr.mxu0 0.0
  %368 = vmatpush1.msra.mxu0 0.0
  %369 = vmatprep.subr.mxu0 0.0
  %370 = vmatpush1.msra.mxu0 0.0
  %371 = vmatprep.subr.mxu0 0.0
  %372 = vmatpush1.msra.mxu0 0.0
  %373 = vmatprep.subr.mxu0 0.0
  %374 = vmatpush1.msra.mxu0 0.0
  %375 = vmatprep.subr.mxu0 0.0
  %376 = vmatpush1.msra.mxu0 0.0
  %377 = vmatprep.subr.mxu0 0.0
  %378 = vmatpush1.msra.mxu0 0.0
  %379 = vmatprep.subr.mxu0 0.0
  %380 = vmatpush1.msra.mxu0 0.0
  %381 = vmatprep.subr.mxu0 0.0
  %382 = vmatpush1.msra.mxu0 0.0
  %383 = vmatprep.subr.mxu0 0.0
  %384 = vmatpush1.msra.mxu0 0.0
  %385 = vmatprep.subr.mxu0 0.0
  %386 = vmatpush1.msra.mxu0 0.0
  %387 = vmatprep.subr.mxu0 0.0
  %388 = vmatpush1.msra.mxu0 0.0
  %389 = vmatprep.subr.mxu0 0.0
  %390 = vmatpush1.msra.mxu0 0.0
  %391 = vmatprep.subr.mxu0 0.0
  %392 = vmatpush1.msra.mxu0 0.0
  %393 = vmatprep.subr.mxu0 0.0
  %394 = vmatpush1.msra.mxu0 0.0
  %395 = vmatprep.subr.mxu0 0.0
  %396 = vmatpush1.msra.mxu0 0.0
  %397 = vmatprep.subr.mxu0 0.0
  %398 = vmatpush1.msra.mxu0 0.0
  %399 = vmatprep.subr.mxu0 0.0
  %400 = vmatpush1.msra.mxu0 0.0
  %401 = vmatprep.mubr.f32.mxu0 0.0
  %402 = vmatmul.mubr.f32.gmra.mrb[0].mxu0 %v335
  %v403 = vpop.f32.mrb[0].mxu0
  %v404 = vadd.f32 0.0, %v403
  %v405 = vpop.f32.mrb[0].mxu0
  %v406 = vadd.f32 0.0, %v405
  %407 = vdwg.mxu0
  %410 = vrot.lane.b32.xlu0 %v404, 32
  %v411 = vpop.permute.xlu0 %410
  %412 = vrot.lane.b32.xlu0 %v406, 32
  %v413 = vpop.permute.xlu0 %412
  %v414 = vsel %vm97, %v411, %v413
  %v416 = vsel %vm288, %v404, %v414
  %v417 = vadd.f32 %v416, %v277
  %v418 = vadd.f32 %v331, %v417
  %v419 = vxor.u32 %v418, 2147483648
  %v420 = vmul.f32 %v419, 1.442695
  %v421 = vpow.pop %v420
  %v422 = vadd.f32 %v421, 1.0
  %v423 = vrcp.pop %v422
  %v424 = vmul.f32 1.0, %v423
  %426 = vrot.lane.b32.xlu0 %v417, 64
  %v427 = vpop.permute.xlu0 %426
  %v429 = vmul.f32 %v424, %v427
  %431 = vrot.lane.b32.xlu0 %v429, 64
  %v432 = vpop.permute.xlu0 %431
  %v434 = vadd.f32 %v331, %v432
  %v435 = vtanh.pop %v434
  %v436 = vsub.f32 1.0, %v424
  %438 = vrot.lane.b32.xlu0 %v435, 96
  %v439 = vpop.permute.xlu0 %438
  %v441 = vmul.f32 %v436, %v439
  %v442 = vmul.f32 %v424, %v324
  %v443 = vadd.f32 %v441, %v442
  %v444 = vrot.slane %v168, 2
  %v446 = vrot.slane %v267, 1
  %v448 = vsel %vm295, %v444, %v446
  %v449 = vsel %vm297, %v448, %v273
  %451 = vrot.lane.b32.xlu0 %v443, 96
  %v452 = vpop.permute.xlu0 %451
  %v453 = vsel %vm97, %v452, 0
  %455 = vmatprep.subr.mxu0 %v279
  %456 = vmatpush1.msra.mxu0 %v278
  %457 = vmatprep.subr.mxu0 %v281
  %458 = vmatpush1.msra.mxu0 %v280
  %459 = vmatprep.subr.mxu0 %v283
  %460 = vmatpush1.msra.mxu0 %v282
  %461 = vmatprep.subr.mxu0 %v285
  %462 = vmatpush1.msra.mxu0 %v284
  %463 = vmatprep.subr.mxu0 0.0
  %464 = vmatpush1.msra.mxu0 0.0
  %465 = vmatprep.subr.mxu0 0.0
  %466 = vmatpush1.msra.mxu0 0.0
  %467 = vmatprep.subr.mxu0 0.0
  %468 = vmatpush1.msra.mxu0 0.0
  %469 = vmatprep.subr.mxu0 0.0
  %470 = vmatpush1.msra.mxu0 0.0
  %471 = vmatprep.subr.mxu0 0.0
  %472 = vmatpush1.msra.mxu0 0.0
  %473 = vmatprep.subr.mxu0 0.0
  %474 = vmatpush1.msra.mxu0 0.0
  %475 = vmatprep.subr.mxu0 0.0
  %476 = vmatpush1.msra.mxu0 0.0
  %477 = vmatprep.subr.mxu0 0.0
  %478 = vmatpush1.msra.mxu0 0.0
  %479 = vmatprep.subr.mxu0 0.0
  %480 = vmatpush1.msra.mxu0 0.0
  %481 = vmatprep.subr.mxu0 0.0
  %482 = vmatpush1.msra.mxu0 0.0
  %483 = vmatprep.subr.mxu0 0.0
  %484 = vmatpush1.msra.mxu0 0.0
  %485 = vmatprep.subr.mxu0 0.0
  %486 = vmatpush1.msra.mxu0 0.0
  %487 = vmatprep.subr.mxu0 0.0
  %488 = vmatpush1.msra.mxu0 0.0
  %489 = vmatprep.subr.mxu0 0.0
  %490 = vmatpush1.msra.mxu0 0.0
  %491 = vmatprep.subr.mxu0 0.0
  %492 = vmatpush1.msra.mxu0 0.0
  %493 = vmatprep.subr.mxu0 0.0
  %494 = vmatpush1.msra.mxu0 0.0
  %495 = vmatprep.subr.mxu0 0.0
  %496 = vmatpush1.msra.mxu0 0.0
  %497 = vmatprep.subr.mxu0 0.0
  %498 = vmatpush1.msra.mxu0 0.0
  %499 = vmatprep.subr.mxu0 0.0
  %500 = vmatpush1.msra.mxu0 0.0
  %501 = vmatprep.subr.mxu0 0.0
  %502 = vmatpush1.msra.mxu0 0.0
  %503 = vmatprep.subr.mxu0 0.0
  %504 = vmatpush1.msra.mxu0 0.0
  %505 = vmatprep.subr.mxu0 0.0
  %506 = vmatpush1.msra.mxu0 0.0
  %507 = vmatprep.subr.mxu0 0.0
  %508 = vmatpush1.msra.mxu0 0.0
  %509 = vmatprep.subr.mxu0 0.0
  %510 = vmatpush1.msra.mxu0 0.0
  %511 = vmatprep.subr.mxu0 0.0
  %512 = vmatpush1.msra.mxu0 0.0
  %513 = vmatprep.subr.mxu0 0.0
  %514 = vmatpush1.msra.mxu0 0.0
  %515 = vmatprep.subr.mxu0 0.0
  %516 = vmatpush1.msra.mxu0 0.0
  %517 = vmatprep.subr.mxu0 0.0
  %518 = vmatpush1.msra.mxu0 0.0
  %519 = vmatprep.mubr.f32.mxu0 0.0
  %520 = vmatmul.mubr.f32.gmra.mrb[0].mxu0 %v453
  %v521 = vpop.f32.mrb[0].mxu0
  %v522 = vadd.f32 0.0, %v521
  %v523 = vpop.f32.mrb[0].mxu0
  %v524 = vadd.f32 0.0, %v523
  %525 = vdwg.mxu0
  %528 = vrot.lane.b32.xlu0 %v522, 32
  %v529 = vpop.permute.xlu0 %528
  %530 = vrot.lane.b32.xlu0 %v524, 32
  %v531 = vpop.permute.xlu0 %530
  %v532 = vsel %vm97, %v529, %v531
  %v534 = vsel %vm288, %v522, %v532
  %v535 = vadd.f32 %v534, %v277
  %v536 = vadd.f32 %v449, %v535
  %v537 = vxor.u32 %v536, 2147483648
  %v538 = vmul.f32 %v537, 1.442695
  %v539 = vpow.pop %v538
  %v540 = vadd.f32 %v539, 1.0
  %v541 = vrcp.pop %v540
  %v542 = vmul.f32 1.0, %v541
  %544 = vrot.lane.b32.xlu0 %v535, 64
  %v545 = vpop.permute.xlu0 %544
  %v547 = vmul.f32 %v542, %v545
  %549 = vrot.lane.b32.xlu0 %v547, 64
  %v550 = vpop.permute.xlu0 %549
  %v552 = vadd.f32 %v449, %v550
  %v553 = vtanh.pop %v552
  %v554 = vsub.f32 1.0, %v542
  %556 = vrot.lane.b32.xlu0 %v553, 96
  %v557 = vpop.permute.xlu0 %556
  %v559 = vmul.f32 %v554, %v557
  %v560 = vmul.f32 %v542, %v443
  %v561 = vadd.f32 %v559, %v560
  %v562 = vrot.slane %v168, 3
  %v564 = vrot.slane %v267, 2
  %v566 = vrot.slane %v273, 1
  %v568 = vsel %vm295, %v562, %v564
  %v569 = vsel %vm297, %v568, %v566
  %571 = vrot.lane.b32.xlu0 %v561, 96
  %v572 = vpop.permute.xlu0 %571
  %v573 = vsel %vm97, %v572, 0
  %575 = vmatprep.subr.mxu0 %v279
  %576 = vmatpush1.msra.mxu0 %v278
  %577 = vmatprep.subr.mxu0 %v281
  %578 = vmatpush1.msra.mxu0 %v280
  %579 = vmatprep.subr.mxu0 %v283
  %580 = vmatpush1.msra.mxu0 %v282
  %581 = vmatprep.subr.mxu0 %v285
  %582 = vmatpush1.msra.mxu0 %v284
  %583 = vmatprep.subr.mxu0 0.0
  %584 = vmatpush1.msra.mxu0 0.0
  %585 = vmatprep.subr.mxu0 0.0
  %586 = vmatpush1.msra.mxu0 0.0
  %587 = vmatprep.subr.mxu0 0.0
  %588 = vmatpush1.msra.mxu0 0.0
  %589 = vmatprep.subr.mxu0 0.0
  %590 = vmatpush1.msra.mxu0 0.0
  %591 = vmatprep.subr.mxu0 0.0
  %592 = vmatpush1.msra.mxu0 0.0
  %593 = vmatprep.subr.mxu0 0.0
  %594 = vmatpush1.msra.mxu0 0.0
  %595 = vmatprep.subr.mxu0 0.0
  %596 = vmatpush1.msra.mxu0 0.0
  %597 = vmatprep.subr.mxu0 0.0
  %598 = vmatpush1.msra.mxu0 0.0
  %599 = vmatprep.subr.mxu0 0.0
  %600 = vmatpush1.msra.mxu0 0.0
  %601 = vmatprep.subr.mxu0 0.0
  %602 = vmatpush1.msra.mxu0 0.0
  %603 = vmatprep.subr.mxu0 0.0
  %604 = vmatpush1.msra.mxu0 0.0
  %605 = vmatprep.subr.mxu0 0.0
  %606 = vmatpush1.msra.mxu0 0.0
  %607 = vmatprep.subr.mxu0 0.0
  %608 = vmatpush1.msra.mxu0 0.0
  %609 = vmatprep.subr.mxu0 0.0
  %610 = vmatpush1.msra.mxu0 0.0
  %611 = vmatprep.subr.mxu0 0.0
  %612 = vmatpush1.msra.mxu0 0.0
  %613 = vmatprep.subr.mxu0 0.0
  %614 = vmatpush1.msra.mxu0 0.0
  %615 = vmatprep.subr.mxu0 0.0
  %616 = vmatpush1.msra.mxu0 0.0
  %617 = vmatprep.subr.mxu0 0.0
  %618 = vmatpush1.msra.mxu0 0.0
  %619 = vmatprep.subr.mxu0 0.0
  %620 = vmatpush1.msra.mxu0 0.0
  %621 = vmatprep.subr.mxu0 0.0
  %622 = vmatpush1.msra.mxu0 0.0
  %623 = vmatprep.subr.mxu0 0.0
  %624 = vmatpush1.msra.mxu0 0.0
  %625 = vmatprep.subr.mxu0 0.0
  %626 = vmatpush1.msra.mxu0 0.0
  %627 = vmatprep.subr.mxu0 0.0
  %628 = vmatpush1.msra.mxu0 0.0
  %629 = vmatprep.subr.mxu0 0.0
  %630 = vmatpush1.msra.mxu0 0.0
  %631 = vmatprep.subr.mxu0 0.0
  %632 = vmatpush1.msra.mxu0 0.0
  %633 = vmatprep.subr.mxu0 0.0
  %634 = vmatpush1.msra.mxu0 0.0
  %635 = vmatprep.subr.mxu0 0.0
  %636 = vmatpush1.msra.mxu0 0.0
  %637 = vmatprep.subr.mxu0 0.0
  %638 = vmatpush1.msra.mxu0 0.0
  %639 = vmatprep.mubr.f32.mxu0 0.0
  %640 = vmatmul.mubr.f32.gmra.mrb[0].mxu0 %v573
  %v641 = vpop.f32.mrb[0].mxu0
  %v642 = vadd.f32 0.0, %v641
  %v643 = vpop.f32.mrb[0].mxu0
  %v644 = vadd.f32 0.0, %v643
  %645 = vdwg.mxu0
  %648 = vrot.lane.b32.xlu0 %v642, 32
  %v649 = vpop.permute.xlu0 %648
  %650 = vrot.lane.b32.xlu0 %v644, 32
  %v651 = vpop.permute.xlu0 %650
  %v652 = vsel %vm97, %v649, %v651
  %v654 = vsel %vm288, %v642, %v652
  %v655 = vadd.f32 %v654, %v277
  %v656 = vadd.f32 %v569, %v655
  %v657 = vxor.u32 %v656, 2147483648
  %v658 = vmul.f32 %v657, 1.442695
  %v659 = vpow.pop %v658
  %v660 = vadd.f32 %v659, 1.0
  %v661 = vrcp.pop %v660
  %v662 = vmul.f32 1.0, %v661
  %664 = vrot.lane.b32.xlu0 %v655, 64
  %v665 = vpop.permute.xlu0 %664
  %v667 = vmul.f32 %v662, %v665
  %669 = vrot.lane.b32.xlu0 %v667, 64
  %v670 = vpop.permute.xlu0 %669
  %v672 = vadd.f32 %v569, %v670
  %v673 = vtanh.pop %v672
  %v674 = vsub.f32 1.0, %v662
  %676 = vrot.lane.b32.xlu0 %v673, 96
  %v677 = vpop.permute.xlu0 %676
  %v679 = vmul.f32 %v674, %v677
  %v680 = vmul.f32 %v662, %v561
  %v681 = vadd.f32 %v679, %v680
  %v682 = vrot.slane %v168, 4
  %v684 = vrot.slane %v267, 3
  %v686 = vrot.slane %v273, 2
  %v688 = vsel %vm295, %v682, %v684
  %v689 = vsel %vm297, %v688, %v686
  %691 = vrot.lane.b32.xlu0 %v681, 96
  %v692 = vpop.permute.xlu0 %691
  %v693 = vsel %vm97, %v692, 0
  %695 = vmatprep.subr.mxu0 %v279
  %696 = vmatpush1.msra.mxu0 %v278
  %697 = vmatprep.subr.mxu0 %v281
  %698 = vmatpush1.msra.mxu0 %v280
  %699 = vmatprep.subr.mxu0 %v283
  %700 = vmatpush1.msra.mxu0 %v282
  %701 = vmatprep.subr.mxu0 %v285
  %702 = vmatpush1.msra.mxu0 %v284
  %703 = vmatprep.subr.mxu0 0.0
  %704 = vmatpush1.msra.mxu0 0.0
  %705 = vmatprep.subr.mxu0 0.0
  %706 = vmatpush1.msra.mxu0 0.0
  %707 = vmatprep.subr.mxu0 0.0
  %708 = vmatpush1.msra.mxu0 0.0
  %709 = vmatprep.subr.mxu0 0.0
  %710 = vmatpush1.msra.mxu0 0.0
  %711 = vmatprep.subr.mxu0 0.0
  %712 = vmatpush1.msra.mxu0 0.0
  %713 = vmatprep.subr.mxu0 0.0
  %714 = vmatpush1.msra.mxu0 0.0
  %715 = vmatprep.subr.mxu0 0.0
  %716 = vmatpush1.msra.mxu0 0.0
  %717 = vmatprep.subr.mxu0 0.0
  %718 = vmatpush1.msra.mxu0 0.0
  %719 = vmatprep.subr.mxu0 0.0
  %720 = vmatpush1.msra.mxu0 0.0
  %721 = vmatprep.subr.mxu0 0.0
  %722 = vmatpush1.msra.mxu0 0.0
  %723 = vmatprep.subr.mxu0 0.0
  %724 = vmatpush1.msra.mxu0 0.0
  %725 = vmatprep.subr.mxu0 0.0
  %726 = vmatpush1.msra.mxu0 0.0
  %727 = vmatprep.subr.mxu0 0.0
  %728 = vmatpush1.msra.mxu0 0.0
  %729 = vmatprep.subr.mxu0 0.0
  %730 = vmatpush1.msra.mxu0 0.0
  %731 = vmatprep.subr.mxu0 0.0
  %732 = vmatpush1.msra.mxu0 0.0
  %733 = vmatprep.subr.mxu0 0.0
  %734 = vmatpush1.msra.mxu0 0.0
  %735 = vmatprep.subr.mxu0 0.0
  %736 = vmatpush1.msra.mxu0 0.0
  %737 = vmatprep.subr.mxu0 0.0
  %738 = vmatpush1.msra.mxu0 0.0
  %739 = vmatprep.subr.mxu0 0.0
  %740 = vmatpush1.msra.mxu0 0.0
  %741 = vmatprep.subr.mxu0 0.0
  %742 = vmatpush1.msra.mxu0 0.0
  %743 = vmatprep.subr.mxu0 0.0
  %744 = vmatpush1.msra.mxu0 0.0
  %745 = vmatprep.subr.mxu0 0.0
  %746 = vmatpush1.msra.mxu0 0.0
  %747 = vmatprep.subr.mxu0 0.0
  %748 = vmatpush1.msra.mxu0 0.0
  %749 = vmatprep.subr.mxu0 0.0
  %750 = vmatpush1.msra.mxu0 0.0
  %751 = vmatprep.subr.mxu0 0.0
  %752 = vmatpush1.msra.mxu0 0.0
  %753 = vmatprep.subr.mxu0 0.0
  %754 = vmatpush1.msra.mxu0 0.0
  %755 = vmatprep.subr.mxu0 0.0
  %756 = vmatpush1.msra.mxu0 0.0
  %757 = vmatprep.subr.mxu0 0.0
  %758 = vmatpush1.msra.mxu0 0.0
  %759 = vmatprep.mubr.f32.mxu0 0.0
  %760 = vmatmul.mubr.f32.gmra.mrb[0].mxu0 %v693
  %v761 = vpop.f32.mrb[0].mxu0
  %v762 = vadd.f32 0.0, %v761
  %v763 = vpop.f32.mrb[0].mxu0
  %v764 = vadd.f32 0.0, %v763
  %765 = vdwg.mxu0
  %768 = vrot.lane.b32.xlu0 %v762, 32
  %v769 = vpop.permute.xlu0 %768
  %770 = vrot.lane.b32.xlu0 %v764, 32
  %v771 = vpop.permute.xlu0 %770
  %v772 = vsel %vm97, %v769, %v771
  %v774 = vsel %vm288, %v762, %v772
  %v775 = vadd.f32 %v774, %v277
  %v776 = vadd.f32 %v689, %v775
  %v777 = vxor.u32 %v776, 2147483648
  %v778 = vmul.f32 %v777, 1.442695
  %v779 = vpow.pop %v778
  %v780 = vadd.f32 %v779, 1.0
  %v781 = vrcp.pop %v780
  %v782 = vmul.f32 1.0, %v781
  %784 = vrot.lane.b32.xlu0 %v775, 64
  %v785 = vpop.permute.xlu0 %784
  %v787 = vmul.f32 %v782, %v785
  %789 = vrot.lane.b32.xlu0 %v787, 64
  %v790 = vpop.permute.xlu0 %789
  %v792 = vadd.f32 %v689, %v790
  %v793 = vtanh.pop %v792
  %v794 = vsub.f32 1.0, %v782
  %796 = vrot.lane.b32.xlu0 %v793, 96
  %v797 = vpop.permute.xlu0 %796
  %v799 = vmul.f32 %v794, %v797
  %v800 = vmul.f32 %v782, %v681
  %v801 = vadd.f32 %v799, %v800
  %v802 = vrot.slane %v267, 4
  %v804 = vrot.slane %v273, 3
  %v806 = vsel %vm295, %v682, %v802
  %v807 = vsel %vm297, %v806, %v804
  %809 = vrot.lane.b32.xlu0 %v801, 96
  %v810 = vpop.permute.xlu0 %809
  %v811 = vsel %vm97, %v810, 0
  %813 = vmatprep.subr.mxu0 %v279
  %814 = vmatpush1.msra.mxu0 %v278
  %815 = vmatprep.subr.mxu0 %v281
  %816 = vmatpush1.msra.mxu0 %v280
  %817 = vmatprep.subr.mxu0 %v283
  %818 = vmatpush1.msra.mxu0 %v282
  %819 = vmatprep.subr.mxu0 %v285
  %820 = vmatpush1.msra.mxu0 %v284
  %821 = vmatprep.subr.mxu0 0.0
  %822 = vmatpush1.msra.mxu0 0.0
  %823 = vmatprep.subr.mxu0 0.0
  %824 = vmatpush1.msra.mxu0 0.0
  %825 = vmatprep.subr.mxu0 0.0
  %826 = vmatpush1.msra.mxu0 0.0
  %827 = vmatprep.subr.mxu0 0.0
  %828 = vmatpush1.msra.mxu0 0.0
  %829 = vmatprep.subr.mxu0 0.0
  %830 = vmatpush1.msra.mxu0 0.0
  %831 = vmatprep.subr.mxu0 0.0
  %832 = vmatpush1.msra.mxu0 0.0
  %833 = vmatprep.subr.mxu0 0.0
  %834 = vmatpush1.msra.mxu0 0.0
  %835 = vmatprep.subr.mxu0 0.0
  %836 = vmatpush1.msra.mxu0 0.0
  %837 = vmatprep.subr.mxu0 0.0
  %838 = vmatpush1.msra.mxu0 0.0
  %839 = vmatprep.subr.mxu0 0.0
  %840 = vmatpush1.msra.mxu0 0.0
  %841 = vmatprep.subr.mxu0 0.0
  %842 = vmatpush1.msra.mxu0 0.0
  %843 = vmatprep.subr.mxu0 0.0
  %844 = vmatpush1.msra.mxu0 0.0
  %845 = vmatprep.subr.mxu0 0.0
  %846 = vmatpush1.msra.mxu0 0.0
  %847 = vmatprep.subr.mxu0 0.0
  %848 = vmatpush1.msra.mxu0 0.0
  %849 = vmatprep.subr.mxu0 0.0
  %850 = vmatpush1.msra.mxu0 0.0
  %851 = vmatprep.subr.mxu0 0.0
  %852 = vmatpush1.msra.mxu0 0.0
  %853 = vmatprep.subr.mxu0 0.0
  %854 = vmatpush1.msra.mxu0 0.0
  %855 = vmatprep.subr.mxu0 0.0
  %856 = vmatpush1.msra.mxu0 0.0
  %857 = vmatprep.subr.mxu0 0.0
  %858 = vmatpush1.msra.mxu0 0.0
  %859 = vmatprep.subr.mxu0 0.0
  %860 = vmatpush1.msra.mxu0 0.0
  %861 = vmatprep.subr.mxu0 0.0
  %862 = vmatpush1.msra.mxu0 0.0
  %863 = vmatprep.subr.mxu0 0.0
  %864 = vmatpush1.msra.mxu0 0.0
  %865 = vmatprep.subr.mxu0 0.0
  %866 = vmatpush1.msra.mxu0 0.0
  %867 = vmatprep.subr.mxu0 0.0
  %868 = vmatpush1.msra.mxu0 0.0
  %869 = vmatprep.subr.mxu0 0.0
  %870 = vmatpush1.msra.mxu0 0.0
  %871 = vmatprep.subr.mxu0 0.0
  %872 = vmatpush1.msra.mxu0 0.0
  %873 = vmatprep.subr.mxu0 0.0
  %874 = vmatpush1.msra.mxu0 0.0
  %875 = vmatprep.subr.mxu0 0.0
  %876 = vmatpush1.msra.mxu0 0.0
  %877 = vmatprep.mubr.f32.mxu0 0.0
  %878 = vmatmul.mubr.f32.gmra.mrb[0].mxu0 %v811
  %v879 = vpop.f32.mrb[0].mxu0
  %v880 = vadd.f32 0.0, %v879
  %v881 = vpop.f32.mrb[0].mxu0
  %v882 = vadd.f32 0.0, %v881
  %883 = vdwg.mxu0
  %886 = vrot.lane.b32.xlu0 %v880, 32
  %v887 = vpop.permute.xlu0 %886
  %888 = vrot.lane.b32.xlu0 %v882, 32
  %v889 = vpop.permute.xlu0 %888
  %v890 = vsel %vm97, %v887, %v889
  %v892 = vsel %vm288, %v880, %v890
  %v893 = vadd.f32 %v892, %v277
  %v894 = vadd.f32 %v807, %v893
  %v895 = vxor.u32 %v894, 2147483648
  %v896 = vmul.f32 %v895, 1.442695
  %v897 = vpow.pop %v896
  %v898 = vadd.f32 %v897, 1.0
  %v899 = vrcp.pop %v898
  %v900 = vmul.f32 1.0, %v899
  %902 = vrot.lane.b32.xlu0 %v893, 64
  %v903 = vpop.permute.xlu0 %902
  %v905 = vmul.f32 %v900, %v903
  %907 = vrot.lane.b32.xlu0 %v905, 64
  %v908 = vpop.permute.xlu0 %907
  %v910 = vadd.f32 %v807, %v908
  %v911 = vtanh.pop %v910
  %v912 = vsub.f32 1.0, %v900
  %914 = vrot.lane.b32.xlu0 %v911, 96
  %v915 = vpop.permute.xlu0 %914
  %v917 = vmul.f32 %v912, %v915
  %v918 = vmul.f32 %v900, %v801
  %v919 = vadd.f32 %v917, %v918
  %vm920 = vcmp.eq.s32.totalorder %v287, 1
  %vm921 = vcmp.eq.s32.totalorder %v287, 2
  %vm922 = vmor %vm920, %vm921
  %v923 = vsel %vm922, %v919, %v801
  %v924 = vrot.slane %v267, 5
  %v926 = vsel %vm295, %v682, %v924
  %v927 = vsel %vm297, %v926, %v804
  %929 = vrot.lane.b32.xlu0 %v923, 96
  %v930 = vpop.permute.xlu0 %929
  %v931 = vsel %vm97, %v930, 0
  %933 = vmatprep.subr.mxu0 %v279
  %934 = vmatpush1.msra.mxu0 %v278
  %935 = vmatprep.subr.mxu0 %v281
  %936 = vmatpush1.msra.mxu0 %v280
  %937 = vmatprep.subr.mxu0 %v283
  %938 = vmatpush1.msra.mxu0 %v282
  %939 = vmatprep.subr.mxu0 %v285
  %940 = vmatpush1.msra.mxu0 %v284
  %941 = vmatprep.subr.mxu0 0.0
  %942 = vmatpush1.msra.mxu0 0.0
  %943 = vmatprep.subr.mxu0 0.0
  %944 = vmatpush1.msra.mxu0 0.0
  %945 = vmatprep.subr.mxu0 0.0
  %946 = vmatpush1.msra.mxu0 0.0
  %947 = vmatprep.subr.mxu0 0.0
  %948 = vmatpush1.msra.mxu0 0.0
  %949 = vmatprep.subr.mxu0 0.0
  %950 = vmatpush1.msra.mxu0 0.0
  %951 = vmatprep.subr.mxu0 0.0
  %952 = vmatpush1.msra.mxu0 0.0
  %953 = vmatprep.subr.mxu0 0.0
  %954 = vmatpush1.msra.mxu0 0.0
  %955 = vmatprep.subr.mxu0 0.0
  %956 = vmatpush1.msra.mxu0 0.0
  %957 = vmatprep.subr.mxu0 0.0
  %958 = vmatpush1.msra.mxu0 0.0
  %959 = vmatprep.subr.mxu0 0.0
  %960 = vmatpush1.msra.mxu0 0.0
  %961 = vmatprep.subr.mxu0 0.0
  %962 = vmatpush1.msra.mxu0 0.0
  %963 = vmatprep.subr.mxu0 0.0
  %964 = vmatpush1.msra.mxu0 0.0
  %965 = vmatprep.subr.mxu0 0.0
  %966 = vmatpush1.msra.mxu0 0.0
  %967 = vmatprep.subr.mxu0 0.0
  %968 = vmatpush1.msra.mxu0 0.0
  %969 = vmatprep.subr.mxu0 0.0
  %970 = vmatpush1.msra.mxu0 0.0
  %971 = vmatprep.subr.mxu0 0.0
  %972 = vmatpush1.msra.mxu0 0.0
  %973 = vmatprep.subr.mxu0 0.0
  %974 = vmatpush1.msra.mxu0 0.0
  %975 = vmatprep.subr.mxu0 0.0
  %976 = vmatpush1.msra.mxu0 0.0
  %977 = vmatprep.subr.mxu0 0.0
  %978 = vmatpush1.msra.mxu0 0.0
  %979 = vmatprep.subr.mxu0 0.0
  %980 = vmatpush1.msra.mxu0 0.0
  %981 = vmatprep.subr.mxu0 0.0
  %982 = vmatpush1.msra.mxu0 0.0
  %983 = vmatprep.subr.mxu0 0.0
  %984 = vmatpush1.msra.mxu0 0.0
  %985 = vmatprep.subr.mxu0 0.0
  %986 = vmatpush1.msra.mxu0 0.0
  %987 = vmatprep.subr.mxu0 0.0
  %988 = vmatpush1.msra.mxu0 0.0
  %989 = vmatprep.subr.mxu0 0.0
  %990 = vmatpush1.msra.mxu0 0.0
  %991 = vmatprep.subr.mxu0 0.0
  %992 = vmatpush1.msra.mxu0 0.0
  %993 = vmatprep.subr.mxu0 0.0
  %994 = vmatpush1.msra.mxu0 0.0
  %995 = vmatprep.subr.mxu0 0.0
  %996 = vmatpush1.msra.mxu0 0.0
  %997 = vmatprep.mubr.f32.mxu0 0.0
  %998 = vmatmul.mubr.f32.gmra.mrb[0].mxu0 %v931
  %v999 = vpop.f32.mrb[0].mxu0
  %v1000 = vadd.f32 0.0, %v999
  %v1001 = vpop.f32.mrb[0].mxu0
  %v1002 = vadd.f32 0.0, %v1001
  %1003 = vdwg.mxu0
  %1006 = vrot.lane.b32.xlu0 %v1000, 32
  %v1007 = vpop.permute.xlu0 %1006
  %1008 = vrot.lane.b32.xlu0 %v1002, 32
  %v1009 = vpop.permute.xlu0 %1008
  %v1010 = vsel %vm97, %v1007, %v1009
  %v1012 = vsel %vm288, %v1000, %v1010
  %v1013 = vadd.f32 %v1012, %v277
  %v1014 = vadd.f32 %v927, %v1013
  %v1015 = vxor.u32 %v1014, 2147483648
  %v1016 = vmul.f32 %v1015, 1.442695
  %v1017 = vpow.pop %v1016
  %v1018 = vadd.f32 %v1017, 1.0
  %v1019 = vrcp.pop %v1018
  %v1020 = vmul.f32 1.0, %v1019
  %1022 = vrot.lane.b32.xlu0 %v1013, 64
  %v1023 = vpop.permute.xlu0 %1022
  %v1025 = vmul.f32 %v1020, %v1023
  %1027 = vrot.lane.b32.xlu0 %v1025, 64
  %v1028 = vpop.permute.xlu0 %1027
  %v1030 = vadd.f32 %v927, %v1028
  %v1031 = vtanh.pop %v1030
  %v1032 = vsub.f32 1.0, %v1020
  %1034 = vrot.lane.b32.xlu0 %v1031, 96
  %v1035 = vpop.permute.xlu0 %1034
  %v1037 = vmul.f32 %v1032, %v1035
  %v1038 = vmul.f32 %v1020, %v923
  %v1039 = vadd.f32 %v1037, %v1038
  %v1040 = vsel %vm920, %v1039, %v923
  %v1041 = vrot.slane %v267, 6
  %v1043 = vsel %vm295, %v682, %v1041
  %v1044 = vsel %vm297, %v1043, %v804
  %1046 = vrot.lane.b32.xlu0 %v1040, 96
  %v1047 = vpop.permute.xlu0 %1046
  %v1048 = vsel %vm97, %v1047, 0
  %1050 = vmatprep.subr.mxu0 %v279
  %1051 = vmatpush1.msra.mxu0 %v278
  %1052 = vmatprep.subr.mxu0 %v281
  %1053 = vmatpush1.msra.mxu0 %v280
  %1054 = vmatprep.subr.mxu0 %v283
  %1055 = vmatpush1.msra.mxu0 %v282
  %1056 = vmatprep.subr.mxu0 %v285
  %1057 = vmatpush1.msra.mxu0 %v284
  %1058 = vmatprep.subr.mxu0 0.0
  %1059 = vmatpush1.msra.mxu0 0.0
  %1060 = vmatprep.subr.mxu0 0.0
  %1061 = vmatpush1.msra.mxu0 0.0
  %1062 = vmatprep.subr.mxu0 0.0
  %1063 = vmatpush1.msra.mxu0 0.0
  %1064 = vmatprep.subr.mxu0 0.0
  %1065 = vmatpush1.msra.mxu0 0.0
  %1066 = vmatprep.subr.mxu0 0.0
  %1067 = vmatpush1.msra.mxu0 0.0
  %1068 = vmatprep.subr.mxu0 0.0
  %1069 = vmatpush1.msra.mxu0 0.0
  %1070 = vmatprep.subr.mxu0 0.0
  %1071 = vmatpush1.msra.mxu0 0.0
  %1072 = vmatprep.subr.mxu0 0.0
  %1073 = vmatpush1.msra.mxu0 0.0
  %1074 = vmatprep.subr.mxu0 0.0
  %1075 = vmatpush1.msra.mxu0 0.0
  %1076 = vmatprep.subr.mxu0 0.0
  %1077 = vmatpush1.msra.mxu0 0.0
  %1078 = vmatprep.subr.mxu0 0.0
  %1079 = vmatpush1.msra.mxu0 0.0
  %1080 = vmatprep.subr.mxu0 0.0
  %1081 = vmatpush1.msra.mxu0 0.0
  %1082 = vmatprep.subr.mxu0 0.0
  %1083 = vmatpush1.msra.mxu0 0.0
  %1084 = vmatprep.subr.mxu0 0.0
  %1085 = vmatpush1.msra.mxu0 0.0
  %1086 = vmatprep.subr.mxu0 0.0
  %1087 = vmatpush1.msra.mxu0 0.0
  %1088 = vmatprep.subr.mxu0 0.0
  %1089 = vmatpush1.msra.mxu0 0.0
  %1090 = vmatprep.subr.mxu0 0.0
  %1091 = vmatpush1.msra.mxu0 0.0
  %1092 = vmatprep.subr.mxu0 0.0
  %1093 = vmatpush1.msra.mxu0 0.0
  %1094 = vmatprep.subr.mxu0 0.0
  %1095 = vmatpush1.msra.mxu0 0.0
  %1096 = vmatprep.subr.mxu0 0.0
  %1097 = vmatpush1.msra.mxu0 0.0
  %1098 = vmatprep.subr.mxu0 0.0
  %1099 = vmatpush1.msra.mxu0 0.0
  %1100 = vmatprep.subr.mxu0 0.0
  %1101 = vmatpush1.msra.mxu0 0.0
  %1102 = vmatprep.subr.mxu0 0.0
  %1103 = vmatpush1.msra.mxu0 0.0
  %1104 = vmatprep.subr.mxu0 0.0
  %1105 = vmatpush1.msra.mxu0 0.0
  %1106 = vmatprep.subr.mxu0 0.0
  %1107 = vmatpush1.msra.mxu0 0.0
  %1108 = vmatprep.subr.mxu0 0.0
  %1109 = vmatpush1.msra.mxu0 0.0
  %1110 = vmatprep.subr.mxu0 0.0
  %1111 = vmatpush1.msra.mxu0 0.0
  %1112 = vmatprep.subr.mxu0 0.0
  %1113 = vmatpush1.msra.mxu0 0.0
  %1114 = vmatprep.mubr.f32.mxu0 0.0
  %1115 = vmatmul.mubr.f32.gmra.mrb[0].mxu0 %v1048
  %v1116 = vpop.f32.mrb[0].mxu0
  %v1117 = vadd.f32 0.0, %v1116
  %v1118 = vpop.f32.mrb[0].mxu0
  %v1119 = vadd.f32 0.0, %v1118
  %1120 = vdwg.mxu0
  %1123 = vrot.lane.b32.xlu0 %v1117, 32
  %v1124 = vpop.permute.xlu0 %1123
  %1125 = vrot.lane.b32.xlu0 %v1119, 32
  %v1126 = vpop.permute.xlu0 %1125
  %v1127 = vsel %vm97, %v1124, %v1126
  %v1129 = vsel %vm288, %v1117, %v1127
  %v1130 = vadd.f32 %v1129, %v277
  %v1131 = vadd.f32 %v1044, %v1130
  %v1132 = vxor.u32 %v1131, 2147483648
  %v1133 = vmul.f32 %v1132, 1.442695
  %v1134 = vpow.pop %v1133
  %v1135 = vadd.f32 %v1134, 1.0
  %v1136 = vrcp.pop %v1135
  %v1137 = vmul.f32 1.0, %v1136
  %1139 = vrot.lane.b32.xlu0 %v1130, 64
  %v1140 = vpop.permute.xlu0 %1139
  %v1142 = vmul.f32 %v1137, %v1140
  %1144 = vrot.lane.b32.xlu0 %v1142, 64
  %v1145 = vpop.permute.xlu0 %1144
  %v1147 = vadd.f32 %v1044, %v1145
  %v1148 = vtanh.pop %v1147
  %v1149 = vsub.f32 1.0, %v1137
  %1151 = vrot.lane.b32.xlu0 %v1148, 96
  %v1152 = vpop.permute.xlu0 %1151
  %v1154 = vmul.f32 %v1149, %v1152
  %v1155 = vmul.f32 %v1137, %v1040
  %v1156 = vadd.f32 %v1154, %v1155
  %v1157 = vsel %vm920, %v1156, %v923
  %v1159 = vrot.slane %v170, 4
  %v1162 = vrot.slane %v269, 6
  %v1165 = vrot.slane %v275, 3
  %v1167 = vsel %vm295, %v1159, %v1162
  %v1168 = vsel %vm297, %v1167, %v1165
  %v1169 = vld [vmem:[%s10] sm:$0x7]
  %1171 = vrot.lane.b32.xlu0 %v1169, 96
  %v1172 = vpop.permute.xlu0 %1171
  %v1174 = vadd.f32 %v1044, %v1172
  %v1175 = vadd.f32 %v1168, %v1172
  %v1176 = vxor.u32 %v1174, 2147483648
  %v1177 = vxor.u32 %v1175, 2147483648
  %v1178 = vmul.f32 %v1176, 1.442695
  %v1179 = vpow.pop %v1178
  %v1180 = vmul.f32 %v1177, 1.442695
  %v1181 = vpow.pop %v1180
  %v1182 = vadd.f32 %v1179, 1.0
  %v1183 = vadd.f32 %v1181, 1.0
  %v1184 = vrcp.pop %v1182
  %v1185 = vmul.f32 1.0, %v1184
  %v1186 = vrcp.pop %v1183
  %v1187 = vmul.f32 1.0, %v1186
  %1188 = vrot.lane.b32.xlu0 %v1169, 32
  %v1189 = vpop.permute.xlu0 %1188
  %v1191 = vmul.f32 %v1185, %v1189
  %1193 = vrot.lane.b32.xlu0 %v1191, 64
  %v1194 = vpop.permute.xlu0 %1193
  %v1196 = vadd.f32 %v1168, %v1194
  %v1197 = vtanh.pop %v1196
  %v1198 = vsub.f32 1.0, %v1187
  %1200 = vrot.lane.b32.xlu0 %v1197, 96
  %v1201 = vpop.permute.xlu0 %1200
  %v1203 = vmul.f32 %v1198, %v1201
  %v1204 = vmul.f32 %v1187, 0.0
  %v1205 = vadd.f32 %v1203, %v1204
  %1207 = vrot.lane.b32.xlu0 %v1205, 32
  %v1208 = vpop.permute.xlu0 %1207
  %v1210 = vadd.f32 %v1157, %v1208
  %1212 = vrot.lane.b32.xlu0 %v1210, 96
  %v1213 = vpop.permute.xlu0 %1212
  %v1215 = vrot.slane %v1210, 7
  %v1217 = vrot.slane %v1210, 1
  %1218 = vrot.lane.b32.xlu0 %v1217, 32
  %v1219 = vpop.permute.xlu0 %1218
  %v1221 = vsel %vm97, %v1213, %v1215
  %vm1222 = vcmask 523264
  %v1223 = vsel %vm1222, %v1221, %v1219
  %v1224 = vld [vmem:[%s11] sm:$0xff]
  %v1225 = vld [vmem:[%s11 + $0x8] sm:$0xff]
  %v1226 = vld [vmem:[%s11 + $0x10] sm:$0xff]
  %v1227 = vld [vmem:[%s11 + $0x18] sm:$0xff]
  %v1228 = vld [vmem:[%s11 + $0x20] sm:$0xff]
  %v1229 = vld [vmem:[%s11 + $0x28] sm:$0xff]
  %v1230 = vld [vmem:[%s11 + $0x30] sm:$0xff]
  %v1231 = vld [vmem:[%s11 + $0x38] sm:$0xff]
  %v1232 = vld [vmem:[%s11 + $0x40] sm:$0xff]
  %v1233 = vld [vmem:[%s11 + $0x48] sm:$0xff]
  %v1234 = vld [vmem:[%s11 + $0x50] sm:$0xff]
  %v1235 = vld [vmem:[%s11 + $0x58] sm:$0xff]
  %v1236 = vld [vmem:[%s12] sm:$0x1]
  %v1238 = vrot.slane %v1223, 1
  %vm1239 = vcmask 785408
  %v1240 = vsel %vm1239, %v1238, 0
  %1242 = vmatprep.subr.mxu0 0.0
  %1243 = vmatpush1.msra.mxu0 %v1224
  %1244 = vmatprep.subr.mxu0 0.0
  %1245 = vmatpush1.msra.mxu0 %v1225
  %1246 = vmatprep.subr.mxu0 0.0
  %1247 = vmatpush1.msra.mxu0 %v1226
  %1248 = vmatprep.subr.mxu0 0.0
  %1249 = vmatpush1.msra.mxu0 %v1227
  %1250 = vmatprep.subr.mxu0 0.0
  %1251 = vmatpush1.msra.mxu0 %v1228
  %1252 = vmatprep.subr.mxu0 0.0
  %1253 = vmatpush1.msra.mxu0 %v1229
  %1254 = vmatprep.subr.mxu0 0.0
  %1255 = vmatpush1.msra.mxu0 %v1230
  %1256 = vmatprep.subr.mxu0 0.0
  %1257 = vmatpush1.msra.mxu0 %v1231
  %1258 = vmatprep.subr.mxu0 0.0
  %1259 = vmatpush1.msra.mxu0 %v1232
  %1260 = vmatprep.subr.mxu0 0.0
  %1261 = vmatpush1.msra.mxu0 %v1233
  %1262 = vmatprep.subr.mxu0 0.0
  %1263 = vmatpush1.msra.mxu0 %v1234
  %1264 = vmatprep.subr.mxu0 0.0
  %1265 = vmatpush1.msra.mxu0 %v1235
  %1266 = vmatprep.subr.mxu0 0.0
  %1267 = vmatpush1.msra.mxu0 0.0
  %1268 = vmatprep.subr.mxu0 0.0
  %1269 = vmatpush1.msra.mxu0 0.0
  %1270 = vmatprep.subr.mxu0 0.0
  %1271 = vmatpush1.msra.mxu0 0.0
  %1272 = vmatprep.subr.mxu0 0.0
  %1273 = vmatpush1.msra.mxu0 0.0
  %1274 = vmatprep.subr.mxu0 0.0
  %1275 = vmatpush1.msra.mxu0 0.0
  %1276 = vmatprep.subr.mxu0 0.0
  %1277 = vmatpush1.msra.mxu0 0.0
  %1278 = vmatprep.subr.mxu0 0.0
  %1279 = vmatpush1.msra.mxu0 0.0
  %1280 = vmatprep.subr.mxu0 0.0
  %1281 = vmatpush1.msra.mxu0 0.0
  %1282 = vmatprep.subr.mxu0 0.0
  %1283 = vmatpush1.msra.mxu0 0.0
  %1284 = vmatprep.subr.mxu0 0.0
  %1285 = vmatpush1.msra.mxu0 0.0
  %1286 = vmatprep.subr.mxu0 0.0
  %1287 = vmatpush1.msra.mxu0 0.0
  %1288 = vmatprep.subr.mxu0 0.0
  %1289 = vmatpush1.msra.mxu0 0.0
  %1290 = vmatprep.subr.mxu0 0.0
  %1291 = vmatpush1.msra.mxu0 0.0
  %1292 = vmatprep.subr.mxu0 0.0
  %1293 = vmatpush1.msra.mxu0 0.0
  %1294 = vmatprep.subr.mxu0 0.0
  %1295 = vmatpush1.msra.mxu0 0.0
  %1296 = vmatprep.subr.mxu0 0.0
  %1297 = vmatpush1.msra.mxu0 0.0
  %1298 = vmatprep.subr.mxu0 0.0
  %1299 = vmatpush1.msra.mxu0 0.0
  %1300 = vmatprep.subr.mxu0 0.0
  %1301 = vmatpush1.msra.mxu0 0.0
  %1302 = vmatprep.subr.mxu0 0.0
  %1303 = vmatpush1.msra.mxu0 0.0
  %1304 = vmatprep.subr.mxu0 0.0
  %1305 = vmatpush1.msra.mxu0 0.0
  %1306 = vmatprep.mubr.f32.mxu0 0.0
  %1307 = vmatmul.mubr.f32.gmra.mrb[0].mxu0 %v1240
  %v1308 = vpop.f32.mrb[0].mxu0
  %v1309 = vadd.f32 %v1236, %v1308
  %v1310 = vpop.f32.mrb[0].mxu0
  %1311 = vdwg.mxu0
  %v1312 = vld [vmem:[%s3] sm:$0x1]
  %v1313 = vmul.f32 %v1309, 0.5
  %v1314 = vmul.f32 %v1313, 1.442695
  %v1315 = vpow.pop %v1314
  %v1318 = vunpack.c.l.s4 1966171168
  %v1319 = vunpack.c.0.s8 %v1318
  %v1320 = vlaneseq
  %v1321 = vshrl.u32 %v1320, 7
  %v1322 = vsub.s32 %v1319, %v1321
  %v1323 = vrot.slane %v1315, %v1322
  %v1325 = vunpack.c.l.s4 1966171168
  %v1326 = vunpack.c.0.s8 %v1325
  %v1327 = vlaneseq
  %v1328 = vshrl.u32 %v1327, 7
  %v1329 = vsub.s32 %v1326, %v1328
  %v1330 = vrot.slane %v1323, %v1329
  %1331 = vrot.lane.b32.xlu0 %v1330, 112
  %v1332 = vpop.permute.xlu0 %1331
  %v1334 = vmul.f32 %v1312, %v1332
  %v1335 = vadd.f32 %v1309, %v1334
  %1336 = vst [vmem:[%s23] sm:$0xff] 0.0
  %vm1337 = vcmask 253952
  %1338 = vst.msk [vmem:[%s23] sm:$0x1] %vm1337, %v1309
  %vm1339 = vcmask 122880
  %1340 = vst.msk [vmem:[%s23 + $0x1] sm:$0x1] %vm1339, %v1335
  %1341 = vrot.lane.b32.xlu0 %v1210, 112
  %v1342 = vpop.permute.xlu0 %1341
  %v1344 = vrot.slane %v1210, 2
  %1345 = vrot.lane.b32.xlu0 %v1344, 16
  %v1346 = vpop.permute.xlu0 %1345
  %vm1348 = vcmask 130048
  %v1349 = vsel %vm1348, %v1335, %v1342
  %vm1350 = vcmask 392192
  %v1351 = vsel %vm1350, %v1349, %v1346
  %v1352 = vld [vmem:[%s13] sm:$0xff]
  %v1353 = vld [vmem:[%s13 + $0x8] sm:$0xff]
  %v1354 = vld [vmem:[%s13 + $0x10] sm:$0xff]
  %v1355 = vld [vmem:[%s13 + $0x18] sm:$0xff]
  %v1356 = vld [vmem:[%s13 + $0x20] sm:$0xff]
  %v1357 = vld [vmem:[%s13 + $0x28] sm:$0xff]
  %v1358 = vld [vmem:[%s13 + $0x30] sm:$0xff]
  %v1359 = vld [vmem:[%s13 + $0x38] sm:$0xff]
  %v1360 = vld [vmem:[%s13 + $0x40] sm:$0xff]
  %v1361 = vld [vmem:[%s13 + $0x48] sm:$0xff]
  %v1362 = vld [vmem:[%s14] sm:$0x1]
  %vm1363 = vcmask 654336
  %v1365 = vsel %vm1363, %v1351, 0
  %1367 = vmatprep.subr.mxu0 0.0
  %1368 = vmatpush1.msra.mxu0 %v1352
  %1369 = vmatprep.subr.mxu0 0.0
  %1370 = vmatpush1.msra.mxu0 %v1353
  %1371 = vmatprep.subr.mxu0 0.0
  %1372 = vmatpush1.msra.mxu0 %v1354
  %1373 = vmatprep.subr.mxu0 0.0
  %1374 = vmatpush1.msra.mxu0 %v1355
  %1375 = vmatprep.subr.mxu0 0.0
  %1376 = vmatpush1.msra.mxu0 %v1356
  %1377 = vmatprep.subr.mxu0 0.0
  %1378 = vmatpush1.msra.mxu0 %v1357
  %1379 = vmatprep.subr.mxu0 0.0
  %1380 = vmatpush1.msra.mxu0 %v1358
  %1381 = vmatprep.subr.mxu0 0.0
  %1382 = vmatpush1.msra.mxu0 %v1359
  %1383 = vmatprep.subr.mxu0 0.0
  %1384 = vmatpush1.msra.mxu0 %v1360
  %1385 = vmatprep.subr.mxu0 0.0
  %1386 = vmatpush1.msra.mxu0 %v1361
  %1387 = vmatprep.subr.mxu0 0.0
  %1388 = vmatpush1.msra.mxu0 0.0
  %1389 = vmatprep.subr.mxu0 0.0
  %1390 = vmatpush1.msra.mxu0 0.0
  %1391 = vmatprep.subr.mxu0 0.0
  %1392 = vmatpush1.msra.mxu0 0.0
  %1393 = vmatprep.subr.mxu0 0.0
  %1394 = vmatpush1.msra.mxu0 0.0
  %1395 = vmatprep.subr.mxu0 0.0
  %1396 = vmatpush1.msra.mxu0 0.0
  %1397 = vmatprep.subr.mxu0 0.0
  %1398 = vmatpush1.msra.mxu0 0.0
  %1399 = vmatprep.subr.mxu0 0.0
  %1400 = vmatpush1.msra.mxu0 0.0
  %1401 = vmatprep.subr.mxu0 0.0
  %1402 = vmatpush1.msra.mxu0 0.0
  %1403 = vmatprep.subr.mxu0 0.0
  %1404 = vmatpush1.msra.mxu0 0.0
  %1405 = vmatprep.subr.mxu0 0.0
  %1406 = vmatpush1.msra.mxu0 0.0
  %1407 = vmatprep.subr.mxu0 0.0
  %1408 = vmatpush1.msra.mxu0 0.0
  %1409 = vmatprep.subr.mxu0 0.0
  %1410 = vmatpush1.msra.mxu0 0.0
  %1411 = vmatprep.subr.mxu0 0.0
  %1412 = vmatpush1.msra.mxu0 0.0
  %1413 = vmatprep.subr.mxu0 0.0
  %1414 = vmatpush1.msra.mxu0 0.0
  %1415 = vmatprep.subr.mxu0 0.0
  %1416 = vmatpush1.msra.mxu0 0.0
  %1417 = vmatprep.subr.mxu0 0.0
  %1418 = vmatpush1.msra.mxu0 0.0
  %1419 = vmatprep.subr.mxu0 0.0
  %1420 = vmatpush1.msra.mxu0 0.0
  %1421 = vmatprep.subr.mxu0 0.0
  %1422 = vmatpush1.msra.mxu0 0.0
  %1423 = vmatprep.subr.mxu0 0.0
  %1424 = vmatpush1.msra.mxu0 0.0
  %1425 = vmatprep.subr.mxu0 0.0
  %1426 = vmatpush1.msra.mxu0 0.0
  %1427 = vmatprep.subr.mxu0 0.0
  %1428 = vmatpush1.msra.mxu0 0.0
  %1429 = vmatprep.subr.mxu0 0.0
  %1430 = vmatpush1.msra.mxu0 0.0
  %1431 = vmatprep.mubr.f32.mxu0 0.0
  %1432 = vmatmul.mubr.f32.gmra.mrb[0].mxu0 %v1365
  %v1433 = vpop.f32.mrb[0].mxu0
  %v1434 = vadd.f32 %v1362, %v1433
  %v1435 = vpop.f32.mrb[0].mxu0
  %1436 = vdwg.mxu0
  %1438 = vrot.lane.b32.xlu0 %v1434, 32
  %v1439 = vpop.permute.xlu0 %1438
  %v1441 = vsel %vm97, %v1434, %v1439
  %v1442 = vld [vmem:[%s2] sm:$0xff]
  %v1443 = vld [vmem:[%s15] sm:$0xff]
  %v1444 = vld [vmem:[%s15 + $0x8] sm:$0xff]
  %v1445 = vld [vmem:[%s15 + $0x10] sm:$0xff]
  %v1446 = vld [vmem:[%s15 + $0x18] sm:$0xff]
  %v1447 = vld [vmem:[%s15 + $0x20] sm:$0xff]
  %v1448 = vld [vmem:[%s15 + $0x28] sm:$0xff]
  %v1449 = vld [vmem:[%s15 + $0x30] sm:$0xff]
  %v1450 = vld [vmem:[%s15 + $0x38] sm:$0xff]
  %v1452 = vsel %vm97, %v1442, 0
  %1454 = vmatprep.subr.mxu0 %v1444
  %1455 = vmatpush1.msra.mxu0 %v1443
  %1456 = vmatprep.subr.mxu0 %v1446
  %1457 = vmatpush1.msra.mxu0 %v1445
  %1458 = vmatprep.subr.mxu0 %v1448
  %1459 = vmatpush1.msra.mxu0 %v1447
  %1460 = vmatprep.subr.mxu0 %v1450
  %1461 = vmatpush1.msra.mxu0 %v1449
  %1462 = vmatprep.subr.mxu0 0.0
  %1463 = vmatpush1.msra.mxu0 0.0
  %1464 = vmatprep.subr.mxu0 0.0
  %1465 = vmatpush1.msra.mxu0 0.0
  %1466 = vmatprep.subr.mxu0 0.0
  %1467 = vmatpush1.msra.mxu0 0.0
  %1468 = vmatprep.subr.mxu0 0.0
  %1469 = vmatpush1.msra.mxu0 0.0
  %1470 = vmatprep.subr.mxu0 0.0
  %1471 = vmatpush1.msra.mxu0 0.0
  %1472 = vmatprep.subr.mxu0 0.0
  %1473 = vmatpush1.msra.mxu0 0.0
  %1474 = vmatprep.subr.mxu0 0.0
  %1475 = vmatpush1.msra.mxu0 0.0
  %1476 = vmatprep.subr.mxu0 0.0
  %1477 = vmatpush1.msra.mxu0 0.0
  %1478 = vmatprep.subr.mxu0 0.0
  %1479 = vmatpush1.msra.mxu0 0.0
  %1480 = vmatprep.subr.mxu0 0.0
  %1481 = vmatpush1.msra.mxu0 0.0
  %1482 = vmatprep.subr.mxu0 0.0
  %1483 = vmatpush1.msra.mxu0 0.0
  %1484 = vmatprep.subr.mxu0 0.0
  %1485 = vmatpush1.msra.mxu0 0.0
  %1486 = vmatprep.subr.mxu0 0.0
  %1487 = vmatpush1.msra.mxu0 0.0
  %1488 = vmatprep.subr.mxu0 0.0
  %1489 = vmatpush1.msra.mxu0 0.0
  %1490 = vmatprep.subr.mxu0 0.0
  %1491 = vmatpush1.msra.mxu0 0.0
  %1492 = vmatprep.subr.mxu0 0.0
  %1493 = vmatpush1.msra.mxu0 0.0
  %1494 = vmatprep.subr.mxu0 0.0
  %1495 = vmatpush1.msra.mxu0 0.0
  %1496 = vmatprep.subr.mxu0 0.0
  %1497 = vmatpush1.msra.mxu0 0.0
  %1498 = vmatprep.subr.mxu0 0.0
  %1499 = vmatpush1.msra.mxu0 0.0
  %1500 = vmatprep.subr.mxu0 0.0
  %1501 = vmatpush1.msra.mxu0 0.0
  %1502 = vmatprep.subr.mxu0 0.0
  %1503 = vmatpush1.msra.mxu0 0.0
  %1504 = vmatprep.subr.mxu0 0.0
  %1505 = vmatpush1.msra.mxu0 0.0
  %1506 = vmatprep.subr.mxu0 0.0
  %1507 = vmatpush1.msra.mxu0 0.0
  %1508 = vmatprep.subr.mxu0 0.0
  %1509 = vmatpush1.msra.mxu0 0.0
  %1510 = vmatprep.subr.mxu0 0.0
  %1511 = vmatpush1.msra.mxu0 0.0
  %1512 = vmatprep.subr.mxu0 0.0
  %1513 = vmatpush1.msra.mxu0 0.0
  %1514 = vmatprep.subr.mxu0 0.0
  %1515 = vmatpush1.msra.mxu0 0.0
  %1516 = vmatprep.subr.mxu0 0.0
  %1517 = vmatpush1.msra.mxu0 0.0
  %1518 = vmatprep.mubr.f32.mxu0 0.0
  %1519 = vmatmul.mubr.f32.gmra.mrb[0].mxu0 %v1452
  %v1520 = vpop.f32.mrb[0].mxu0
  %v1521 = vadd.f32 0.0, %v1520
  %v1522 = vpop.f32.mrb[0].mxu0
  %v1523 = vadd.f32 0.0, %v1522
  %1524 = vdwg.mxu0
  %v1525 = vld [vmem:[%s16] sm:$0xff]
  %v1526 = vld [vmem:[%s16 + $0x8] sm:$0xff]
  %v1527 = vld [vmem:[%s16 + $0x10] sm:$0xff]
  %v1528 = vld [vmem:[%s16 + $0x18] sm:$0xff]
  %v1529 = vld [vmem:[%s16 + $0x20] sm:$0xff]
  %v1530 = vld [vmem:[%s16 + $0x28] sm:$0xff]
  %v1531 = vld [vmem:[%s16 + $0x30] sm:$0xff]
  %v1532 = vld [vmem:[%s16 + $0x38] sm:$0xff]
  %v1533 = vld [vmem:[%s16 + $0x40] sm:$0xff]
  %v1534 = vld [vmem:[%s16 + $0x48] sm:$0xff]
  %v1535 = vld [vmem:[%s16 + $0x50] sm:$0xff]
  %v1536 = vld [vmem:[%s16 + $0x58] sm:$0xff]
  %v1537 = vld [vmem:[%s16 + $0x60] sm:$0xff]
  %v1538 = vld [vmem:[%s16 + $0x68] sm:$0xff]
  %v1539 = vld [vmem:[%s16 + $0x70] sm:$0xff]
  %v1540 = vld [vmem:[%s16 + $0x78] sm:$0xff]
  %v1541 = vld [vmem:[%s16 + $0x80] sm:$0xff]
  %v1542 = vld [vmem:[%s16 + $0x88] sm:$0xff]
  %v1543 = vld [vmem:[%s16 + $0x90] sm:$0xff]
  %v1544 = vld [vmem:[%s16 + $0x98] sm:$0xff]
  %v1545 = vld [vmem:[%s17] sm:$0x3]
  %v1547 = vlaneseq
  %v1548 = vshrl.u32 %v1547, 7
  %v1549 = vsub.s32 0, %v1548
  %v1550 = vrot.slane %v1545, %v1549
  %v1551 = vlaneseq
  %v1552 = vshrl.u32 %v1551, 7
  %v1553 = vsub.s32 1, %v1552
  %v1554 = vrot.slane %v1545, %v1553
  %1557 = vmatprep.subr.mxu0 %v1526
  %1558 = vmatpush1.msra.mxu0 %v1525
  %1559 = vmatprep.subr.mxu0 %v1528
  %1560 = vmatpush1.msra.mxu0 %v1527
  %1561 = vmatprep.subr.mxu0 %v1530
  %1562 = vmatpush1.msra.mxu0 %v1529
  %1563 = vmatprep.subr.mxu0 %v1532
  %1564 = vmatpush1.msra.mxu0 %v1531
  %1565 = vmatprep.subr.mxu0 %v1534
  %1566 = vmatpush1.msra.mxu0 %v1533
  %1567 = vmatprep.subr.mxu0 %v1536
  %1568 = vmatpush1.msra.mxu0 %v1535
  %1569 = vmatprep.subr.mxu0 %v1538
  %1570 = vmatpush1.msra.mxu0 %v1537
  %1571 = vmatprep.subr.mxu0 %v1540
  %1572 = vmatpush1.msra.mxu0 %v1539
  %1573 = vmatprep.subr.mxu0 %v1542
  %1574 = vmatpush1.msra.mxu0 %v1541
  %1575 = vmatprep.subr.mxu0 %v1544
  %1576 = vmatpush1.msra.mxu0 %v1543
  %1577 = vmatprep.subr.mxu0 0.0
  %1578 = vmatpush1.msra.mxu0 0.0
  %1579 = vmatprep.subr.mxu0 0.0
  %1580 = vmatpush1.msra.mxu0 0.0
  %1581 = vmatprep.subr.mxu0 0.0
  %1582 = vmatpush1.msra.mxu0 0.0
  %1583 = vmatprep.subr.mxu0 0.0
  %1584 = vmatpush1.msra.mxu0 0.0
  %1585 = vmatprep.subr.mxu0 0.0
  %1586 = vmatpush1.msra.mxu0 0.0
  %1587 = vmatprep.subr.mxu0 0.0
  %1588 = vmatpush1.msra.mxu0 0.0
  %1589 = vmatprep.subr.mxu0 0.0
  %1590 = vmatpush1.msra.mxu0 0.0
  %1591 = vmatprep.subr.mxu0 0.0
  %1592 = vmatpush1.msra.mxu0 0.0
  %1593 = vmatprep.subr.mxu0 0.0
  %1594 = vmatpush1.msra.mxu0 0.0
  %1595 = vmatprep.subr.mxu0 0.0
  %1596 = vmatpush1.msra.mxu0 0.0
  %1597 = vmatprep.subr.mxu0 0.0
  %1598 = vmatpush1.msra.mxu0 0.0
  %1599 = vmatprep.subr.mxu0 0.0
  %1600 = vmatpush1.msra.mxu0 0.0
  %1601 = vmatprep.subr.mxu0 0.0
  %1602 = vmatpush1.msra.mxu0 0.0
  %1603 = vmatprep.subr.mxu0 0.0
  %1604 = vmatpush1.msra.mxu0 0.0
  %1605 = vmatprep.subr.mxu0 0.0
  %1606 = vmatpush1.msra.mxu0 0.0
  %1607 = vmatprep.subr.mxu0 0.0
  %1608 = vmatpush1.msra.mxu0 0.0
  %1609 = vmatprep.subr.mxu0 0.0
  %1610 = vmatpush1.msra.mxu0 0.0
  %1611 = vmatprep.subr.mxu0 0.0
  %1612 = vmatpush1.msra.mxu0 0.0
  %1613 = vmatprep.subr.mxu0 0.0
  %1614 = vmatpush1.msra.mxu0 0.0
  %1615 = vmatprep.subr.mxu0 0.0
  %1616 = vmatpush1.msra.mxu0 0.0
  %1617 = vmatprep.subr.mxu0 0.0
  %1618 = vmatpush1.msra.mxu0 0.0
  %1619 = vmatprep.subr.mxu0 0.0
  %1620 = vmatpush1.msra.mxu0 0.0
  %1621 = vmatprep.mubr.f32.mxu0 0.0
  %1622 = vmatmul.mubr.f32.gmra.mrb[0].mxu0 %v1365
  %v1623 = vpop.f32.mrb[0].mxu0
  %v1624 = vadd.f32 %v1550, %v1623
  %v1625 = vpop.f32.mrb[0].mxu0
  %v1626 = vadd.f32 %v1554, %v1625
  %1627 = vdwg.mxu0
  %v1628 = vld [vmem:[%s21] sm:$0xff]
  %v1629 = vld [vmem:[%s21 + $0x8] sm:$0xff]
  %v1630 = vld [vmem:[%s21 + $0x10] sm:$0xff]
  %v1631 = vld [vmem:[%s21 + $0x18] sm:$0xff]
  %v1632 = vld [vmem:[%s21 + $0x20] sm:$0xff]
  %v1633 = vld [vmem:[%s21 + $0x28] sm:$0xff]
  %v1634 = vld [vmem:[%s21 + $0x30] sm:$0xff]
  %v1635 = vld [vmem:[%s21 + $0x38] sm:$0xff]
  %v1636 = vld [vmem:[%s21 + $0x40] sm:$0xff]
  %v1637 = vld [vmem:[%s21 + $0x48] sm:$0xff]
  %v1638 = vld [vmem:[%s22] sm:$0x1]
  %1639 = vmatprep.subr.mxu0 0.0
  %1640 = vmatpush1.msra.mxu0 %v1628
  %1641 = vmatprep.subr.mxu0 0.0
  %1642 = vmatpush1.msra.mxu0 %v1629
  %1643 = vmatprep.subr.mxu0 0.0
  %1644 = vmatpush1.msra.mxu0 %v1630
  %1645 = vmatprep.subr.mxu0 0.0
  %1646 = vmatpush1.msra.mxu0 %v1631
  %1647 = vmatprep.subr.mxu0 0.0
  %1648 = vmatpush1.msra.mxu0 %v1632
  %1649 = vmatprep.subr.mxu0 0.0
  %1650 = vmatpush1.msra.mxu0 %v1633
  %1651 = vmatprep.subr.mxu0 0.0
  %1652 = vmatpush1.msra.mxu0 %v1634
  %1653 = vmatprep.subr.mxu0 0.0
  %1654 = vmatpush1.msra.mxu0 %v1635
  %1655 = vmatprep.subr.mxu0 0.0
  %1656 = vmatpush1.msra.mxu0 %v1636
  %1657 = vmatprep.subr.mxu0 0.0
  %1658 = vmatpush1.msra.mxu0 %v1637
  %1659 = vmatprep.subr.mxu0 0.0
  %1660 = vmatpush1.msra.mxu0 0.0
  %1661 = vmatprep.subr.mxu0 0.0
  %1662 = vmatpush1.msra.mxu0 0.0
  %1663 = vmatprep.subr.mxu0 0.0
  %1664 = vmatpush1.msra.mxu0 0.0
  %1665 = vmatprep.subr.mxu0 0.0
  %1666 = vmatpush1.msra.mxu0 0.0
  %1667 = vmatprep.subr.mxu0 0.0
  %1668 = vmatpush1.msra.mxu0 0.0
  %1669 = vmatprep.subr.mxu0 0.0
  %1670 = vmatpush1.msra.mxu0 0.0
  %1671 = vmatprep.subr.mxu0 0.0
  %1672 = vmatpush1.msra.mxu0 0.0
  %1673 = vmatprep.subr.mxu0 0.0
  %1674 = vmatpush1.msra.mxu0 0.0
  %1675 = vmatprep.subr.mxu0 0.0
  %1676 = vmatpush1.msra.mxu0 0.0
  %1677 = vmatprep.subr.mxu0 0.0
  %1678 = vmatpush1.msra.mxu0 0.0
  %1679 = vmatprep.subr.mxu0 0.0
  %1680 = vmatpush1.msra.mxu0 0.0
  %1681 = vmatprep.subr.mxu0 0.0
  %1682 = vmatpush1.msra.mxu0 0.0
  %1683 = vmatprep.subr.mxu0 0.0
  %1684 = vmatpush1.msra.mxu0 0.0
  %1685 = vmatprep.subr.mxu0 0.0
  %1686 = vmatpush1.msra.mxu0 0.0
  %1687 = vmatprep.subr.mxu0 0.0
  %1688 = vmatpush1.msra.mxu0 0.0
  %1689 = vmatprep.subr.mxu0 0.0
  %1690 = vmatpush1.msra.mxu0 0.0
  %1691 = vmatprep.subr.mxu0 0.0
  %1692 = vmatpush1.msra.mxu0 0.0
  %1693 = vmatprep.subr.mxu0 0.0
  %1694 = vmatpush1.msra.mxu0 0.0
  %1695 = vmatprep.subr.mxu0 0.0
  %1696 = vmatpush1.msra.mxu0 0.0
  %1697 = vmatprep.subr.mxu0 0.0
  %1698 = vmatpush1.msra.mxu0 0.0
  %1699 = vmatprep.subr.mxu0 0.0
  %1700 = vmatpush1.msra.mxu0 0.0
  %1701 = vmatprep.subr.mxu0 0.0
  %1702 = vmatpush1.msra.mxu0 0.0
  %1703 = vmatprep.mubr.f32.mxu0 0.0
  %1704 = vmatmul.mubr.f32.gmra.mrb[0].mxu0 %v1365
  %v1705 = vpop.f32.mrb[0].mxu0
  %v1706 = vadd.f32 %v1638, %v1705
  %v1707 = vpop.f32.mrb[0].mxu0
  %1708 = vdwg.mxu0
  %v1709 = vld [vmem:[%s18] sm:$0xff]
  %v1710 = vld [vmem:[%s18 + $0x8] sm:$0xff]
  %v1711 = vld [vmem:[%s18 + $0x10] sm:$0xff]
  %v1712 = vld [vmem:[%s18 + $0x18] sm:$0xff]
  %v1713 = vld [vmem:[%s18 + $0x20] sm:$0xff]
  %v1714 = vld [vmem:[%s18 + $0x28] sm:$0xff]
  %v1715 = vld [vmem:[%s18 + $0x30] sm:$0xff]
  %v1716 = vld [vmem:[%s18 + $0x38] sm:$0xff]
  %v1717 = vld [vmem:[%s18 + $0x40] sm:$0xff]
  %v1718 = vld [vmem:[%s18 + $0x48] sm:$0xff]
  %v1719 = vld [vmem:[%s18 + $0x50] sm:$0xff]
  %v1720 = vld [vmem:[%s18 + $0x58] sm:$0xff]
  %v1721 = vld [vmem:[%s18 + $0x60] sm:$0xff]
  %v1722 = vld [vmem:[%s18 + $0x68] sm:$0xff]
  %v1723 = vld [vmem:[%s18 + $0x70] sm:$0xff]
  %v1724 = vld [vmem:[%s18 + $0x78] sm:$0xff]
  %v1725 = vld [vmem:[%s19] sm:$0x3]
  %v1728 = vrot.slane %v1624, 7
  %v1729 = vrot.slane %v1626, 7
  %v1732 = vadd.f32 %v1521, %v1728
  %v1733 = vadd.f32 %v1523, %v1729
  %v1735 = vlaneseq
  %v1736 = vshrl.u32 %v1735, 7
  %v1737 = vsub.s32 0, %v1736
  %v1738 = vrot.slane %v1725, %v1737
  %v1739 = vlaneseq
  %v1740 = vshrl.u32 %v1739, 7
  %v1741 = vsub.s32 1, %v1740
  %v1742 = vrot.slane %v1725, %v1741
  %v1746 = vsel %vm1222, %v1441, 0
  %1748 = vmatprep.subr.mxu0 %v1710
  %1749 = vmatpush1.msra.mxu0 %v1709
  %1750 = vmatprep.subr.mxu0 %v1712
  %1751 = vmatpush1.msra.mxu0 %v1711
  %1752 = vmatprep.subr.mxu0 %v1714
  %1753 = vmatpush1.msra.mxu0 %v1713
  %1754 = vmatprep.subr.mxu0 %v1716
  %1755 = vmatpush1.msra.mxu0 %v1715
  %1756 = vmatprep.subr.mxu0 %v1718
  %1757 = vmatpush1.msra.mxu0 %v1717
  %1758 = vmatprep.subr.mxu0 %v1720
  %1759 = vmatpush1.msra.mxu0 %v1719
  %1760 = vmatprep.subr.mxu0 %v1722
  %1761 = vmatpush1.msra.mxu0 %v1721
  %1762 = vmatprep.subr.mxu0 %v1724
  %1763 = vmatpush1.msra.mxu0 %v1723
  %1764 = vmatprep.subr.mxu0 0.0
  %1765 = vmatpush1.msra.mxu0 0.0
  %1766 = vmatprep.subr.mxu0 0.0
  %1767 = vmatpush1.msra.mxu0 0.0
  %1768 = vmatprep.subr.mxu0 0.0
  %1769 = vmatpush1.msra.mxu0 0.0
  %1770 = vmatprep.subr.mxu0 0.0
  %1771 = vmatpush1.msra.mxu0 0.0
  %1772 = vmatprep.subr.mxu0 0.0
  %1773 = vmatpush1.msra.mxu0 0.0
  %1774 = vmatprep.subr.mxu0 0.0
  %1775 = vmatpush1.msra.mxu0 0.0
  %1776 = vmatprep.subr.mxu0 0.0
  %1777 = vmatpush1.msra.mxu0 0.0
  %1778 = vmatprep.subr.mxu0 0.0
  %1779 = vmatpush1.msra.mxu0 0.0
  %1780 = vmatprep.subr.mxu0 0.0
  %1781 = vmatpush1.msra.mxu0 0.0
  %1782 = vmatprep.subr.mxu0 0.0
  %1783 = vmatpush1.msra.mxu0 0.0
  %1784 = vmatprep.subr.mxu0 0.0
  %1785 = vmatpush1.msra.mxu0 0.0
  %1786 = vmatprep.subr.mxu0 0.0
  %1787 = vmatpush1.msra.mxu0 0.0
  %1788 = vmatprep.subr.mxu0 0.0
  %1789 = vmatpush1.msra.mxu0 0.0
  %1790 = vmatprep.subr.mxu0 0.0
  %1791 = vmatpush1.msra.mxu0 0.0
  %1792 = vmatprep.subr.mxu0 0.0
  %1793 = vmatpush1.msra.mxu0 0.0
  %1794 = vmatprep.subr.mxu0 0.0
  %1795 = vmatpush1.msra.mxu0 0.0
  %1796 = vmatprep.subr.mxu0 0.0
  %1797 = vmatpush1.msra.mxu0 0.0
  %1798 = vmatprep.subr.mxu0 0.0
  %1799 = vmatpush1.msra.mxu0 0.0
  %1800 = vmatprep.subr.mxu0 0.0
  %1801 = vmatpush1.msra.mxu0 0.0
  %1802 = vmatprep.subr.mxu0 0.0
  %1803 = vmatpush1.msra.mxu0 0.0
  %1804 = vmatprep.subr.mxu0 0.0
  %1805 = vmatpush1.msra.mxu0 0.0
  %1806 = vmatprep.subr.mxu0 0.0
  %1807 = vmatpush1.msra.mxu0 0.0
  %1808 = vmatprep.subr.mxu0 0.0
  %1809 = vmatpush1.msra.mxu0 0.0
  %1810 = vmatprep.subr.mxu0 0.0
  %1811 = vmatpush1.msra.mxu0 0.0
  %1812 = vmatprep.mubr.f32.mxu0 0.0
  %1813 = vmatmul.mubr.f32.gmra.mrb[0].mxu0 %v1746
  %v1814 = vpop.f32.mrb[0].mxu0
  %v1815 = vadd.f32 %v1738, %v1814
  %v1816 = vpop.f32.mrb[0].mxu0
  %v1817 = vadd.f32 %v1742, %v1816
  %1818 = vdwg.mxu0
  %v1820 = vrot.slane %v1815, 7
  %v1822 = vadd.f32 %v1732, %v1820
  %v1823 = vxor.u32 %v1822, 2147483648
  %v1824 = vmul.f32 %v1823, 1.442695
  %v1825 = vpow.pop %v1824
  %v1826 = vadd.f32 %v1825, 1.0
  %v1827 = vrcp.pop %v1826
  %v1828 = vmul.f32 1.0, %v1827
  %v1830 = vrot.slane %v1817, 7
  %v1832 = vmul.f32 %v1828, %v1830
  %v1833 = vadd.f32 %v1733, %v1832
  %v1834 = vtanh.pop %v1833
  %v1835 = vsub.f32 1.0, %v1828
  %1837 = vrot.lane.b32.xlu0 %v1834, 64
  %v1838 = vpop.permute.xlu0 %1837
  %v1840 = vmul.f32 %v1835, %v1838
  %v1841 = vrot.slane %v1441, 7
  %1842 = vrot.lane.b32.xlu0 %v1841, 64
  %v1843 = vpop.permute.xlu0 %1842
  %v1845 = vmul.f32 %v1828, %v1843
  %v1846 = vadd.f32 %v1840, %v1845
  %1848 = vrot.lane.b32.xlu0 %v1846, 64
  %v1849 = vpop.permute.xlu0 %1848
  %vm1851 = vcmask 517121
  %1852 = vst.msk [vmem:[#allocation2 - $0x1] sm:$0x2] %vm1851, %v1849
  %v1853 = vrot.slane %v1624, 6
  %v1854 = vrot.slane %v1626, 6
  %v1857 = vadd.f32 %v1521, %v1853
  %v1858 = vadd.f32 %v1523, %v1854
  %v1859 = vrot.slane %v1846, 1
  %1860 = vrot.lane.b32.xlu0 %v1859, 64
  %v1861 = vpop.permute.xlu0 %1860
  %v1862 = vsel %vm1222, %v1861, 0
  %1864 = vmatprep.subr.mxu0 %v1710
  %1865 = vmatpush1.msra.mxu0 %v1709
  %1866 = vmatprep.subr.mxu0 %v1712
  %1867 = vmatpush1.msra.mxu0 %v1711
  %1868 = vmatprep.subr.mxu0 %v1714
  %1869 = vmatpush1.msra.mxu0 %v1713
  %1870 = vmatprep.subr.mxu0 %v1716
  %1871 = vmatpush1.msra.mxu0 %v1715
  %1872 = vmatprep.subr.mxu0 %v1718
  %1873 = vmatpush1.msra.mxu0 %v1717
  %1874 = vmatprep.subr.mxu0 %v1720
  %1875 = vmatpush1.msra.mxu0 %v1719
  %1876 = vmatprep.subr.mxu0 %v1722
  %1877 = vmatpush1.msra.mxu0 %v1721
  %1878 = vmatprep.subr.mxu0 %v1724
  %1879 = vmatpush1.msra.mxu0 %v1723
  %1880 = vmatprep.subr.mxu0 0.0
  %1881 = vmatpush1.msra.mxu0 0.0
  %1882 = vmatprep.subr.mxu0 0.0
  %1883 = vmatpush1.msra.mxu0 0.0
  %1884 = vmatprep.subr.mxu0 0.0
  %1885 = vmatpush1.msra.mxu0 0.0
  %1886 = vmatprep.subr.mxu0 0.0
  %1887 = vmatpush1.msra.mxu0 0.0
  %1888 = vmatprep.subr.mxu0 0.0
  %1889 = vmatpush1.msra.mxu0 0.0
  %1890 = vmatprep.subr.mxu0 0.0
  %1891 = vmatpush1.msra.mxu0 0.0
  %1892 = vmatprep.subr.mxu0 0.0
  %1893 = vmatpush1.msra.mxu0 0.0
  %1894 = vmatprep.subr.mxu0 0.0
  %1895 = vmatpush1.msra.mxu0 0.0
  %1896 = vmatprep.subr.mxu0 0.0
  %1897 = vmatpush1.msra.mxu0 0.0
  %1898 = vmatprep.subr.mxu0 0.0
  %1899 = vmatpush1.msra.mxu0 0.0
  %1900 = vmatprep.subr.mxu0 0.0
  %1901 = vmatpush1.msra.mxu0 0.0
  %1902 = vmatprep.subr.mxu0 0.0
  %1903 = vmatpush1.msra.mxu0 0.0
  %1904 = vmatprep.subr.mxu0 0.0
  %1905 = vmatpush1.msra.mxu0 0.0
  %1906 = vmatprep.subr.mxu0 0.0
  %1907 = vmatpush1.msra.mxu0 0.0
  %1908 = vmatprep.subr.mxu0 0.0
  %1909 = vmatpush1.msra.mxu0 0.0
  %1910 = vmatprep.subr.mxu0 0.0
  %1911 = vmatpush1.msra.mxu0 0.0
  %1912 = vmatprep.subr.mxu0 0.0
  %1913 = vmatpush1.msra.mxu0 0.0
  %1914 = vmatprep.subr.mxu0 0.0
  %1915 = vmatpush1.msra.mxu0 0.0
  %1916 = vmatprep.subr.mxu0 0.0
  %1917 = vmatpush1.msra.mxu0 0.0
  %1918 = vmatprep.subr.mxu0 0.0
  %1919 = vmatpush1.msra.mxu0 0.0
  %1920 = vmatprep.subr.mxu0 0.0
  %1921 = vmatpush1.msra.mxu0 0.0
  %1922 = vmatprep.subr.mxu0 0.0
  %1923 = vmatpush1.msra.mxu0 0.0
  %1924 = vmatprep.subr.mxu0 0.0
  %1925 = vmatpush1.msra.mxu0 0.0
  %1926 = vmatprep.subr.mxu0 0.0
  %1927 = vmatpush1.msra.mxu0 0.0
  %1928 = vmatprep.mubr.f32.mxu0 0.0
  %1929 = vmatmul.mubr.f32.gmra.mrb[0].mxu0 %v1862
  %v1930 = vpop.f32.mrb[0].mxu0
  %v1931 = vadd.f32 %v1738, %v1930
  %v1932 = vpop.f32.mrb[0].mxu0
  %v1933 = vadd.f32 %v1742, %v1932
  %1934 = vdwg.mxu0
  %v1936 = vrot.slane %v1931, 6
  %v1938 = vadd.f32 %v1857, %v1936
  %v1939 = vxor.u32 %v1938, 2147483648
  %v1940 = vmul.f32 %v1939, 1.442695
  %v1941 = vpow.pop %v1940
  %v1942 = vadd.f32 %v1941, 1.0
  %v1943 = vrcp.pop %v1942
  %v1944 = vmul.f32 1.0, %v1943
  %v1946 = vrot.slane %v1933, 6
  %v1948 = vmul.f32 %v1944, %v1946
  %v1949 = vadd.f32 %v1858, %v1948
  %v1950 = vtanh.pop %v1949
  %v1951 = vsub.f32 1.0, %v1944
  %1953 = vrot.lane.b32.xlu0 %v1950, 64
  %v1954 = vpop.permute.xlu0 %1953
  %v1956 = vmul.f32 %v1951, %v1954
  %v1957 = vrot.slane %v1846, 7
  %v1959 = vmul.f32 %v1944, %v1957
  %v1960 = vadd.f32 %v1956, %v1959
  %1962 = vrot.lane.b32.xlu0 %v1960, 64
  %v1963 = vpop.permute.xlu0 %1962
  %vm1965 = vcmask 518146
  %1966 = vst.msk [vmem:[#allocation2 - $0x1] sm:$0x4] %vm1965, %v1963
  %v1967 = vrot.slane %v1624, 5
  %v1968 = vrot.slane %v1626, 5
  %v1971 = vadd.f32 %v1521, %v1967
  %v1972 = vadd.f32 %v1523, %v1968
  %v1973 = vrot.slane %v1960, 2
  %1974 = vrot.lane.b32.xlu0 %v1973, 64
  %v1975 = vpop.permute.xlu0 %1974
  %v1976 = vsel %vm1222, %v1975, 0
  %1978 = vmatprep.subr.mxu0 %v1710
  %1979 = vmatpush1.msra.mxu0 %v1709
  %1980 = vmatprep.subr.mxu0 %v1712
  %1981 = vmatpush1.msra.mxu0 %v1711
  %1982 = vmatprep.subr.mxu0 %v1714
  %1983 = vmatpush1.msra.mxu0 %v1713
  %1984 = vmatprep.subr.mxu0 %v1716
  %1985 = vmatpush1.msra.mxu0 %v1715
  %1986 = vmatprep.subr.mxu0 %v1718
  %1987 = vmatpush1.msra.mxu0 %v1717
  %1988 = vmatprep.subr.mxu0 %v1720
  %1989 = vmatpush1.msra.mxu0 %v1719
  %1990 = vmatprep.subr.mxu0 %v1722
  %1991 = vmatpush1.msra.mxu0 %v1721
  %1992 = vmatprep.subr.mxu0 %v1724
  %1993 = vmatpush1.msra.mxu0 %v1723
  %1994 = vmatprep.subr.mxu0 0.0
  %1995 = vmatpush1.msra.mxu0 0.0
  %1996 = vmatprep.subr.mxu0 0.0
  %1997 = vmatpush1.msra.mxu0 0.0
  %1998 = vmatprep.subr.mxu0 0.0
  %1999 = vmatpush1.msra.mxu0 0.0
  %2000 = vmatprep.subr.mxu0 0.0
  %2001 = vmatpush1.msra.mxu0 0.0
  %2002 = vmatprep.subr.mxu0 0.0
  %2003 = vmatpush1.msra.mxu0 0.0
  %2004 = vmatprep.subr.mxu0 0.0
  %2005 = vmatpush1.msra.mxu0 0.0
  %2006 = vmatprep.subr.mxu0 0.0
  %2007 = vmatpush1.msra.mxu0 0.0
  %2008 = vmatprep.subr.mxu0 0.0
  %2009 = vmatpush1.msra.mxu0 0.0
  %2010 = vmatprep.subr.mxu0 0.0
  %2011 = vmatpush1.msra.mxu0 0.0
  %2012 = vmatprep.subr.mxu0 0.0
  %2013 = vmatpush1.msra.mxu0 0.0
  %2014 = vmatprep.subr.mxu0 0.0
  %2015 = vmatpush1.msra.mxu0 0.0
  %2016 = vmatprep.subr.mxu0 0.0
  %2017 = vmatpush1.msra.mxu0 0.0
  %2018 = vmatprep.subr.mxu0 0.0
  %2019 = vmatpush1.msra.mxu0 0.0
  %2020 = vmatprep.subr.mxu0 0.0
  %2021 = vmatpush1.msra.mxu0 0.0
  %2022 = vmatprep.subr.mxu0 0.0
  %2023 = vmatpush1.msra.mxu0 0.0
  %2024 = vmatprep.subr.mxu0 0.0
  %2025 = vmatpush1.msra.mxu0 0.0
  %2026 = vmatprep.subr.mxu0 0.0
  %2027 = vmatpush1.msra.mxu0 0.0
  %2028 = vmatprep.subr.mxu0 0.0
  %2029 = vmatpush1.msra.mxu0 0.0
  %2030 = vmatprep.subr.mxu0 0.0
  %2031 = vmatpush1.msra.mxu0 0.0
  %2032 = vmatprep.subr.mxu0 0.0
  %2033 = vmatpush1.msra.mxu0 0.0
  %2034 = vmatprep.subr.mxu0 0.0
  %2035 = vmatpush1.msra.mxu0 0.0
  %2036 = vmatprep.subr.mxu0 0.0
  %2037 = vmatpush1.msra.mxu0 0.0
  %2038 = vmatprep.subr.mxu0 0.0
  %2039 = vmatpush1.msra.mxu0 0.0
  %2040 = vmatprep.subr.mxu0 0.0
  %2041 = vmatpush1.msra.mxu0 0.0
  %2042 = vmatprep.mubr.f32.mxu0 0.0
  %2043 = vmatmul.mubr.f32.gmra.mrb[0].mxu0 %v1976
  %v2044 = vpop.f32.mrb[0].mxu0
  %v2045 = vadd.f32 %v1738, %v2044
  %v2046 = vpop.f32.mrb[0].mxu0
  %v2047 = vadd.f32 %v1742, %v2046
  %2048 = vdwg.mxu0
  %v2050 = vrot.slane %v2045, 5
  %v2052 = vadd.f32 %v1971, %v2050
  %v2053 = vxor.u32 %v2052, 2147483648
  %v2054 = vmul.f32 %v2053, 1.442695
  %v2055 = vpow.pop %v2054
  %v2056 = vadd.f32 %v2055, 1.0
  %v2057 = vrcp.pop %v2056
  %v2058 = vmul.f32 1.0, %v2057
  %v2060 = vrot.slane %v2047, 5
  %v2062 = vmul.f32 %v2058, %v2060
  %v2063 = vadd.f32 %v1972, %v2062
  %v2064 = vtanh.pop %v2063
  %v2065 = vsub.f32 1.0, %v2058
  %2067 = vrot.lane.b32.xlu0 %v2064, 64
  %v2068 = vpop.permute.xlu0 %2067
  %v2070 = vmul.f32 %v2065, %v2068
  %v2071 = vrot.slane %v1960, 7
  %v2073 = vmul.f32 %v2058, %v2071
  %v2074 = vadd.f32 %v2070, %v2073
  %2076 = vrot.lane.b32.xlu0 %v2074, 64
  %v2077 = vpop.permute.xlu0 %2076
  %vm2079 = vcmask 519171
  %2080 = vst.msk [vmem:[#allocation2 - $0x1] sm:$0x8] %vm2079, %v2077
  %v2081 = vrot.slane %v1624, 4
  %v2082 = vrot.slane %v1626, 4
  %v2085 = vadd.f32 %v1521, %v2081
  %v2086 = vadd.f32 %v1523, %v2082
  %v2087 = vrot.slane %v2074, 3
  %2088 = vrot.lane.b32.xlu0 %v2087, 64
  %v2089 = vpop.permute.xlu0 %2088
  %v2090 = vsel %vm1222, %v2089, 0
  %2092 = vmatprep.subr.mxu0 %v1710
  %2093 = vmatpush1.msra.mxu0 %v1709
  %2094 = vmatprep.subr.mxu0 %v1712
  %2095 = vmatpush1.msra.mxu0 %v1711
  %2096 = vmatprep.subr.mxu0 %v1714
  %2097 = vmatpush1.msra.mxu0 %v1713
  %2098 = vmatprep.subr.mxu0 %v1716
  %2099 = vmatpush1.msra.mxu0 %v1715
  %2100 = vmatprep.subr.mxu0 %v1718
  %2101 = vmatpush1.msra.mxu0 %v1717
  %2102 = vmatprep.subr.mxu0 %v1720
  %2103 = vmatpush1.msra.mxu0 %v1719
  %2104 = vmatprep.subr.mxu0 %v1722
  %2105 = vmatpush1.msra.mxu0 %v1721
  %2106 = vmatprep.subr.mxu0 %v1724
  %2107 = vmatpush1.msra.mxu0 %v1723
  %2108 = vmatprep.subr.mxu0 0.0
  %2109 = vmatpush1.msra.mxu0 0.0
  %2110 = vmatprep.subr.mxu0 0.0
  %2111 = vmatpush1.msra.mxu0 0.0
  %2112 = vmatprep.subr.mxu0 0.0
  %2113 = vmatpush1.msra.mxu0 0.0
  %2114 = vmatprep.subr.mxu0 0.0
  %2115 = vmatpush1.msra.mxu0 0.0
  %2116 = vmatprep.subr.mxu0 0.0
  %2117 = vmatpush1.msra.mxu0 0.0
  %2118 = vmatprep.subr.mxu0 0.0
  %2119 = vmatpush1.msra.mxu0 0.0
  %2120 = vmatprep.subr.mxu0 0.0
  %2121 = vmatpush1.msra.mxu0 0.0
  %2122 = vmatprep.subr.mxu0 0.0
  %2123 = vmatpush1.msra.mxu0 0.0
  %2124 = vmatprep.subr.mxu0 0.0
  %2125 = vmatpush1.msra.mxu0 0.0
  %2126 = vmatprep.subr.mxu0 0.0
  %2127 = vmatpush1.msra.mxu0 0.0
  %2128 = vmatprep.subr.mxu0 0.0
  %2129 = vmatpush1.msra.mxu0 0.0
  %2130 = vmatprep.subr.mxu0 0.0
  %2131 = vmatpush1.msra.mxu0 0.0
  %2132 = vmatprep.subr.mxu0 0.0
  %2133 = vmatpush1.msra.mxu0 0.0
  %2134 = vmatprep.subr.mxu0 0.0
  %2135 = vmatpush1.msra.mxu0 0.0
  %2136 = vmatprep.subr.mxu0 0.0
  %2137 = vmatpush1.msra.mxu0 0.0
  %2138 = vmatprep.subr.mxu0 0.0
  %2139 = vmatpush1.msra.mxu0 0.0
  %2140 = vmatprep.subr.mxu0 0.0
  %2141 = vmatpush1.msra.mxu0 0.0
  %2142 = vmatprep.subr.mxu0 0.0
  %2143 = vmatpush1.msra.mxu0 0.0
  %2144 = vmatprep.subr.mxu0 0.0
  %2145 = vmatpush1.msra.mxu0 0.0
  %2146 = vmatprep.subr.mxu0 0.0
  %2147 = vmatpush1.msra.mxu0 0.0
  %2148 = vmatprep.subr.mxu0 0.0
  %2149 = vmatpush1.msra.mxu0 0.0
  %2150 = vmatprep.subr.mxu0 0.0
  %2151 = vmatpush1.msra.mxu0 0.0
  %2152 = vmatprep.subr.mxu0 0.0
  %2153 = vmatpush1.msra.mxu0 0.0
  %2154 = vmatprep.subr.mxu0 0.0
  %2155 = vmatpush1.msra.mxu0 0.0
  %2156 = vmatprep.mubr.f32.mxu0 0.0
  %2157 = vmatmul.mubr.f32.gmra.mrb[0].mxu0 %v2090
  %v2158 = vpop.f32.mrb[0].mxu0
  %v2159 = vadd.f32 %v1738, %v2158
  %v2160 = vpop.f32.mrb[0].mxu0
  %v2161 = vadd.f32 %v1742, %v2160
  %2162 = vdwg.mxu0
  %v2164 = vrot.slane %v2159, 4
  %v2166 = vadd.f32 %v2085, %v2164
  %v2167 = vxor.u32 %v2166, 2147483648
  %v2168 = vmul.f32 %v2167, 1.442695
  %v2169 = vpow.pop %v2168
  %v2170 = vadd.f32 %v2169, 1.0
  %v2171 = vrcp.pop %v2170
  %v2172 = vmul.f32 1.0, %v2171
  %v2174 = vrot.slane %v2161, 4
  %v2176 = vmul.f32 %v2172, %v2174
  %v2177 = vadd.f32 %v2086, %v2176
  %v2178 = vtanh.pop %v2177
  %v2179 = vsub.f32 1.0, %v2172
  %2181 = vrot.lane.b32.xlu0 %v2178, 64
  %v2182 = vpop.permute.xlu0 %2181
  %v2184 = vmul.f32 %v2179, %v2182
  %v2185 = vrot.slane %v2074, 7
  %v2187 = vmul.f32 %v2172, %v2185
  %v2188 = vadd.f32 %v2184, %v2187
  %2190 = vrot.lane.b32.xlu0 %v2188, 64
  %v2191 = vpop.permute.xlu0 %2190
  %vm2193 = vcmask 520196
  %2194 = vst.msk [vmem:[#allocation2 - $0x1] sm:$0x10] %vm2193, %v2191
  %v2195 = vrot.slane %v1624, 3
  %v2196 = vrot.slane %v1626, 3
  %v2199 = vadd.f32 %v1521, %v2195
  %v2200 = vadd.f32 %v1523, %v2196
  %v2201 = vrot.slane %v2188, 4
  %2202 = vrot.lane.b32.xlu0 %v2201, 64
  %v2203 = vpop.permute.xlu0 %2202
  %v2204 = vsel %vm1222, %v2203, 0
  %2206 = vmatprep.subr.mxu0 %v1710
  %2207 = vmatpush1.msra.mxu0 %v1709
  %2208 = vmatprep.subr.mxu0 %v1712
  %2209 = vmatpush1.msra.mxu0 %v1711
  %2210 = vmatprep.subr.mxu0 %v1714
  %2211 = vmatpush1.msra.mxu0 %v1713
  %2212 = vmatprep.subr.mxu0 %v1716
  %2213 = vmatpush1.msra.mxu0 %v1715
  %2214 = vmatprep.subr.mxu0 %v1718
  %2215 = vmatpush1.msra.mxu0 %v1717
  %2216 = vmatprep.subr.mxu0 %v1720
  %2217 = vmatpush1.msra.mxu0 %v1719
  %2218 = vmatprep.subr.mxu0 %v1722
  %2219 = vmatpush1.msra.mxu0 %v1721
  %2220 = vmatprep.subr.mxu0 %v1724
  %2221 = vmatpush1.msra.mxu0 %v1723
  %2222 = vmatprep.subr.mxu0 0.0
  %2223 = vmatpush1.msra.mxu0 0.0
  %2224 = vmatprep.subr.mxu0 0.0
  %2225 = vmatpush1.msra.mxu0 0.0
  %2226 = vmatprep.subr.mxu0 0.0
  %2227 = vmatpush1.msra.mxu0 0.0
  %2228 = vmatprep.subr.mxu0 0.0
  %2229 = vmatpush1.msra.mxu0 0.0
  %2230 = vmatprep.subr.mxu0 0.0
  %2231 = vmatpush1.msra.mxu0 0.0
  %2232 = vmatprep.subr.mxu0 0.0
  %2233 = vmatpush1.msra.mxu0 0.0
  %2234 = vmatprep.subr.mxu0 0.0
  %2235 = vmatpush1.msra.mxu0 0.0
  %2236 = vmatprep.subr.mxu0 0.0
  %2237 = vmatpush1.msra.mxu0 0.0
  %2238 = vmatprep.subr.mxu0 0.0
  %2239 = vmatpush1.msra.mxu0 0.0
  %2240 = vmatprep.subr.mxu0 0.0
  %2241 = vmatpush1.msra.mxu0 0.0
  %2242 = vmatprep.subr.mxu0 0.0
  %2243 = vmatpush1.msra.mxu0 0.0
  %2244 = vmatprep.subr.mxu0 0.0
  %2245 = vmatpush1.msra.mxu0 0.0
  %2246 = vmatprep.subr.mxu0 0.0
  %2247 = vmatpush1.msra.mxu0 0.0
  %2248 = vmatprep.subr.mxu0 0.0
  %2249 = vmatpush1.msra.mxu0 0.0
  %2250 = vmatprep.subr.mxu0 0.0
  %2251 = vmatpush1.msra.mxu0 0.0
  %2252 = vmatprep.subr.mxu0 0.0
  %2253 = vmatpush1.msra.mxu0 0.0
  %2254 = vmatprep.subr.mxu0 0.0
  %2255 = vmatpush1.msra.mxu0 0.0
  %2256 = vmatprep.subr.mxu0 0.0
  %2257 = vmatpush1.msra.mxu0 0.0
  %2258 = vmatprep.subr.mxu0 0.0
  %2259 = vmatpush1.msra.mxu0 0.0
  %2260 = vmatprep.subr.mxu0 0.0
  %2261 = vmatpush1.msra.mxu0 0.0
  %2262 = vmatprep.subr.mxu0 0.0
  %2263 = vmatpush1.msra.mxu0 0.0
  %2264 = vmatprep.subr.mxu0 0.0
  %2265 = vmatpush1.msra.mxu0 0.0
  %2266 = vmatprep.subr.mxu0 0.0
  %2267 = vmatpush1.msra.mxu0 0.0
  %2268 = vmatprep.subr.mxu0 0.0
  %2269 = vmatpush1.msra.mxu0 0.0
  %2270 = vmatprep.mubr.f32.mxu0 0.0
  %2271 = vmatmul.mubr.f32.gmra.mrb[0].mxu0 %v2204
  %v2272 = vpop.f32.mrb[0].mxu0
  %v2273 = vadd.f32 %v1738, %v2272
  %v2274 = vpop.f32.mrb[0].mxu0
  %v2275 = vadd.f32 %v1742, %v2274
  %2276 = vdwg.mxu0
  %v2278 = vrot.slane %v2273, 3
  %v2280 = vadd.f32 %v2199, %v2278
  %v2281 = vxor.u32 %v2280, 2147483648
  %v2282 = vmul.f32 %v2281, 1.442695
  %v2283 = vpow.pop %v2282
  %v2284 = vadd.f32 %v2283, 1.0
  %v2285 = vrcp.pop %v2284
  %v2286 = vmul.f32 1.0, %v2285
  %v2288 = vrot.slane %v2275, 3
  %v2290 = vmul.f32 %v2286, %v2288
  %v2291 = vadd.f32 %v2200, %v2290
  %v2292 = vtanh.pop %v2291
  %v2293 = vsub.f32 1.0, %v2286
  %2295 = vrot.lane.b32.xlu0 %v2292, 64
  %v2296 = vpop.permute.xlu0 %2295
  %v2298 = vmul.f32 %v2293, %v2296
  %v2299 = vrot.slane %v2188, 7
  %v2301 = vmul.f32 %v2286, %v2299
  %v2302 = vadd.f32 %v2298, %v2301
  %2304 = vrot.lane.b32.xlu0 %v2302, 64
  %v2305 = vpop.permute.xlu0 %2304
  %vm2307 = vcmask 521221
  %2308 = vst.msk [vmem:[#allocation2 - $0x1] sm:$0x20] %vm2307, %v2305
  %v2309 = vrot.slane %v1624, 2
  %v2310 = vrot.slane %v1626, 2
  %v2313 = vadd.f32 %v1521, %v2309
  %v2314 = vadd.f32 %v1523, %v2310
  %v2315 = vrot.slane %v2302, 5
  %2316 = vrot.lane.b32.xlu0 %v2315, 64
  %v2317 = vpop.permute.xlu0 %2316
  %v2318 = vsel %vm1222, %v2317, 0
  %2320 = vmatprep.subr.mxu0 %v1710
  %2321 = vmatpush1.msra.mxu0 %v1709
  %2322 = vmatprep.subr.mxu0 %v1712
  %2323 = vmatpush1.msra.mxu0 %v1711
  %2324 = vmatprep.subr.mxu0 %v1714
  %2325 = vmatpush1.msra.mxu0 %v1713
  %2326 = vmatprep.subr.mxu0 %v1716
  %2327 = vmatpush1.msra.mxu0 %v1715
  %2328 = vmatprep.subr.mxu0 %v1718
  %2329 = vmatpush1.msra.mxu0 %v1717
  %2330 = vmatprep.subr.mxu0 %v1720
  %2331 = vmatpush1.msra.mxu0 %v1719
  %2332 = vmatprep.subr.mxu0 %v1722
  %2333 = vmatpush1.msra.mxu0 %v1721
  %2334 = vmatprep.subr.mxu0 %v1724
  %2335 = vmatpush1.msra.mxu0 %v1723
  %2336 = vmatprep.subr.mxu0 0.0
  %2337 = vmatpush1.msra.mxu0 0.0
  %2338 = vmatprep.subr.mxu0 0.0
  %2339 = vmatpush1.msra.mxu0 0.0
  %2340 = vmatprep.subr.mxu0 0.0
  %2341 = vmatpush1.msra.mxu0 0.0
  %2342 = vmatprep.subr.mxu0 0.0
  %2343 = vmatpush1.msra.mxu0 0.0
  %2344 = vmatprep.subr.mxu0 0.0
  %2345 = vmatpush1.msra.mxu0 0.0
  %2346 = vmatprep.subr.mxu0 0.0
  %2347 = vmatpush1.msra.mxu0 0.0
  %2348 = vmatprep.subr.mxu0 0.0
  %2349 = vmatpush1.msra.mxu0 0.0
  %2350 = vmatprep.subr.mxu0 0.0
  %2351 = vmatpush1.msra.mxu0 0.0
  %2352 = vmatprep.subr.mxu0 0.0
  %2353 = vmatpush1.msra.mxu0 0.0
  %2354 = vmatprep.subr.mxu0 0.0
  %2355 = vmatpush1.msra.mxu0 0.0
  %2356 = vmatprep.subr.mxu0 0.0
  %2357 = vmatpush1.msra.mxu0 0.0
  %2358 = vmatprep.subr.mxu0 0.0
  %2359 = vmatpush1.msra.mxu0 0.0
  %2360 = vmatprep.subr.mxu0 0.0
  %2361 = vmatpush1.msra.mxu0 0.0
  %2362 = vmatprep.subr.mxu0 0.0
  %2363 = vmatpush1.msra.mxu0 0.0
  %2364 = vmatprep.subr.mxu0 0.0
  %2365 = vmatpush1.msra.mxu0 0.0
  %2366 = vmatprep.subr.mxu0 0.0
  %2367 = vmatpush1.msra.mxu0 0.0
  %2368 = vmatprep.subr.mxu0 0.0
  %2369 = vmatpush1.msra.mxu0 0.0
  %2370 = vmatprep.subr.mxu0 0.0
  %2371 = vmatpush1.msra.mxu0 0.0
  %2372 = vmatprep.subr.mxu0 0.0
  %2373 = vmatpush1.msra.mxu0 0.0
  %2374 = vmatprep.subr.mxu0 0.0
  %2375 = vmatpush1.msra.mxu0 0.0
  %2376 = vmatprep.subr.mxu0 0.0
  %2377 = vmatpush1.msra.mxu0 0.0
  %2378 = vmatprep.subr.mxu0 0.0
  %2379 = vmatpush1.msra.mxu0 0.0
  %2380 = vmatprep.subr.mxu0 0.0
  %2381 = vmatpush1.msra.mxu0 0.0
  %2382 = vmatprep.subr.mxu0 0.0
  %2383 = vmatpush1.msra.mxu0 0.0
  %2384 = vmatprep.mubr.f32.mxu0 0.0
  %2385 = vmatmul.mubr.f32.gmra.mrb[0].mxu0 %v2318
  %v2386 = vpop.f32.mrb[0].mxu0
  %v2387 = vadd.f32 %v1738, %v2386
  %v2388 = vpop.f32.mrb[0].mxu0
  %v2389 = vadd.f32 %v1742, %v2388
  %2390 = vdwg.mxu0
  %v2392 = vrot.slane %v2387, 2
  %v2394 = vadd.f32 %v2313, %v2392
  %v2395 = vxor.u32 %v2394, 2147483648
  %v2396 = vmul.f32 %v2395, 1.442695
  %v2397 = vpow.pop %v2396
  %v2398 = vadd.f32 %v2397, 1.0
  %v2399 = vrcp.pop %v2398
  %v2400 = vmul.f32 1.0, %v2399
  %v2402 = vrot.slane %v2389, 2
  %v2404 = vmul.f32 %v2400, %v2402
  %v2405 = vadd.f32 %v2314, %v2404
  %v2406 = vtanh.pop %v2405
  %v2407 = vsub.f32 1.0, %v2400
  %2409 = vrot.lane.b32.xlu0 %v2406, 64
  %v2410 = vpop.permute.xlu0 %2409
  %v2412 = vmul.f32 %v2407, %v2410
  %v2413 = vrot.slane %v2302, 7
  %v2415 = vmul.f32 %v2400, %v2413
  %v2416 = vadd.f32 %v2412, %v2415
  %2418 = vrot.lane.b32.xlu0 %v2416, 64
  %v2419 = vpop.permute.xlu0 %2418
  %vm2421 = vcmask 522246
  %2422 = vst.msk [vmem:[#allocation2 - $0x1] sm:$0x40] %vm2421, %v2419
  %v2423 = vrot.slane %v1624, 1
  %v2424 = vrot.slane %v1626, 1
  %v2427 = vadd.f32 %v1521, %v2423
  %v2428 = vadd.f32 %v1523, %v2424
  %v2429 = vrot.slane %v2416, 6
  %2430 = vrot.lane.b32.xlu0 %v2429, 64
  %v2431 = vpop.permute.xlu0 %2430
  %v2432 = vsel %vm1222, %v2431, 0
  %2434 = vmatprep.subr.mxu0 %v1710
  %2435 = vmatpush1.msra.mxu0 %v1709
  %2436 = vmatprep.subr.mxu0 %v1712
  %2437 = vmatpush1.msra.mxu0 %v1711
  %2438 = vmatprep.subr.mxu0 %v1714
  %2439 = vmatpush1.msra.mxu0 %v1713
  %2440 = vmatprep.subr.mxu0 %v1716
  %2441 = vmatpush1.msra.mxu0 %v1715
  %2442 = vmatprep.subr.mxu0 %v1718
  %2443 = vmatpush1.msra.mxu0 %v1717
  %2444 = vmatprep.subr.mxu0 %v1720
  %2445 = vmatpush1.msra.mxu0 %v1719
  %2446 = vmatprep.subr.mxu0 %v1722
  %2447 = vmatpush1.msra.mxu0 %v1721
  %2448 = vmatprep.subr.mxu0 %v1724
  %2449 = vmatpush1.msra.mxu0 %v1723
  %2450 = vmatprep.subr.mxu0 0.0
  %2451 = vmatpush1.msra.mxu0 0.0
  %2452 = vmatprep.subr.mxu0 0.0
  %2453 = vmatpush1.msra.mxu0 0.0
  %2454 = vmatprep.subr.mxu0 0.0
  %2455 = vmatpush1.msra.mxu0 0.0
  %2456 = vmatprep.subr.mxu0 0.0
  %2457 = vmatpush1.msra.mxu0 0.0
  %2458 = vmatprep.subr.mxu0 0.0
  %2459 = vmatpush1.msra.mxu0 0.0
  %2460 = vmatprep.subr.mxu0 0.0
  %2461 = vmatpush1.msra.mxu0 0.0
  %2462 = vmatprep.subr.mxu0 0.0
  %2463 = vmatpush1.msra.mxu0 0.0
  %2464 = vmatprep.subr.mxu0 0.0
  %2465 = vmatpush1.msra.mxu0 0.0
  %2466 = vmatprep.subr.mxu0 0.0
  %2467 = vmatpush1.msra.mxu0 0.0
  %2468 = vmatprep.subr.mxu0 0.0
  %2469 = vmatpush1.msra.mxu0 0.0
  %2470 = vmatprep.subr.mxu0 0.0
  %2471 = vmatpush1.msra.mxu0 0.0
  %2472 = vmatprep.subr.mxu0 0.0
  %2473 = vmatpush1.msra.mxu0 0.0
  %2474 = vmatprep.subr.mxu0 0.0
  %2475 = vmatpush1.msra.mxu0 0.0
  %2476 = vmatprep.subr.mxu0 0.0
  %2477 = vmatpush1.msra.mxu0 0.0
  %2478 = vmatprep.subr.mxu0 0.0
  %2479 = vmatpush1.msra.mxu0 0.0
  %2480 = vmatprep.subr.mxu0 0.0
  %2481 = vmatpush1.msra.mxu0 0.0
  %2482 = vmatprep.subr.mxu0 0.0
  %2483 = vmatpush1.msra.mxu0 0.0
  %2484 = vmatprep.subr.mxu0 0.0
  %2485 = vmatpush1.msra.mxu0 0.0
  %2486 = vmatprep.subr.mxu0 0.0
  %2487 = vmatpush1.msra.mxu0 0.0
  %2488 = vmatprep.subr.mxu0 0.0
  %2489 = vmatpush1.msra.mxu0 0.0
  %2490 = vmatprep.subr.mxu0 0.0
  %2491 = vmatpush1.msra.mxu0 0.0
  %2492 = vmatprep.subr.mxu0 0.0
  %2493 = vmatpush1.msra.mxu0 0.0
  %2494 = vmatprep.subr.mxu0 0.0
  %2495 = vmatpush1.msra.mxu0 0.0
  %2496 = vmatprep.subr.mxu0 0.0
  %2497 = vmatpush1.msra.mxu0 0.0
  %2498 = vmatprep.mubr.f32.mxu0 0.0
  %2499 = vmatmul.mubr.f32.gmra.mrb[0].mxu0 %v2432
  %v2500 = vpop.f32.mrb[0].mxu0
  %v2501 = vadd.f32 %v1738, %v2500
  %v2502 = vpop.f32.mrb[0].mxu0
  %v2503 = vadd.f32 %v1742, %v2502
  %2504 = vdwg.mxu0
  %v2506 = vrot.slane %v2501, 1
  %v2508 = vadd.f32 %v2427, %v2506
  %v2509 = vxor.u32 %v2508, 2147483648
  %v2510 = vmul.f32 %v2509, 1.442695
  %v2511 = vpow.pop %v2510
  %v2512 = vadd.f32 %v2511, 1.0
  %v2513 = vrcp.pop %v2512
  %v2514 = vmul.f32 1.0, %v2513
  %v2516 = vrot.slane %v2503, 1
  %v2518 = vmul.f32 %v2514, %v2516
  %v2519 = vadd.f32 %v2428, %v2518
  %v2520 = vtanh.pop %v2519
  %v2521 = vsub.f32 1.0, %v2514
  %2523 = vrot.lane.b32.xlu0 %v2520, 64
  %v2524 = vpop.permute.xlu0 %2523
  %v2526 = vmul.f32 %v2521, %v2524
  %v2527 = vrot.slane %v2416, 7
  %v2529 = vmul.f32 %v2514, %v2527
  %v2530 = vadd.f32 %v2526, %v2529
  %2532 = vrot.lane.b32.xlu0 %v2530, 64
  %v2533 = vpop.permute.xlu0 %2532
  %vm2535 = vcmask 523271
  %2536 = vst.msk [vmem:[#allocation2 - $0x1] sm:$0x80] %vm2535, %v2533
  %v2537 = vld [vmem:[#allocation2] sm:$0x7f]
  %v2538 = vld [vmem:[%s20] sm:$0xff]
  %v2539 = vld [vmem:[%s20 + $0x8] sm:$0xff]
  %v2540 = vld [vmem:[%s20 + $0x10] sm:$0xff]
  %v2541 = vld [vmem:[%s20 + $0x18] sm:$0xff]
  %v2542 = vld [vmem:[%s20 + $0x20] sm:$0xff]
  %v2543 = vld [vmem:[%s20 + $0x28] sm:$0xff]
  %v2544 = vld [vmem:[%s20 + $0x30] sm:$0xff]
  %v2545 = vld [vmem:[%s20 + $0x38] sm:$0xff]
  %v2546 = vlaneseq
  %v2547 = vshrl.u32 %v2546, 7
  %v2548 = vsub.s32 0, %v2547
  %v2549 = vrot.slane %v1706, %v2548
  %v2551 = vsel %vm1222, %v2537, 0
  %2553 = vmatprep.subr.mxu0 0.0
  %2554 = vmatpush1.msra.mxu0 %v2538
  %2555 = vmatprep.subr.mxu0 0.0
  %2556 = vmatpush1.msra.mxu0 %v2539
  %2557 = vmatprep.subr.mxu0 0.0
  %2558 = vmatpush1.msra.mxu0 %v2540
  %2559 = vmatprep.subr.mxu0 0.0
  %2560 = vmatpush1.msra.mxu0 %v2541
  %2561 = vmatprep.subr.mxu0 0.0
  %2562 = vmatpush1.msra.mxu0 %v2542
  %2563 = vmatprep.subr.mxu0 0.0
  %2564 = vmatpush1.msra.mxu0 %v2543
  %2565 = vmatprep.subr.mxu0 0.0
  %2566 = vmatpush1.msra.mxu0 %v2544
  %2567 = vmatprep.subr.mxu0 0.0
  %2568 = vmatpush1.msra.mxu0 %v2545
  %2569 = vmatprep.subr.mxu0 0.0
  %2570 = vmatpush1.msra.mxu0 0.0
  %2571 = vmatprep.subr.mxu0 0.0
  %2572 = vmatpush1.msra.mxu0 0.0
  %2573 = vmatprep.subr.mxu0 0.0
  %2574 = vmatpush1.msra.mxu0 0.0
  %2575 = vmatprep.subr.mxu0 0.0
  %2576 = vmatpush1.msra.mxu0 0.0
  %2577 = vmatprep.subr.mxu0 0.0
  %2578 = vmatpush1.msra.mxu0 0.0
  %2579 = vmatprep.subr.mxu0 0.0
  %2580 = vmatpush1.msra.mxu0 0.0
  %2581 = vmatprep.subr.mxu0 0.0
  %2582 = vmatpush1.msra.mxu0 0.0
  %2583 = vmatprep.subr.mxu0 0.0
  %2584 = vmatpush1.msra.mxu0 0.0
  %2585 = vmatprep.subr.mxu0 0.0
  %2586 = vmatpush1.msra.mxu0 0.0
  %2587 = vmatprep.subr.mxu0 0.0
  %2588 = vmatpush1.msra.mxu0 0.0
  %2589 = vmatprep.subr.mxu0 0.0
  %2590 = vmatpush1.msra.mxu0 0.0
  %2591 = vmatprep.subr.mxu0 0.0
  %2592 = vmatpush1.msra.mxu0 0.0
  %2593 = vmatprep.subr.mxu0 0.0
  %2594 = vmatpush1.msra.mxu0 0.0
  %2595 = vmatprep.subr.mxu0 0.0
  %2596 = vmatpush1.msra.mxu0 0.0
  %2597 = vmatprep.subr.mxu0 0.0
  %2598 = vmatpush1.msra.mxu0 0.0
  %2599 = vmatprep.subr.mxu0 0.0
  %2600 = vmatpush1.msra.mxu0 0.0
  %2601 = vmatprep.subr.mxu0 0.0
  %2602 = vmatpush1.msra.mxu0 0.0
  %2603 = vmatprep.subr.mxu0 0.0
  %2604 = vmatpush1.msra.mxu0 0.0
  %2605 = vmatprep.subr.mxu0 0.0
  %2606 = vmatpush1.msra.mxu0 0.0
  %2607 = vmatprep.subr.mxu0 0.0
  %2608 = vmatpush1.msra.mxu0 0.0
  %2609 = vmatprep.subr.mxu0 0.0
  %2610 = vmatpush1.msra.mxu0 0.0
  %2611 = vmatprep.subr.mxu0 0.0
  %2612 = vmatpush1.msra.mxu0 0.0
  %2613 = vmatprep.subr.mxu0 0.0
  %2614 = vmatpush1.msra.mxu0 0.0
  %2615 = vmatprep.subr.mxu0 0.0
  %2616 = vmatpush1.msra.mxu0 0.0
  %2617 = vmatprep.mubr.f32.mxu0 0.0
  %2618 = vmatmul.mubr.f32.gmra.mrb[0].mxu0 %v2551
  %v2619 = vpop.f32.mrb[0].mxu0
  %v2620 = vadd.f32 %v2549, %v2619
  %v2621 = vpop.f32.mrb[0].mxu0
  %2622 = vdwg.mxu0
  %2623 = vst [vmem:[%s24] sm:$0x1] 0.0
  %2624 = vst [vmem:[%s24 + $0x1] sm:$0x7f] %v2620
  // Predicated region
  $region94: #{cvae_forward.1} parent=0 // pred_check
    _
  $region95: #{cvae_forward.1} parent=0 // pred_check_branch
    %2626 = sbr.rel (0) target = $region97
  $region96: #{cvae_forward.1} parent=0 // pred_region
    _
  $region97: #{cvae_forward.1} parent=0 // pred_fallthru
    _
  // Predicated region
  $region98: #{cvae_forward.1} parent=0 // pred_check
    _
  $region99: #{cvae_forward.1} parent=0 // pred_check_branch
    %2628 = sbr.rel (0) target = $region101
  $region100: #{cvae_forward.1} parent=0 // pred_region
    _
  $region101: #{cvae_forward.1} parent=0 // pred_fallthru
    _
  // Predicated region
  $region102: #{cvae_forward.1} parent=0 // pred_check
    _
  $region103: #{cvae_forward.1} parent=0 // pred_check_branch
    %2630 = sbr.rel (0) target = $region105
  $region104: #{cvae_forward.1} parent=0 // pred_region
    _
  $region105: #{cvae_forward.1} parent=0 // pred_fallthru
    _
  // Predicated region
  $region106: #{cvae_forward.1} parent=0 // pred_check
    _
  $region107: #{cvae_forward.1} parent=0 // pred_check_branch
    %2632 = sbr.rel (0) target = $region109
  $region108: #{cvae_forward.1} parent=0 // pred_region
    _
  $region109: #{cvae_forward.1} parent=0 // pred_fallthru
    _

</llo_original>
